<compile_context>
chip_gen: v5e
topology: v5e:2x2
jax: 0.10.0
libtpu: 0.0.40
codegen_flags: <defaults>
</compile_context>

<pallas_src>
import jax
import jax.numpy as jnp
from jax.experimental import pallas as pl
from jax.experimental.pallas import tpu as pltpu

SUBLANE = 8  # f32 sublane count


# ----------------------------- Pallas kernel --------------------------------
def r2n2_kernel(x_ref,                  # (T*Bp, Din) bf16, time-major, batch padded
                wenc_ref, benc_ref,     # (Din, F) bf16, (1, F) f32
                wg_ref, bg_ref,         # (F, 3H) bf16 = [Wu|Wr|Wh], (1, 3H) f32
                uur_hbm,                # (H, 2H) bf16 = [Uu|Ur]      -- HBM (pl.ANY)
                uh_hbm,                 # (H, H)  bf16                -- HBM (pl.ANY)
                wdec_hbm,               # (H, Nout) bf16              -- HBM (pl.ANY)
                bdec_ref,               # (1, Nout) f32
                out_ref,                # (Bp, Nout) f32
                uur_v, uh_v, wdec_v,    # VMEM scratch for the HBM weights
                sem):                   # DMA semaphores (3,)
    Bp = out_ref.shape[0]
    T = x_ref.shape[0] // Bp
    H = uh_v.shape[0]
    bf16 = wg_ref.dtype

    # ---- kick off recurrent/decoder weight DMAs; overlap with hoisted matmuls ----
    cp_uur = pltpu.make_async_copy(uur_hbm, uur_v, sem.at[0])
    cp_uh = pltpu.make_async_copy(uh_hbm, uh_v, sem.at[1])
    cp_dec = pltpu.make_async_copy(wdec_hbm, wdec_v, sem.at[2])
    cp_uur.start()
    cp_uh.start()
    cp_dec.start()

    # ---- hoisted, h-independent compute (covers every view at once) --------
    # encoder features: relu(X @ Wenc + benc)                 -> (T*Bp, F) f32
    f_all = jnp.maximum(
        jnp.dot(x_ref[...], wenc_ref[...], preferred_element_type=jnp.float32)
        + benc_ref[...], 0.0)
    # fused gate pre-activations: f @ [Wu|Wr|Wh] + [bu|br|bh]  -> (T*Bp, 3H) f32
    g_all = (jnp.dot(f_all.astype(bf16), wg_ref[...],
                     preferred_element_type=jnp.float32)
             + bg_ref[...])

    # ---- t = 0 : hidden state is zero, all h @ U* terms vanish (exact) ------
    g0 = g_all[0:Bp, :]                                   # tile-aligned slice
    u = jax.nn.sigmoid(g0[:, 0:H])                        # update gate
    h_til = jnp.tanh(g0[:, 2 * H:3 * H])                  # reset gate irrelevant (r*h = 0)
    h = u * h_til                                         # + (1 - u) * 0

    # recurrent weights must be resident from here on
    cp_uur.wait()
    cp_uh.wait()

    # ---- remaining views: only the recurrent (H-dependent) matmuls ----------
    # GRU blend convention matches the in-repo reference encoder:
    #   h_new = u * h_tilde + (1 - u) * h_prev
    for t in range(1, T):
        g = g_all[t * Bp:(t + 1) * Bp, :]                 # tile-aligned slice
        ur_pre = jnp.dot(h.astype(bf16), uur_v[...],
                         preferred_element_type=jnp.float32)          # (Bp, 2H)
        u = jax.nn.sigmoid(g[:, 0:H] + ur_pre[:, 0:H])                # update gate
        r = jax.nn.sigmoid(g[:, H:2 * H] + ur_pre[:, H:2 * H])        # reset gate
        h_til = jnp.tanh(
            g[:, 2 * H:3 * H]
            + jnp.dot((r * h).astype(bf16), uh_v[...],
                      preferred_element_type=jnp.float32))
        h = u * h_til + (1.0 - u) * h                                 # gru_out

    # ---- decoder: c = h.view(B, -1) -> occ_hat = c @ Wdec + bdec ------------
    cp_dec.wait()
    out_ref[...] = (jnp.dot(h.astype(bf16), wdec_v[...],
                            preferred_element_type=jnp.float32)
                    + bdec_ref[...]).astype(out_ref.dtype)


# ------------------------------ JAX wrapper ---------------------------------
def make_params(key, d_in, feat, h_dim, n_out):
    ks = jax.random.split(key, 8)

    def w(k, shape):
        fan_in = shape[0]
        return (jax.random.normal(k, shape) / jnp.sqrt(fan_in)).astype(jnp.float32)

    wu, wr, wh = w(ks[1], (feat, h_dim)), w(ks[2], (feat, h_dim)), w(ks[3], (feat, h_dim))
    uu, ur = w(ks[4], (h_dim, h_dim)), w(ks[5], (h_dim, h_dim))
    return dict(
        # weights fused + cast to bf16 (MXU-native); biases stay f32
        wenc=w(ks[0], (d_in, feat)).astype(jnp.bfloat16),
        benc=jnp.zeros((1, feat), jnp.float32),
        wg=jnp.concatenate([wu, wr, wh], axis=1).astype(jnp.bfloat16),   # (F, 3H)
        bg=jnp.zeros((1, 3 * h_dim), jnp.float32),                       # [bu|br|bh]
        uur=jnp.concatenate([uu, ur], axis=1).astype(jnp.bfloat16),      # (H, 2H)
        uh=w(ks[6], (h_dim, h_dim)).astype(jnp.bfloat16),
        wdec=w(ks[7], (h_dim, n_out)).astype(jnp.bfloat16),
        bdec=jnp.zeros((1, n_out), jnp.float32),
    )


@jax.jit
def r2n2_forward(x, params):
    """x: (batch, num_views, C, H, W) -> occ_hat logits (batch, n_out).

    Entire forward (transpose + pad + cast + kernel + unpad) is one jitted call.
    """
    B, T = x.shape[0], x.shape[1]
    d_in = x.shape[2] * x.shape[3] * x.shape[4]
    h_dim = params["uh"].shape[0]
    n_out = params["wdec"].shape[1]
    Bp = max(SUBLANE, ((B + SUBLANE - 1) // SUBLANE) * SUBLANE)

    # torch: x.transpose(0,1) then per-view flatten; pad batch to sublane count so
    # every in-kernel per-view slice is (8,128)-tile aligned.
    x_tb = jnp.transpose(x.reshape(B, T, d_in), (1, 0, 2))          # (T, B, Din)
    x_tb = jnp.pad(x_tb, ((0, 0), (0, Bp - B), (0, 0)))             # (T, Bp, Din)
    x_tb = x_tb.reshape(T * Bp, d_in).astype(jnp.bfloat16)

    args = (x_tb,
            params["wenc"], params["benc"],
            params["wg"], params["bg"],
            params["uur"], params["uh"],
            params["wdec"], params["bdec"])

    vmem = pl.BlockSpec(memory_space=pltpu.MemorySpace.VMEM)
    hbm = pl.BlockSpec(memory_space=pl.ANY)   # manual async-copy inside the kernel
    out = pl.pallas_call(
        r2n2_kernel,
        out_shape=jax.ShapeDtypeStruct((Bp, n_out), jnp.float32),
        in_specs=[vmem,              # x
                  vmem, vmem,        # wenc, benc
                  vmem, vmem,        # wg, bg
                  hbm, hbm, hbm,     # uur, uh, wdec (overlapped DMA)
                  vmem],             # bdec
        out_specs=vmem,
        scratch_shapes=[
            pltpu.VMEM((h_dim, 2 * h_dim), jnp.bfloat16),   # uur
            pltpu.VMEM((h_dim, h_dim), jnp.bfloat16),       # uh
            pltpu.VMEM((h_dim, n_out), jnp.bfloat16),       # wdec
            pltpu.SemaphoreType.DMA((3,)),
        ],
        compiler_params=pltpu.CompilerParams(vmem_limit_bytes=8 << 20),
    )(*args)
    return out[:B]


def r2n2_reference(x, params):
    """Pure-JAX reference of the identical (fused-weight, bf16) forward pass."""
    # NOTE: matches the kernel's bf16/fused-weight numerics (self-consistency check),
    # not the original f32 torch module bit-for-bit.
    B, T = x.shape[0], x.shape[1]
    H = params["uh"].shape[0]
    bf16 = jnp.bfloat16
    x_tb = jnp.transpose(x.reshape(B, T, -1), (1, 0, 2)).reshape(T * B, -1).astype(bf16)

    f_all = jnp.maximum(
        jnp.dot(x_tb, params["wenc"], preferred_element_type=jnp.float32)
        + params["benc"], 0.0)
    g_all = (jnp.dot(f_all.astype(bf16), params["wg"],
                     preferred_element_type=jnp.float32) + params["bg"])

    g0 = g_all[0:B]
    u = jax.nn.sigmoid(g0[:, :H])
    h = u * jnp.tanh(g0[:, 2 * H:])
    for t in range(1, T):
        g = g_all[t * B:(t + 1) * B]
        ur_pre = jnp.dot(h.astype(bf16), params["uur"],
                         preferred_element_type=jnp.float32)
        u = jax.nn.sigmoid(g[:, :H] + ur_pre[:, :H])
        r = jax.nn.sigmoid(g[:, H:2 * H] + ur_pre[:, H:])
        h_til = jnp.tanh(g[:, 2 * H:] + jnp.dot((r * h).astype(bf16), params["uh"],
                                                preferred_element_type=jnp.float32))
        h = u * h_til + (1.0 - u) * h
    return (jnp.dot(h.astype(bf16), params["wdec"],
                    preferred_element_type=jnp.float32) + params["bdec"])


# --------------------------------- main --------------------------------------
if __name__ == "__main__":
    # Shapes consistent with the module:
    #   x: (batch=2, num_views=2, C=4, H=16, W=16)   [NCHW per view]
    #   h_shape = (1, 8, 4, 4, 4)  ->  hidden dim = 8*4*4*4 = 512
    B, T, C, Himg, Wimg = 2, 2, 4, 16, 16
    d_in = C * Himg * Wimg          # 1024
    feat = 128
    h_dim = 8 * 4 * 4 * 4           # 512
    n_out = 256

    key = jax.random.PRNGKey(0)
    k_x, k_p = jax.random.split(key)
    x = jax.random.normal(k_x, (B, T, C, Himg, Wimg), dtype=jnp.float32)
    params = make_params(k_p, d_in, feat, h_dim, n_out)

    occ_hat = jax.block_until_ready(r2n2_forward(x, params))
    ref = jax.block_until_ready(r2n2_reference(x, params))

    assert occ_hat.shape == (B, n_out)
    assert jnp.allclose(occ_hat, ref, rtol=2e-3, atol=2e-3), "mismatch vs reference"

    print("KERNEL_OK")
</pallas_src>

<mosaic_0001>
module attributes {stable_mosaic.version = 11 : i64} {
  func.func @r2n2_kernel(%arg0: memref<16x1024xbf16, #tpu.memory_space<vmem>>, %arg1: memref<1024x128xbf16, #tpu.memory_space<vmem>>, %arg2: memref<1x128xf32, #tpu.memory_space<vmem>>, %arg3: memref<128x1536xbf16, #tpu.memory_space<vmem>>, %arg4: memref<1x1536xf32, #tpu.memory_space<vmem>>, %arg5: memref<512x1024xbf16, #tpu.memory_space<any>>, %arg6: memref<512x512xbf16, #tpu.memory_space<any>>, %arg7: memref<512x256xbf16, #tpu.memory_space<any>>, %arg8: memref<1x256xf32, #tpu.memory_space<vmem>>, %arg9: memref<8x256xf32, #tpu.memory_space<vmem>>, %arg10: memref<512x1024xbf16, #tpu.memory_space<vmem>>, %arg11: memref<512x512xbf16, #tpu.memory_space<vmem>>, %arg12: memref<512x256xbf16, #tpu.memory_space<vmem>>, %arg13: memref<3x!tpu.dma_semaphore, #tpu.memory_space<semaphore_mem>>) attributes {dimension_semantics = [], scalar_prefetch = 0 : i64, scratch_operands = 4 : i64, tpu.core_type = #tpu.core_type<tc>} {
    %c0_i32 = arith.constant 0 : i32
    %0 = tpu.memref_slice %arg13[%c0_i32] : memref<3x!tpu.dma_semaphore, #tpu.memory_space<semaphore_mem>> -> memref<1x!tpu.dma_semaphore, #tpu.memory_space<semaphore_mem>>
    %1 = tpu.memref_squeeze %0 : memref<1x!tpu.dma_semaphore, #tpu.memory_space<semaphore_mem>> -> memref<!tpu.dma_semaphore, #tpu.memory_space<semaphore_mem>>
    tpu.enqueue_dma source(%arg5 : memref<512x1024xbf16, #tpu.memory_space<any>>) target(%arg10 : memref<512x1024xbf16, #tpu.memory_space<vmem>>) target_semaphore(%1 : memref<!tpu.dma_semaphore, #tpu.memory_space<semaphore_mem>>)
    %c1_i32 = arith.constant 1 : i32
    %2 = tpu.memref_slice %arg13[%c1_i32] : memref<3x!tpu.dma_semaphore, #tpu.memory_space<semaphore_mem>> -> memref<1x!tpu.dma_semaphore, #tpu.memory_space<semaphore_mem>>
    %3 = tpu.memref_squeeze %2 : memref<1x!tpu.dma_semaphore, #tpu.memory_space<semaphore_mem>> -> memref<!tpu.dma_semaphore, #tpu.memory_space<semaphore_mem>>
    tpu.enqueue_dma source(%arg6 : memref<512x512xbf16, #tpu.memory_space<any>>) target(%arg11 : memref<512x512xbf16, #tpu.memory_space<vmem>>) target_semaphore(%3 : memref<!tpu.dma_semaphore, #tpu.memory_space<semaphore_mem>>)
    %c2_i32 = arith.constant 2 : i32
    %4 = tpu.memref_slice %arg13[%c2_i32] : memref<3x!tpu.dma_semaphore, #tpu.memory_space<semaphore_mem>> -> memref<1x!tpu.dma_semaphore, #tpu.memory_space<semaphore_mem>>
    %5 = tpu.memref_squeeze %4 : memref<1x!tpu.dma_semaphore, #tpu.memory_space<semaphore_mem>> -> memref<!tpu.dma_semaphore, #tpu.memory_space<semaphore_mem>>
    tpu.enqueue_dma source(%arg7 : memref<512x256xbf16, #tpu.memory_space<any>>) target(%arg12 : memref<512x256xbf16, #tpu.memory_space<vmem>>) target_semaphore(%5 : memref<!tpu.dma_semaphore, #tpu.memory_space<semaphore_mem>>)
    %c0 = arith.constant 0 : index
    %c0_0 = arith.constant 0 : index
    %6 = vector.load %arg0[%c0, %c0_0] : memref<16x1024xbf16, #tpu.memory_space<vmem>>, vector<16x1024xbf16>
    %c0_1 = arith.constant 0 : index
    %c0_2 = arith.constant 0 : index
    %7 = vector.load %arg1[%c0_1, %c0_2] : memref<1024x128xbf16, #tpu.memory_space<vmem>>, vector<1024x128xbf16>
    %cst = arith.constant dense<0.000000e+00> : vector<16x128xf32>
    %8 = tpu.matmul %6, %7, %cst {dimension_numbers = #tpu.dot_dimension_numbers<[1], [0], [0], [1], [0, 0, 1, 1], [], []>} : vector<16x1024xbf16>, vector<1024x128xbf16>, vector<16x128xf32> -> vector<16x128xf32>
    %c0_3 = arith.constant 0 : index
    %c0_4 = arith.constant 0 : index
    %9 = vector.load %arg2[%c0_3, %c0_4] : memref<1x128xf32, #tpu.memory_space<vmem>>, vector<1x128xf32>
    %10 = vector.broadcast %9 : vector<1x128xf32> to vector<16x128xf32>
    %11 = arith.addf %8, %10 : vector<16x128xf32>
    %cst_5 = arith.constant 0.000000e+00 : f32
    %12 = vector.broadcast %cst_5 : f32 to vector<16x128xf32>
    %13 = arith.maximumf %11, %12 : vector<16x128xf32>
    %14 = arith.truncf %13 : vector<16x128xf32> to vector<16x128xbf16>
    %c0_6 = arith.constant 0 : index
    %c0_7 = arith.constant 0 : index
    %15 = vector.load %arg3[%c0_6, %c0_7] : memref<128x1536xbf16, #tpu.memory_space<vmem>>, vector<128x1536xbf16>
    %cst_8 = arith.constant dense<0.000000e+00> : vector<16x1536xf32>
    %16 = tpu.matmul %14, %15, %cst_8 {dimension_numbers = #tpu.dot_dimension_numbers<[1], [0], [0], [1], [0, 0, 1, 1], [], []>} : vector<16x128xbf16>, vector<128x1536xbf16>, vector<16x1536xf32> -> vector<16x1536xf32>
    %c0_9 = arith.constant 0 : index
    %c0_10 = arith.constant 0 : index
    %17 = vector.load %arg4[%c0_9, %c0_10] : memref<1x1536xf32, #tpu.memory_space<vmem>>, vector<1x1536xf32>
    %18 = vector.broadcast %17 : vector<1x1536xf32> to vector<16x1536xf32>
    %19 = arith.addf %16, %18 : vector<16x1536xf32>
    %20 = vector.extract_strided_slice %19 {offsets = [0, 0], sizes = [8, 1536], strides = [1, 1]} : vector<16x1536xf32> to vector<8x1536xf32>
    %21 = vector.extract_strided_slice %20 {offsets = [0, 0], sizes = [8, 512], strides = [1, 1]} : vector<8x1536xf32> to vector<8x512xf32>
    %22 = arith.negf %21 : vector<8x512xf32>
    %23 = math.exp %22 : vector<8x512xf32>
    %cst_11 = arith.constant 1.000000e+00 : f32
    %24 = vector.broadcast %cst_11 : f32 to vector<8x512xf32>
    %25 = arith.addf %24, %23 : vector<8x512xf32>
    %26 = arith.divf %24, %25 : vector<8x512xf32>
    %27 = vector.extract_strided_slice %20 {offsets = [0, 1024], sizes = [8, 512], strides = [1, 1]} : vector<8x1536xf32> to vector<8x512xf32>
    %28 = math.tanh %27 : vector<8x512xf32>
    %29 = arith.mulf %26, %28 : vector<8x512xf32>
    %c0_i32_12 = arith.constant 0 : i32
    %30 = tpu.memref_slice %arg13[%c0_i32_12] : memref<3x!tpu.dma_semaphore, #tpu.memory_space<semaphore_mem>> -> memref<1x!tpu.dma_semaphore, #tpu.memory_space<semaphore_mem>>
    %31 = tpu.memref_squeeze %30 : memref<1x!tpu.dma_semaphore, #tpu.memory_space<semaphore_mem>> -> memref<!tpu.dma_semaphore, #tpu.memory_space<semaphore_mem>>
    tpu.wait_dma2 semaphore(%31 : memref<!tpu.dma_semaphore, #tpu.memory_space<semaphore_mem>>) src(%arg5 : memref<512x1024xbf16, #tpu.memory_space<any>>) dst(%arg10 : memref<512x1024xbf16, #tpu.memory_space<vmem>>)
    %c1_i32_13 = arith.constant 1 : i32
    %32 = tpu.memref_slice %arg13[%c1_i32_13] : memref<3x!tpu.dma_semaphore, #tpu.memory_space<semaphore_mem>> -> memref<1x!tpu.dma_semaphore, #tpu.memory_space<semaphore_mem>>
    %33 = tpu.memref_squeeze %32 : memref<1x!tpu.dma_semaphore, #tpu.memory_space<semaphore_mem>> -> memref<!tpu.dma_semaphore, #tpu.memory_space<semaphore_mem>>
    tpu.wait_dma2 semaphore(%33 : memref<!tpu.dma_semaphore, #tpu.memory_space<semaphore_mem>>) src(%arg6 : memref<512x512xbf16, #tpu.memory_space<any>>) dst(%arg11 : memref<512x512xbf16, #tpu.memory_space<vmem>>)
    %34 = vector.extract_strided_slice %19 {offsets = [8, 0], sizes = [8, 1536], strides = [1, 1]} : vector<16x1536xf32> to vector<8x1536xf32>
    %35 = arith.truncf %29 : vector<8x512xf32> to vector<8x512xbf16>
    %c0_14 = arith.constant 0 : index
    %c0_15 = arith.constant 0 : index
    %36 = vector.load %arg10[%c0_14, %c0_15] : memref<512x1024xbf16, #tpu.memory_space<vmem>>, vector<512x1024xbf16>
    %cst_16 = arith.constant dense<0.000000e+00> : vector<8x1024xf32>
    %37 = tpu.matmul %35, %36, %cst_16 {dimension_numbers = #tpu.dot_dimension_numbers<[1], [0], [0], [1], [0, 0, 1, 1], [], []>} : vector<8x512xbf16>, vector<512x1024xbf16>, vector<8x1024xf32> -> vector<8x1024xf32>
    %38 = vector.extract_strided_slice %34 {offsets = [0, 0], sizes = [8, 512], strides = [1, 1]} : vector<8x1536xf32> to vector<8x512xf32>
    %39 = vector.extract_strided_slice %37 {offsets = [0, 0], sizes = [8, 512], strides = [1, 1]} : vector<8x1024xf32> to vector<8x512xf32>
    %40 = arith.addf %38, %39 : vector<8x512xf32>
    %41 = arith.negf %40 : vector<8x512xf32>
    %42 = math.exp %41 : vector<8x512xf32>
    %cst_17 = arith.constant 1.000000e+00 : f32
    %43 = vector.broadcast %cst_17 : f32 to vector<8x512xf32>
    %44 = arith.addf %43, %42 : vector<8x512xf32>
    %45 = arith.divf %43, %44 : vector<8x512xf32>
    %46 = vector.extract_strided_slice %34 {offsets = [0, 512], sizes = [8, 512], strides = [1, 1]} : vector<8x1536xf32> to vector<8x512xf32>
    %47 = vector.extract_strided_slice %37 {offsets = [0, 512], sizes = [8, 512], strides = [1, 1]} : vector<8x1024xf32> to vector<8x512xf32>
    %48 = arith.addf %46, %47 : vector<8x512xf32>
    %49 = arith.negf %48 : vector<8x512xf32>
    %50 = math.exp %49 : vector<8x512xf32>
    %cst_18 = arith.constant 1.000000e+00 : f32
    %51 = vector.broadcast %cst_18 : f32 to vector<8x512xf32>
    %52 = arith.addf %51, %50 : vector<8x512xf32>
    %53 = arith.divf %51, %52 : vector<8x512xf32>
    %54 = vector.extract_strided_slice %34 {offsets = [0, 1024], sizes = [8, 512], strides = [1, 1]} : vector<8x1536xf32> to vector<8x512xf32>
    %55 = arith.mulf %53, %29 : vector<8x512xf32>
    %56 = arith.truncf %55 : vector<8x512xf32> to vector<8x512xbf16>
    %c0_19 = arith.constant 0 : index
    %c0_20 = arith.constant 0 : index
    %57 = vector.load %arg11[%c0_19, %c0_20] : memref<512x512xbf16, #tpu.memory_space<vmem>>, vector<512x512xbf16>
    %cst_21 = arith.constant dense<0.000000e+00> : vector<8x512xf32>
    %58 = tpu.matmul %56, %57, %cst_21 {dimension_numbers = #tpu.dot_dimension_numbers<[1], [0], [0], [1], [0, 0, 1, 1], [], []>} : vector<8x512xbf16>, vector<512x512xbf16>, vector<8x512xf32> -> vector<8x512xf32>
    %59 = arith.addf %54, %58 : vector<8x512xf32>
    %60 = math.tanh %59 : vector<8x512xf32>
    %61 = arith.mulf %45, %60 : vector<8x512xf32>
    %cst_22 = arith.constant 1.000000e+00 : f32
    %62 = vector.broadcast %cst_22 : f32 to vector<8x512xf32>
    %63 = arith.subf %62, %45 : vector<8x512xf32>
    %64 = arith.mulf %63, %29 : vector<8x512xf32>
    %65 = arith.addf %61, %64 : vector<8x512xf32>
    %c2_i32_23 = arith.constant 2 : i32
    %66 = tpu.memref_slice %arg13[%c2_i32_23] : memref<3x!tpu.dma_semaphore, #tpu.memory_space<semaphore_mem>> -> memref<1x!tpu.dma_semaphore, #tpu.memory_space<semaphore_mem>>
    %67 = tpu.memref_squeeze %66 : memref<1x!tpu.dma_semaphore, #tpu.memory_space<semaphore_mem>> -> memref<!tpu.dma_semaphore, #tpu.memory_space<semaphore_mem>>
    tpu.wait_dma2 semaphore(%67 : memref<!tpu.dma_semaphore, #tpu.memory_space<semaphore_mem>>) src(%arg7 : memref<512x256xbf16, #tpu.memory_space<any>>) dst(%arg12 : memref<512x256xbf16, #tpu.memory_space<vmem>>)
    %68 = arith.truncf %65 : vector<8x512xf32> to vector<8x512xbf16>
    %c0_24 = arith.constant 0 : index
    %c0_25 = arith.constant 0 : index
    %69 = vector.load %arg12[%c0_24, %c0_25] : memref<512x256xbf16, #tpu.memory_space<vmem>>, vector<512x256xbf16>
    %cst_26 = arith.constant dense<0.000000e+00> : vector<8x256xf32>
    %70 = tpu.matmul %68, %69, %cst_26 {dimension_numbers = #tpu.dot_dimension_numbers<[1], [0], [0], [1], [0, 0, 1, 1], [], []>} : vector<8x512xbf16>, vector<512x256xbf16>, vector<8x256xf32> -> vector<8x256xf32>
    %c0_27 = arith.constant 0 : index
    %c0_28 = arith.constant 0 : index
    %71 = vector.load %arg8[%c0_27, %c0_28] : memref<1x256xf32, #tpu.memory_space<vmem>>, vector<1x256xf32>
    %72 = vector.broadcast %71 : vector<1x256xf32> to vector<8x256xf32>
    %73 = arith.addf %70, %72 : vector<8x256xf32>
    %c0_29 = arith.constant 0 : index
    %c0_30 = arith.constant 0 : index
    %74 = vector.load %arg9[%c0_29, %c0_30] : memref<8x256xf32, #tpu.memory_space<vmem>>, vector<8x256xf32>
    tpu.vector_store %arg9[%c0_29, %c0_30], %73 {strides = array<i32>} : memref<8x256xf32, #tpu.memory_space<vmem>>, vector<8x256xf32>,
    return
  }
}

</mosaic_0001>

<llo_original>
// kernel: r2n2_forward.1
$region0: #{r2n2_forward.1}
  #allocation0 [shape = 'u32[]', space=smem, size = 0x4, offset = 0x4, fixed_abs, tag = 'smem constant byte address 0x4 - core index']
  #allocation1 [shape = 'u32[72,128]{1,0:T(1,128)}', space=vmem, size = 0x9000, scoped, tag = 'internal scratch']
  #allocation2 [shape = 'bf16[512,1024]{1,0:T(8,128)(2,1)}', space=vmem, size = 0x100000, scoped, tag = 'scratch operand']
  #allocation3 [shape = 'bf16[512,512]{1,0:T(8,128)(2,1)}', space=vmem, size = 0x80000, scoped, tag = 'scratch operand']
  #allocation4 [shape = 'bf16[512,256]{1,0:T(8,128)(2,1)}', space=vmem, size = 0x40000, scoped, tag = 'scratch operand']
  #allocation5 [shape = 's32[3]{0}', space=sflag, size = 0xc, scoped, tag = 'scratch operand']
  #allocation8 [shape = 's32[]', space=sflag, size = 0x4, offset = 0, fixed_abs, tag = 'sflag constant byte address 0x0 - dummy sync flag']
  #allocation9 [shape = 's32[]', space=sflag, size = 0x4, offset = 0, fixed_abs, tag = 'sflag constant byte address 0x0 - dummy sync flag']
  #allocation10 [shape = 'u32[]', space=smem, size = 0x4, offset = 0x44, fixed_abs, tag = 'smem constant byte address 0x44 - assertion arg 0']
  #allocation11 [shape = 'u32[]', space=smem, size = 0x4, offset = 0x48, fixed_abs, tag = 'smem constant byte address 0x48 - assertion arg 1']
  #allocation12 [shape = 's32[]', space=sflag, size = 0x4, offset = 0, fixed_abs, tag = 'sflag constant byte address 0x0 - dummy sync flag']
  #allocation13 [shape = 's32[]', space=sflag, size = 0x4, offset = 0, fixed_abs, tag = 'sflag constant byte address 0x0 - dummy sync flag']
  #allocation14 [shape = 's32[]', space=sflag, size = 0x4, offset = 0, fixed_abs, tag = 'sflag constant byte address 0x0 - dummy sync flag']
  #allocation15 [shape = 's32[]', space=sflag, size = 0x4, offset = 0, fixed_abs, tag = 'sflag constant byte address 0x0 - dummy sync flag']
  %s0 = inlined_call_operand.vmem [shape: bf16[16,1024], index: 0, kind: input, shape index: {}]
  %s1 = inlined_call_operand.vmem [shape: bf16[1024,128], index: 1, kind: input, shape index: {}]
  %s2 = inlined_call_operand.vmem [shape: f32[1,128], index: 2, kind: input, shape index: {}]
  %s3 = inlined_call_operand.hbm [shape: bf16[128,1536], index: 3, kind: input, shape index: {}]
  %s4 = inlined_call_operand.vmem [shape: f32[1,1536], index: 4, kind: input, shape index: {}]
  %s5 = inlined_call_operand.hbm [shape: bf16[512,1024], index: 5, kind: input, shape index: {}]
  %s6 = inlined_call_operand.hbm [shape: bf16[512,512], index: 6, kind: input, shape index: {}]
  %s7 = inlined_call_operand.hbm [shape: bf16[512,256], index: 7, kind: input, shape index: {}]
  %s8 = inlined_call_operand.vmem [shape: f32[1,256], index: 8, kind: input, shape index: {}]
  %s9 = inlined_call_operand.vmem [shape: f32[8,256], index: 9, kind: output, shape index: {}]
  %s10 = sld [smem:[#allocation0]]
  $region50: #{r2n2_forward.1} parent=0
    _
  %s12 = ssub.s32 1, %s10
  %s13 = scalar_select 0, %s12, %s10
  $region1: #{r2n2_forward.1} parent=0
    #allocation6 [shape = 'u8[393216]{0}', space=vmem, size = 0x60000, scoped, tag = 'input window, operand 3, single buffered']
    #allocation7 [shape = 's32[1]{0}', space=sflag, size = 0x4, scoped, tag = 'scoped memory for r2n2_forward.1']
    %14 = vsyncpa [#allocation7], 0
    // Predicated region
    $region2: #{r2n2_forward.1} parent=1 // pred_check
      _
    $region3: #{r2n2_forward.1} parent=1 // pred_check_branch
      %16 = sbr.rel (0) target = $region5
    $region4: #{r2n2_forward.1} parent=1 // pred_region
      _
    $region5: #{r2n2_forward.1} parent=1 // pred_fallthru
      _
    // Predicated region
    $region6: #{r2n2_forward.1} parent=1 // pred_check
      _
    $region7: #{r2n2_forward.1} parent=1 // pred_check_branch
      %18 = sbr.rel (0) target = $region9
    $region8: #{r2n2_forward.1} parent=1 // pred_region
      _
    $region9: #{r2n2_forward.1} parent=1 // pred_fallthru
      _
    // Predicated region
    $region10: #{r2n2_forward.1} parent=1 // pred_check
      _
    $region11: #{r2n2_forward.1} parent=1 // pred_check_branch
      %20 = sbr.rel (0) target = $region13
    $region12: #{r2n2_forward.1} parent=1 // pred_region
      _
    $region13: #{r2n2_forward.1} parent=1 // pred_fallthru
      _
    // Predicated region
    $region14: #{r2n2_forward.1} parent=1 // pred_check
      _
    $region15: #{r2n2_forward.1} parent=1 // pred_check_branch
      %22 = sbr.rel (0) target = $region17
    $region16: #{r2n2_forward.1} parent=1 // pred_region
      %24 = vsyncadd [#allocation7], 0
      %s25 = sshll.u32 %s3, 4
      %s26 = int_to_ptr.hbm [resolvable:$true] %s25
      %s27 = sshll.u32 [#allocation6], 4
      %s28 = int_to_ptr.vmem [resolvable:$true] %s27
      %33 = dma.hbm_to_vmem [thread:$0]  %s26, 12288, %s28, [#allocation7], 768, 768, 48
    $region17: #{r2n2_forward.1} parent=1 // pred_fallthru
      _
    // Predicated region
    $region18: #{r2n2_forward.1} parent=1 // pred_check
      _
    $region19: #{r2n2_forward.1} parent=1 // pred_check_branch
      %35 = sbr.rel (0) target = $region21
    $region20: #{r2n2_forward.1} parent=1 // pred_region
      _
    $region21: #{r2n2_forward.1} parent=1 // pred_fallthru
      _
    // Predicated region
    $region22: #{r2n2_forward.1} parent=1 // pred_check
      _
    $region23: #{r2n2_forward.1} parent=1 // pred_check_branch
      %37 = sbr.rel (0) target = $region25
    $region24: #{r2n2_forward.1} parent=1 // pred_region
      _
    $region25: #{r2n2_forward.1} parent=1 // pred_fallthru
      _
    // Predicated region
    $region26: #{r2n2_forward.1} parent=1 // pred_check
      _
    $region27: #{r2n2_forward.1} parent=1 // pred_check_branch
      %39 = sbr.rel (0) target = $region29
    $region28: #{r2n2_forward.1} parent=1 // pred_region
      %41 = dma.done [#allocation7], 12288
    $region29: #{r2n2_forward.1} parent=1 // pred_fallthru
      _
    // Predicated region
    $region30: #{r2n2_forward.1} parent=1 // pred_check
      _
    $region31: #{r2n2_forward.1} parent=1 // pred_check_branch
      %43 = sbr.rel target = $region33
    $region32: #{r2n2_forward.1} parent=1 // pred_region
      %44 = sst [smem:[#allocation10]] [#allocation9]
      %45 = sst [smem:[#allocation11]] [#allocation8]
    $region33: #{r2n2_forward.1} parent=1 // pred_fallthru
      _
    %47 = shalt.err (0)
    %s49 = sshll.u32 %s5, 4
    %s50 = int_to_ptr.hbm [resolvable:$true] %s49
    %s51 = sshll.u32 [#allocation2], 4
    %s52 = int_to_ptr.vmem [resolvable:$true] %s51
    %54 = dma.hbm_to_vmem [thread:$0]  %s50, 32768, %s52, [#allocation5]
    %s55 = scalar_lea.sflag [#allocation5], 1
    // Predicated region
    $region34: #{r2n2_forward.1} parent=1 // pred_check
      _
    $region35: #{r2n2_forward.1} parent=1 // pred_check_branch
      %57 = sbr.rel target = $region37
    $region36: #{r2n2_forward.1} parent=1 // pred_region
      %58 = sst [smem:[#allocation10]] [#allocation13]
      %59 = sst [smem:[#allocation11]] [#allocation12]
    $region37: #{r2n2_forward.1} parent=1 // pred_fallthru
      _
    %61 = shalt.err (0)
    %s63 = sshll.u32 %s6, 4
    %s64 = int_to_ptr.hbm [resolvable:$true] %s63
    %s65 = sshll.u32 [#allocation3], 4
    %s66 = int_to_ptr.vmem [resolvable:$true] %s65
    %68 = dma.hbm_to_vmem [thread:$0]  %s64, 16384, %s66, %s55
    %s69 = scalar_lea.sflag [#allocation5], 2
    // Predicated region
    $region38: #{r2n2_forward.1} parent=1 // pred_check
      _
    $region39: #{r2n2_forward.1} parent=1 // pred_check_branch
      %71 = sbr.rel target = $region41
    $region40: #{r2n2_forward.1} parent=1 // pred_region
      %72 = sst [smem:[#allocation10]] [#allocation15]
      %73 = sst [smem:[#allocation11]] [#allocation14]
    $region41: #{r2n2_forward.1} parent=1 // pred_fallthru
      _
    %75 = shalt.err (0)
    %s77 = sshll.u32 %s7, 4
    %s78 = int_to_ptr.hbm [resolvable:$true] %s77
    %s79 = sshll.u32 [#allocation4], 4
    %s80 = int_to_ptr.vmem [resolvable:$true] %s79
    %82 = dma.hbm_to_vmem [thread:$0]  %s78, 8192, %s80, %s69
    %v83 = vld [vmem:[%s0] sm:$0xff]
    %v84 = vld [vmem:[%s0 + $0x8] sm:$0xff]
    %v85 = vld [vmem:[%s0 + $0x10] sm:$0xff]
    %v86 = vld [vmem:[%s0 + $0x18] sm:$0xff]
    %v87 = vld [vmem:[%s0 + $0x20] sm:$0xff]
    %v88 = vld [vmem:[%s0 + $0x28] sm:$0xff]
    %v89 = vld [vmem:[%s0 + $0x30] sm:$0xff]
    %v90 = vld [vmem:[%s0 + $0x38] sm:$0xff]
    %v91 = vld [vmem:[%s1] sm:$0xf]
    %v92 = vld [vmem:[%s1 + $0x4] sm:$0xf]
    %v93 = vld [vmem:[%s1 + $0x8] sm:$0xf]
    %v94 = vld [vmem:[%s1 + $0xc] sm:$0xf]
    %v95 = vld [vmem:[%s1 + $0x10] sm:$0xf]
    %v96 = vld [vmem:[%s1 + $0x14] sm:$0xf]
    %v97 = vld [vmem:[%s1 + $0x18] sm:$0xf]
    %v98 = vld [vmem:[%s1 + $0x1c] sm:$0xf]
    %v99 = vld [vmem:[%s1 + $0x20] sm:$0xf]
    %v100 = vld [vmem:[%s1 + $0x24] sm:$0xf]
    %v101 = vld [vmem:[%s1 + $0x28] sm:$0xf]
    %v102 = vld [vmem:[%s1 + $0x2c] sm:$0xf]
    %v103 = vld [vmem:[%s1 + $0x30] sm:$0xf]
    %v104 = vld [vmem:[%s1 + $0x34] sm:$0xf]
    %v105 = vld [vmem:[%s1 + $0x38] sm:$0xf]
    %v106 = vld [vmem:[%s1 + $0x3c] sm:$0xf]
    %v107 = vld [vmem:[%s1 + $0x40] sm:$0xf]
    %v108 = vld [vmem:[%s1 + $0x44] sm:$0xf]
    %v109 = vld [vmem:[%s1 + $0x48] sm:$0xf]
    %v110 = vld [vmem:[%s1 + $0x4c] sm:$0xf]
    %v111 = vld [vmem:[%s1 + $0x50] sm:$0xf]
    %v112 = vld [vmem:[%s1 + $0x54] sm:$0xf]
    %v113 = vld [vmem:[%s1 + $0x58] sm:$0xf]
    %v114 = vld [vmem:[%s1 + $0x5c] sm:$0xf]
    %v115 = vld [vmem:[%s1 + $0x60] sm:$0xf]
    %v116 = vld [vmem:[%s1 + $0x64] sm:$0xf]
    %v117 = vld [vmem:[%s1 + $0x68] sm:$0xf]
    %v118 = vld [vmem:[%s1 + $0x6c] sm:$0xf]
    %v119 = vld [vmem:[%s1 + $0x70] sm:$0xf]
    %v120 = vld [vmem:[%s1 + $0x74] sm:$0xf]
    %v121 = vld [vmem:[%s1 + $0x78] sm:$0xf]
    %v122 = vld [vmem:[%s1 + $0x7c] sm:$0xf]
    %v123 = vld [vmem:[%s1 + $0x80] sm:$0xf]
    %v124 = vld [vmem:[%s1 + $0x84] sm:$0xf]
    %v125 = vld [vmem:[%s1 + $0x88] sm:$0xf]
    %v126 = vld [vmem:[%s1 + $0x8c] sm:$0xf]
    %v127 = vld [vmem:[%s1 + $0x90] sm:$0xf]
    %v128 = vld [vmem:[%s1 + $0x94] sm:$0xf]
    %v129 = vld [vmem:[%s1 + $0x98] sm:$0xf]
    %v130 = vld [vmem:[%s1 + $0x9c] sm:$0xf]
    %v131 = vld [vmem:[%s1 + $0xa0] sm:$0xf]
    %v132 = vld [vmem:[%s1 + $0xa4] sm:$0xf]
    %v133 = vld [vmem:[%s1 + $0xa8] sm:$0xf]
    %v134 = vld [vmem:[%s1 + $0xac] sm:$0xf]
    %v135 = vld [vmem:[%s1 + $0xb0] sm:$0xf]
    %v136 = vld [vmem:[%s1 + $0xb4] sm:$0xf]
    %v137 = vld [vmem:[%s1 + $0xb8] sm:$0xf]
    %v138 = vld [vmem:[%s1 + $0xbc] sm:$0xf]
    %v139 = vld [vmem:[%s1 + $0xc0] sm:$0xf]
    %v140 = vld [vmem:[%s1 + $0xc4] sm:$0xf]
    %v141 = vld [vmem:[%s1 + $0xc8] sm:$0xf]
    %v142 = vld [vmem:[%s1 + $0xcc] sm:$0xf]
    %v143 = vld [vmem:[%s1 + $0xd0] sm:$0xf]
    %v144 = vld [vmem:[%s1 + $0xd4] sm:$0xf]
    %v145 = vld [vmem:[%s1 + $0xd8] sm:$0xf]
    %v146 = vld [vmem:[%s1 + $0xdc] sm:$0xf]
    %v147 = vld [vmem:[%s1 + $0xe0] sm:$0xf]
    %v148 = vld [vmem:[%s1 + $0xe4] sm:$0xf]
    %v149 = vld [vmem:[%s1 + $0xe8] sm:$0xf]
    %v150 = vld [vmem:[%s1 + $0xec] sm:$0xf]
    %v151 = vld [vmem:[%s1 + $0xf0] sm:$0xf]
    %v152 = vld [vmem:[%s1 + $0xf4] sm:$0xf]
    %v153 = vld [vmem:[%s1 + $0xf8] sm:$0xf]
    %v154 = vld [vmem:[%s1 + $0xfc] sm:$0xf]
    %v155 = vld [vmem:[%s1 + $0x100] sm:$0xf]
    %v156 = vld [vmem:[%s1 + $0x104] sm:$0xf]
    %v157 = vld [vmem:[%s1 + $0x108] sm:$0xf]
    %v158 = vld [vmem:[%s1 + $0x10c] sm:$0xf]
    %v159 = vld [vmem:[%s1 + $0x110] sm:$0xf]
    %v160 = vld [vmem:[%s1 + $0x114] sm:$0xf]
    %v161 = vld [vmem:[%s1 + $0x118] sm:$0xf]
    %v162 = vld [vmem:[%s1 + $0x11c] sm:$0xf]
    %v163 = vld [vmem:[%s1 + $0x120] sm:$0xf]
    %v164 = vld [vmem:[%s1 + $0x124] sm:$0xf]
    %v165 = vld [vmem:[%s1 + $0x128] sm:$0xf]
    %v166 = vld [vmem:[%s1 + $0x12c] sm:$0xf]
    %v167 = vld [vmem:[%s1 + $0x130] sm:$0xf]
    %v168 = vld [vmem:[%s1 + $0x134] sm:$0xf]
    %v169 = vld [vmem:[%s1 + $0x138] sm:$0xf]
    %v170 = vld [vmem:[%s1 + $0x13c] sm:$0xf]
    %v171 = vld [vmem:[%s1 + $0x140] sm:$0xf]
    %v172 = vld [vmem:[%s1 + $0x144] sm:$0xf]
    %v173 = vld [vmem:[%s1 + $0x148] sm:$0xf]
    %v174 = vld [vmem:[%s1 + $0x14c] sm:$0xf]
    %v175 = vld [vmem:[%s1 + $0x150] sm:$0xf]
    %v176 = vld [vmem:[%s1 + $0x154] sm:$0xf]
    %v177 = vld [vmem:[%s1 + $0x158] sm:$0xf]
    %v178 = vld [vmem:[%s1 + $0x15c] sm:$0xf]
    %v179 = vld [vmem:[%s1 + $0x160] sm:$0xf]
    %v180 = vld [vmem:[%s1 + $0x164] sm:$0xf]
    %v181 = vld [vmem:[%s1 + $0x168] sm:$0xf]
    %v182 = vld [vmem:[%s1 + $0x16c] sm:$0xf]
    %v183 = vld [vmem:[%s1 + $0x170] sm:$0xf]
    %v184 = vld [vmem:[%s1 + $0x174] sm:$0xf]
    %v185 = vld [vmem:[%s1 + $0x178] sm:$0xf]
    %v186 = vld [vmem:[%s1 + $0x17c] sm:$0xf]
    %v187 = vld [vmem:[%s1 + $0x180] sm:$0xf]
    %v188 = vld [vmem:[%s1 + $0x184] sm:$0xf]
    %v189 = vld [vmem:[%s1 + $0x188] sm:$0xf]
    %v190 = vld [vmem:[%s1 + $0x18c] sm:$0xf]
    %v191 = vld [vmem:[%s1 + $0x190] sm:$0xf]
    %v192 = vld [vmem:[%s1 + $0x194] sm:$0xf]
    %v193 = vld [vmem:[%s1 + $0x198] sm:$0xf]
    %v194 = vld [vmem:[%s1 + $0x19c] sm:$0xf]
    %v195 = vld [vmem:[%s1 + $0x1a0] sm:$0xf]
    %v196 = vld [vmem:[%s1 + $0x1a4] sm:$0xf]
    %v197 = vld [vmem:[%s1 + $0x1a8] sm:$0xf]
    %v198 = vld [vmem:[%s1 + $0x1ac] sm:$0xf]
    %v199 = vld [vmem:[%s1 + $0x1b0] sm:$0xf]
    %v200 = vld [vmem:[%s1 + $0x1b4] sm:$0xf]
    %v201 = vld [vmem:[%s1 + $0x1b8] sm:$0xf]
    %v202 = vld [vmem:[%s1 + $0x1bc] sm:$0xf]
    %v203 = vld [vmem:[%s1 + $0x1c0] sm:$0xf]
    %v204 = vld [vmem:[%s1 + $0x1c4] sm:$0xf]
    %v205 = vld [vmem:[%s1 + $0x1c8] sm:$0xf]
    %v206 = vld [vmem:[%s1 + $0x1cc] sm:$0xf]
    %v207 = vld [vmem:[%s1 + $0x1d0] sm:$0xf]
    %v208 = vld [vmem:[%s1 + $0x1d4] sm:$0xf]
    %v209 = vld [vmem:[%s1 + $0x1d8] sm:$0xf]
    %v210 = vld [vmem:[%s1 + $0x1dc] sm:$0xf]
    %v211 = vld [vmem:[%s1 + $0x1e0] sm:$0xf]
    %v212 = vld [vmem:[%s1 + $0x1e4] sm:$0xf]
    %v213 = vld [vmem:[%s1 + $0x1e8] sm:$0xf]
    %v214 = vld [vmem:[%s1 + $0x1ec] sm:$0xf]
    %v215 = vld [vmem:[%s1 + $0x1f0] sm:$0xf]
    %v216 = vld [vmem:[%s1 + $0x1f4] sm:$0xf]
    %v217 = vld [vmem:[%s1 + $0x1f8] sm:$0xf]
    %v218 = vld [vmem:[%s1 + $0x1fc] sm:$0xf]
    %v219 = vld [vmem:[%s2] sm:$0x1]
    %v221 = vperm.slane %v219, 0
    %v231 = vunpack.c.l.b16 %v83
    %v232 = vunpack.c.h.b16 %v83
    %v233 = vunpack.c.l.b16 %v84
    %v234 = vunpack.c.h.b16 %v84
    %v235 = vunpack.c.l.b16 %v85
    %v236 = vunpack.c.h.b16 %v85
    %v237 = vunpack.c.l.b16 %v86
    %v238 = vunpack.c.h.b16 %v86
    %v239 = vunpack.c.l.b16 %v87
    %v240 = vunpack.c.h.b16 %v87
    %v241 = vunpack.c.l.b16 %v88
    %v242 = vunpack.c.h.b16 %v88
    %v243 = vunpack.c.l.b16 %v89
    %v244 = vunpack.c.h.b16 %v89
    %v245 = vunpack.c.l.b16 %v90
    %v246 = vunpack.c.h.b16 %v90
    %v247 = vpack.c.b16 %v239, %v231
    %v248 = vpack.c.b16 %v240, %v232
    %v249 = vpack.c.b16 %v241, %v233
    %v250 = vpack.c.b16 %v242, %v234
    %v251 = vpack.c.b16 %v243, %v235
    %v252 = vpack.c.b16 %v244, %v236
    %v253 = vpack.c.b16 %v245, %v237
    %v254 = vpack.c.b16 %v246, %v238
    %v391 = vunpack.c.l.b16 %v91
    %v392 = vunpack.c.l.b16 %v92
    %v393 = vunpack.c.l.b16 %v93
    %v394 = vunpack.c.l.b16 %v94
    %v395 = vunpack.c.l.b16 %v95
    %v396 = vunpack.c.l.b16 %v96
    %v397 = vunpack.c.l.b16 %v97
    %v398 = vunpack.c.l.b16 %v98
    %v399 = vunpack.c.l.b16 %v99
    %v400 = vunpack.c.l.b16 %v100
    %v401 = vunpack.c.l.b16 %v101
    %v402 = vunpack.c.l.b16 %v102
    %v403 = vunpack.c.l.b16 %v103
    %v404 = vunpack.c.l.b16 %v104
    %v405 = vunpack.c.l.b16 %v105
    %v406 = vunpack.c.l.b16 %v106
    %v407 = vunpack.c.l.b16 %v107
    %v408 = vunpack.c.l.b16 %v108
    %v409 = vunpack.c.l.b16 %v109
    %v410 = vunpack.c.l.b16 %v110
    %v411 = vunpack.c.l.b16 %v111
    %v412 = vunpack.c.l.b16 %v112
    %v413 = vunpack.c.l.b16 %v113
    %v414 = vunpack.c.l.b16 %v114
    %v415 = vunpack.c.l.b16 %v115
    %v416 = vunpack.c.l.b16 %v116
    %v417 = vunpack.c.l.b16 %v117
    %v418 = vunpack.c.l.b16 %v118
    %v419 = vunpack.c.l.b16 %v119
    %v420 = vunpack.c.l.b16 %v120
    %v421 = vunpack.c.l.b16 %v121
    %v422 = vunpack.c.l.b16 %v122
    %v423 = vunpack.c.l.b16 %v123
    %v424 = vunpack.c.l.b16 %v124
    %v425 = vunpack.c.l.b16 %v125
    %v426 = vunpack.c.l.b16 %v126
    %v427 = vunpack.c.l.b16 %v127
    %v428 = vunpack.c.l.b16 %v128
    %v429 = vunpack.c.l.b16 %v129
    %v430 = vunpack.c.l.b16 %v130
    %v431 = vunpack.c.l.b16 %v131
    %v432 = vunpack.c.l.b16 %v132
    %v433 = vunpack.c.l.b16 %v133
    %v434 = vunpack.c.l.b16 %v134
    %v435 = vunpack.c.l.b16 %v135
    %v436 = vunpack.c.l.b16 %v136
    %v437 = vunpack.c.l.b16 %v137
    %v438 = vunpack.c.l.b16 %v138
    %v439 = vunpack.c.l.b16 %v139
    %v440 = vunpack.c.l.b16 %v140
    %v441 = vunpack.c.l.b16 %v141
    %v442 = vunpack.c.l.b16 %v142
    %v443 = vunpack.c.l.b16 %v143
    %v444 = vunpack.c.l.b16 %v144
    %v445 = vunpack.c.l.b16 %v145
    %v446 = vunpack.c.l.b16 %v146
    %v447 = vunpack.c.l.b16 %v147
    %v448 = vunpack.c.l.b16 %v148
    %v449 = vunpack.c.l.b16 %v149
    %v450 = vunpack.c.l.b16 %v150
    %v451 = vunpack.c.l.b16 %v151
    %v452 = vunpack.c.l.b16 %v152
    %v453 = vunpack.c.l.b16 %v153
    %v454 = vunpack.c.l.b16 %v154
    %v455 = vunpack.c.l.b16 %v155
    %v456 = vunpack.c.l.b16 %v156
    %v457 = vunpack.c.l.b16 %v157
    %v458 = vunpack.c.l.b16 %v158
    %v459 = vunpack.c.l.b16 %v159
    %v460 = vunpack.c.l.b16 %v160
    %v461 = vunpack.c.l.b16 %v161
    %v462 = vunpack.c.l.b16 %v162
    %v463 = vunpack.c.l.b16 %v163
    %v464 = vunpack.c.l.b16 %v164
    %v465 = vunpack.c.l.b16 %v165
    %v466 = vunpack.c.l.b16 %v166
    %v467 = vunpack.c.l.b16 %v167
    %v468 = vunpack.c.l.b16 %v168
    %v469 = vunpack.c.l.b16 %v169
    %v470 = vunpack.c.l.b16 %v170
    %v471 = vunpack.c.l.b16 %v171
    %v472 = vunpack.c.l.b16 %v172
    %v473 = vunpack.c.l.b16 %v173
    %v474 = vunpack.c.l.b16 %v174
    %v475 = vunpack.c.l.b16 %v175
    %v476 = vunpack.c.l.b16 %v176
    %v477 = vunpack.c.l.b16 %v177
    %v478 = vunpack.c.l.b16 %v178
    %v479 = vunpack.c.l.b16 %v179
    %v480 = vunpack.c.l.b16 %v180
    %v481 = vunpack.c.l.b16 %v181
    %v482 = vunpack.c.l.b16 %v182
    %v483 = vunpack.c.l.b16 %v183
    %v484 = vunpack.c.l.b16 %v184
    %v485 = vunpack.c.l.b16 %v185
    %v486 = vunpack.c.l.b16 %v186
    %v487 = vunpack.c.l.b16 %v187
    %v488 = vunpack.c.l.b16 %v188
    %v489 = vunpack.c.l.b16 %v189
    %v490 = vunpack.c.l.b16 %v190
    %v491 = vunpack.c.l.b16 %v191
    %v492 = vunpack.c.l.b16 %v192
    %v493 = vunpack.c.l.b16 %v193
    %v494 = vunpack.c.l.b16 %v194
    %v495 = vunpack.c.l.b16 %v195
    %v496 = vunpack.c.l.b16 %v196
    %v497 = vunpack.c.l.b16 %v197
    %v498 = vunpack.c.l.b16 %v198
    %v499 = vunpack.c.l.b16 %v199
    %v500 = vunpack.c.l.b16 %v200
    %v501 = vunpack.c.l.b16 %v201
    %v502 = vunpack.c.l.b16 %v202
    %v503 = vunpack.c.l.b16 %v203
    %v504 = vunpack.c.l.b16 %v204
    %v505 = vunpack.c.l.b16 %v205
    %v506 = vunpack.c.l.b16 %v206
    %v507 = vunpack.c.l.b16 %v207
    %v508 = vunpack.c.l.b16 %v208
    %v509 = vunpack.c.l.b16 %v209
    %v510 = vunpack.c.l.b16 %v210
    %v511 = vunpack.c.l.b16 %v211
    %v512 = vunpack.c.l.b16 %v212
    %v513 = vunpack.c.l.b16 %v213
    %v514 = vunpack.c.l.b16 %v214
    %v515 = vunpack.c.l.b16 %v215
    %v516 = vunpack.c.l.b16 %v216
    %v517 = vunpack.c.l.b16 %v217
    %v518 = vunpack.c.l.b16 %v218
    %v519 = vpack.c.b16 %v392, %v391
    %v520 = vpack.c.b16 %v394, %v393
    %v521 = vpack.c.b16 %v396, %v395
    %v522 = vpack.c.b16 %v398, %v397
    %v523 = vpack.c.b16 %v400, %v399
    %v524 = vpack.c.b16 %v402, %v401
    %v525 = vpack.c.b16 %v404, %v403
    %v526 = vpack.c.b16 %v406, %v405
    %v527 = vpack.c.b16 %v408, %v407
    %v528 = vpack.c.b16 %v410, %v409
    %v529 = vpack.c.b16 %v412, %v411
    %v530 = vpack.c.b16 %v414, %v413
    %v531 = vpack.c.b16 %v416, %v415
    %v532 = vpack.c.b16 %v418, %v417
    %v533 = vpack.c.b16 %v420, %v419
    %v534 = vpack.c.b16 %v422, %v421
    %v535 = vpack.c.b16 %v424, %v423
    %v536 = vpack.c.b16 %v426, %v425
    %v537 = vpack.c.b16 %v428, %v427
    %v538 = vpack.c.b16 %v430, %v429
    %v539 = vpack.c.b16 %v432, %v431
    %v540 = vpack.c.b16 %v434, %v433
    %v541 = vpack.c.b16 %v436, %v435
    %v542 = vpack.c.b16 %v438, %v437
    %v543 = vpack.c.b16 %v440, %v439
    %v544 = vpack.c.b16 %v442, %v441
    %v545 = vpack.c.b16 %v444, %v443
    %v546 = vpack.c.b16 %v446, %v445
    %v547 = vpack.c.b16 %v448, %v447
    %v548 = vpack.c.b16 %v450, %v449
    %v549 = vpack.c.b16 %v452, %v451
    %v550 = vpack.c.b16 %v454, %v453
    %v551 = vpack.c.b16 %v456, %v455
    %v552 = vpack.c.b16 %v458, %v457
    %v553 = vpack.c.b16 %v460, %v459
    %v554 = vpack.c.b16 %v462, %v461
    %v555 = vpack.c.b16 %v464, %v463
    %v556 = vpack.c.b16 %v466, %v465
    %v557 = vpack.c.b16 %v468, %v467
    %v558 = vpack.c.b16 %v470, %v469
    %v559 = vpack.c.b16 %v472, %v471
    %v560 = vpack.c.b16 %v474, %v473
    %v561 = vpack.c.b16 %v476, %v475
    %v562 = vpack.c.b16 %v478, %v477
    %v563 = vpack.c.b16 %v480, %v479
    %v564 = vpack.c.b16 %v482, %v481
    %v565 = vpack.c.b16 %v484, %v483
    %v566 = vpack.c.b16 %v486, %v485
    %v567 = vpack.c.b16 %v488, %v487
    %v568 = vpack.c.b16 %v490, %v489
    %v569 = vpack.c.b16 %v492, %v491
    %v570 = vpack.c.b16 %v494, %v493
    %v571 = vpack.c.b16 %v496, %v495
    %v572 = vpack.c.b16 %v498, %v497
    %v573 = vpack.c.b16 %v500, %v499
    %v574 = vpack.c.b16 %v502, %v501
    %v575 = vpack.c.b16 %v504, %v503
    %v576 = vpack.c.b16 %v506, %v505
    %v577 = vpack.c.b16 %v508, %v507
    %v578 = vpack.c.b16 %v510, %v509
    %v579 = vpack.c.b16 %v512, %v511
    %v580 = vpack.c.b16 %v514, %v513
    %v581 = vpack.c.b16 %v516, %v515
    %v582 = vpack.c.b16 %v518, %v517
    %647 = vmatpush.bf16.msra.mxu0 %v526
    %648 = vmatpush.bf16.msra.mxu0 %v525
    %649 = vmatpush.bf16.msra.mxu0 %v524
    %650 = vmatpush.bf16.msra.mxu0 %v523
    %651 = vmatpush.bf16.msra.mxu0 %v522
    %652 = vmatpush.bf16.msra.mxu0 %v521
    %653 = vmatpush.bf16.msra.mxu0 %v520
    %654 = vmatpush.bf16.msra.mxu0 %v519
    %655 = vmatmul.bf16.gmra.mxu0 %v247
    %v656 = vpop.f32.mrf.mxu0
    %v657 = vadd.f32 %v221, %v656
    %v658 = vpop.f32.mrf.mxu0
    %v659 = vadd.f32 %v221, %v658
    %660 = vdwg.mxu0
    %661 = vmatpush.bf16.msra.mxu0 %v534
    %662 = vmatpush.bf16.msra.mxu0 %v533
    %663 = vmatpush.bf16.msra.mxu0 %v532
    %664 = vmatpush.bf16.msra.mxu0 %v531
    %665 = vmatpush.bf16.msra.mxu0 %v530
    %666 = vmatpush.bf16.msra.mxu0 %v529
    %667 = vmatpush.bf16.msra.mxu0 %v528
    %668 = vmatpush.bf16.msra.mxu0 %v527
    %669 = vmatmul.bf16.gmra.mxu0 %v248
    %v670 = vpop.f32.mrf.mxu0
    %v671 = vadd.f32 %v657, %v670
    %v672 = vpop.f32.mrf.mxu0
    %v673 = vadd.f32 %v659, %v672
    %674 = vdwg.mxu0
    %675 = vmatpush.bf16.msra.mxu0 %v542
    %676 = vmatpush.bf16.msra.mxu0 %v541
    %677 = vmatpush.bf16.msra.mxu0 %v540
    %678 = vmatpush.bf16.msra.mxu0 %v539
    %679 = vmatpush.bf16.msra.mxu0 %v538
    %680 = vmatpush.bf16.msra.mxu0 %v537
    %681 = vmatpush.bf16.msra.mxu0 %v536
    %682 = vmatpush.bf16.msra.mxu0 %v535
    %683 = vmatmul.bf16.gmra.mxu0 %v249
    %v684 = vpop.f32.mrf.mxu0
    %v685 = vadd.f32 %v671, %v684
    %v686 = vpop.f32.mrf.mxu0
    %v687 = vadd.f32 %v673, %v686
    %688 = vdwg.mxu0
    %689 = vmatpush.bf16.msra.mxu0 %v550
    %690 = vmatpush.bf16.msra.mxu0 %v549
    %691 = vmatpush.bf16.msra.mxu0 %v548
    %692 = vmatpush.bf16.msra.mxu0 %v547
    %693 = vmatpush.bf16.msra.mxu0 %v546
    %694 = vmatpush.bf16.msra.mxu0 %v545
    %695 = vmatpush.bf16.msra.mxu0 %v544
    %696 = vmatpush.bf16.msra.mxu0 %v543
    %697 = vmatmul.bf16.gmra.mxu0 %v250
    %v698 = vpop.f32.mrf.mxu0
    %v699 = vadd.f32 %v685, %v698
    %v700 = vpop.f32.mrf.mxu0
    %v701 = vadd.f32 %v687, %v700
    %702 = vdwg.mxu0
    %703 = vmatpush.bf16.msra.mxu0 %v558
    %704 = vmatpush.bf16.msra.mxu0 %v557
    %705 = vmatpush.bf16.msra.mxu0 %v556
    %706 = vmatpush.bf16.msra.mxu0 %v555
    %707 = vmatpush.bf16.msra.mxu0 %v554
    %708 = vmatpush.bf16.msra.mxu0 %v553
    %709 = vmatpush.bf16.msra.mxu0 %v552
    %710 = vmatpush.bf16.msra.mxu0 %v551
    %711 = vmatmul.bf16.gmra.mxu0 %v251
    %v712 = vpop.f32.mrf.mxu0
    %v713 = vadd.f32 %v699, %v712
    %v714 = vpop.f32.mrf.mxu0
    %v715 = vadd.f32 %v701, %v714
    %716 = vdwg.mxu0
    %717 = vmatpush.bf16.msra.mxu0 %v566
    %718 = vmatpush.bf16.msra.mxu0 %v565
    %719 = vmatpush.bf16.msra.mxu0 %v564
    %720 = vmatpush.bf16.msra.mxu0 %v563
    %721 = vmatpush.bf16.msra.mxu0 %v562
    %722 = vmatpush.bf16.msra.mxu0 %v561
    %723 = vmatpush.bf16.msra.mxu0 %v560
    %724 = vmatpush.bf16.msra.mxu0 %v559
    %725 = vmatmul.bf16.gmra.mxu0 %v252
    %v726 = vpop.f32.mrf.mxu0
    %v727 = vadd.f32 %v713, %v726
    %v728 = vpop.f32.mrf.mxu0
    %v729 = vadd.f32 %v715, %v728
    %730 = vdwg.mxu0
    %731 = vmatpush.bf16.msra.mxu0 %v574
    %732 = vmatpush.bf16.msra.mxu0 %v573
    %733 = vmatpush.bf16.msra.mxu0 %v572
    %734 = vmatpush.bf16.msra.mxu0 %v571
    %735 = vmatpush.bf16.msra.mxu0 %v570
    %736 = vmatpush.bf16.msra.mxu0 %v569
    %737 = vmatpush.bf16.msra.mxu0 %v568
    %738 = vmatpush.bf16.msra.mxu0 %v567
    %739 = vmatmul.bf16.gmra.mxu0 %v253
    %v740 = vpop.f32.mrf.mxu0
    %v741 = vadd.f32 %v727, %v740
    %v742 = vpop.f32.mrf.mxu0
    %v743 = vadd.f32 %v729, %v742
    %744 = vdwg.mxu0
    %745 = vmatpush.bf16.msra.mxu0 %v582
    %746 = vmatpush.bf16.msra.mxu0 %v581
    %747 = vmatpush.bf16.msra.mxu0 %v580
    %748 = vmatpush.bf16.msra.mxu0 %v579
    %749 = vmatpush.bf16.msra.mxu0 %v578
    %750 = vmatpush.bf16.msra.mxu0 %v577
    %751 = vmatpush.bf16.msra.mxu0 %v576
    %752 = vmatpush.bf16.msra.mxu0 %v575
    %753 = vmatmul.bf16.gmra.mxu0 %v254
    %v754 = vpop.f32.mrf.mxu0
    %v755 = vadd.f32 %v741, %v754
    %v756 = vpop.f32.mrf.mxu0
    %v757 = vadd.f32 %v743, %v756
    %758 = vdwg.mxu0
    %v759 = vmax.f32 %v755, 0.0
    %v760 = vmax.f32 %v757, 0.0
    %v761 = vpack.c.bf16 %v760, %v759
    %v762 = vld [vmem:[#allocation6] sm:$0xff]
    %v763 = vld [vmem:[#allocation6 + $0x8] sm:$0xff]
    %v764 = vld [vmem:[#allocation6 + $0x10] sm:$0xff]
    %v765 = vld [vmem:[#allocation6 + $0x18] sm:$0xff]
    %v766 = vld [vmem:[#allocation6 + $0x20] sm:$0xff]
    %v767 = vld [vmem:[#allocation6 + $0x28] sm:$0xff]
    %v768 = vld [vmem:[#allocation6 + $0x30] sm:$0xff]
    %v769 = vld [vmem:[#allocation6 + $0x38] sm:$0xff]
    %v770 = vld [vmem:[#allocation6 + $0x40] sm:$0xff]
    %v771 = vld [vmem:[#allocation6 + $0x48] sm:$0xff]
    %v772 = vld [vmem:[#allocation6 + $0x50] sm:$0xff]
    %v773 = vld [vmem:[#allocation6 + $0x58] sm:$0xff]
    %v774 = vld [vmem:[#allocation6 + $0x60] sm:$0xff]
    %v775 = vld [vmem:[#allocation6 + $0x68] sm:$0xff]
    %v776 = vld [vmem:[#allocation6 + $0x70] sm:$0xff]
    %v777 = vld [vmem:[#allocation6 + $0x78] sm:$0xff]
    %v778 = vld [vmem:[#allocation6 + $0x80] sm:$0xff]
    %v779 = vld [vmem:[#allocation6 + $0x88] sm:$0xff]
    %v780 = vld [vmem:[#allocation6 + $0x90] sm:$0xff]
    %v781 = vld [vmem:[#allocation6 + $0x98] sm:$0xff]
    %v782 = vld [vmem:[#allocation6 + $0xa0] sm:$0xff]
    %v783 = vld [vmem:[#allocation6 + $0xa8] sm:$0xff]
    %v784 = vld [vmem:[#allocation6 + $0xb0] sm:$0xff]
    %v785 = vld [vmem:[#allocation6 + $0xb8] sm:$0xff]
    %v786 = vld [vmem:[#allocation6 + $0xc0] sm:$0xff]
    %v787 = vld [vmem:[#allocation6 + $0xc8] sm:$0xff]
    %v788 = vld [vmem:[#allocation6 + $0xd0] sm:$0xff]
    %v789 = vld [vmem:[#allocation6 + $0xd8] sm:$0xff]
    %v790 = vld [vmem:[#allocation6 + $0xe0] sm:$0xff]
    %v791 = vld [vmem:[#allocation6 + $0xe8] sm:$0xff]
    %v792 = vld [vmem:[#allocation6 + $0xf0] sm:$0xff]
    %v793 = vld [vmem:[#allocation6 + $0xf8] sm:$0xff]
    %v794 = vld [vmem:[#allocation6 + $0x100] sm:$0xff]
    %v795 = vld [vmem:[#allocation6 + $0x108] sm:$0xff]
    %v796 = vld [vmem:[#allocation6 + $0x110] sm:$0xff]
    %v797 = vld [vmem:[#allocation6 + $0x118] sm:$0xff]
    %v798 = vld [vmem:[#allocation6 + $0x120] sm:$0xff]
    %v799 = vld [vmem:[#allocation6 + $0x128] sm:$0xff]
    %v800 = vld [vmem:[#allocation6 + $0x130] sm:$0xff]
    %v801 = vld [vmem:[#allocation6 + $0x138] sm:$0xff]
    %v802 = vld [vmem:[#allocation6 + $0x140] sm:$0xff]
    %v803 = vld [vmem:[#allocation6 + $0x148] sm:$0xff]
    %v804 = vld [vmem:[#allocation6 + $0x150] sm:$0xff]
    %v805 = vld [vmem:[#allocation6 + $0x158] sm:$0xff]
    %v806 = vld [vmem:[#allocation6 + $0x160] sm:$0xff]
    %v807 = vld [vmem:[#allocation6 + $0x168] sm:$0xff]
    %v808 = vld [vmem:[#allocation6 + $0x170] sm:$0xff]
    %v809 = vld [vmem:[#allocation6 + $0x178] sm:$0xff]
    %v810 = vld [vmem:[#allocation6 + $0x180] sm:$0xff]
    %v811 = vld [vmem:[#allocation6 + $0x188] sm:$0xff]
    %v812 = vld [vmem:[#allocation6 + $0x190] sm:$0xff]
    %v813 = vld [vmem:[#allocation6 + $0x198] sm:$0xff]
    %v814 = vld [vmem:[#allocation6 + $0x1a0] sm:$0xff]
    %v815 = vld [vmem:[#allocation6 + $0x1a8] sm:$0xff]
    %v816 = vld [vmem:[#allocation6 + $0x1b0] sm:$0xff]
    %v817 = vld [vmem:[#allocation6 + $0x1b8] sm:$0xff]
    %v818 = vld [vmem:[#allocation6 + $0x1c0] sm:$0xff]
    %v819 = vld [vmem:[#allocation6 + $0x1c8] sm:$0xff]
    %v820 = vld [vmem:[#allocation6 + $0x1d0] sm:$0xff]
    %v821 = vld [vmem:[#allocation6 + $0x1d8] sm:$0xff]
    %v822 = vld [vmem:[#allocation6 + $0x1e0] sm:$0xff]
    %v823 = vld [vmem:[#allocation6 + $0x1e8] sm:$0xff]
    %v824 = vld [vmem:[#allocation6 + $0x1f0] sm:$0xff]
    %v825 = vld [vmem:[#allocation6 + $0x1f8] sm:$0xff]
    %v826 = vld [vmem:[#allocation6 + $0x200] sm:$0xff]
    %v827 = vld [vmem:[#allocation6 + $0x208] sm:$0xff]
    %v828 = vld [vmem:[#allocation6 + $0x210] sm:$0xff]
    %v829 = vld [vmem:[#allocation6 + $0x218] sm:$0xff]
    %v830 = vld [vmem:[#allocation6 + $0x220] sm:$0xff]
    %v831 = vld [vmem:[#allocation6 + $0x228] sm:$0xff]
    %v832 = vld [vmem:[#allocation6 + $0x230] sm:$0xff]
    %v833 = vld [vmem:[#allocation6 + $0x238] sm:$0xff]
    %v834 = vld [vmem:[#allocation6 + $0x240] sm:$0xff]
    %v835 = vld [vmem:[#allocation6 + $0x248] sm:$0xff]
    %v836 = vld [vmem:[#allocation6 + $0x250] sm:$0xff]
    %v837 = vld [vmem:[#allocation6 + $0x258] sm:$0xff]
    %v838 = vld [vmem:[#allocation6 + $0x260] sm:$0xff]
    %v839 = vld [vmem:[#allocation6 + $0x268] sm:$0xff]
    %v840 = vld [vmem:[#allocation6 + $0x270] sm:$0xff]
    %v841 = vld [vmem:[#allocation6 + $0x278] sm:$0xff]
    %v842 = vld [vmem:[#allocation6 + $0x280] sm:$0xff]
    %v843 = vld [vmem:[#allocation6 + $0x288] sm:$0xff]
    %v844 = vld [vmem:[#allocation6 + $0x290] sm:$0xff]
    %v845 = vld [vmem:[#allocation6 + $0x298] sm:$0xff]
    %v846 = vld [vmem:[#allocation6 + $0x2a0] sm:$0xff]
    %v847 = vld [vmem:[#allocation6 + $0x2a8] sm:$0xff]
    %v848 = vld [vmem:[#allocation6 + $0x2b0] sm:$0xff]
    %v849 = vld [vmem:[#allocation6 + $0x2b8] sm:$0xff]
    %v850 = vld [vmem:[#allocation6 + $0x2c0] sm:$0xff]
    %v851 = vld [vmem:[#allocation6 + $0x2c8] sm:$0xff]
    %v852 = vld [vmem:[#allocation6 + $0x2d0] sm:$0xff]
    %v853 = vld [vmem:[#allocation6 + $0x2d8] sm:$0xff]
    %v854 = vld [vmem:[#allocation6 + $0x2e0] sm:$0xff]
    %v855 = vld [vmem:[#allocation6 + $0x2e8] sm:$0xff]
    %v856 = vld [vmem:[#allocation6 + $0x2f0] sm:$0xff]
    %v857 = vld [vmem:[#allocation6 + $0x2f8] sm:$0xff]
    %v858 = vld [vmem:[%s4] sm:$0xff]
    %v859 = vld [vmem:[%s4 + $0x8] sm:$0xf]
    %v862 = vperm.slane %v858, 0
    %v863 = vperm.slane %v858, 1
    %v864 = vperm.slane %v858, 2
    %v865 = vperm.slane %v858, 3
    %v866 = vperm.slane %v858, 4
    %v867 = vperm.slane %v858, 5
    %v868 = vperm.slane %v858, 6
    %v869 = vperm.slane %v858, 7
    %v870 = vperm.slane %v859, 0
    %v871 = vperm.slane %v859, 1
    %v872 = vperm.slane %v859, 2
    %v873 = vperm.slane %v859, 3
    %v982 = vunpack.c.l.b16 %v762
    %v983 = vunpack.c.h.b16 %v762
    %v984 = vunpack.c.l.b16 %v763
    %v985 = vunpack.c.h.b16 %v763
    %v986 = vunpack.c.l.b16 %v764
    %v987 = vunpack.c.h.b16 %v764
    %v988 = vunpack.c.l.b16 %v765
    %v989 = vunpack.c.h.b16 %v765
    %v990 = vunpack.c.l.b16 %v766
    %v991 = vunpack.c.h.b16 %v766
    %v992 = vunpack.c.l.b16 %v767
    %v993 = vunpack.c.h.b16 %v767
    %v994 = vunpack.c.l.b16 %v768
    %v995 = vunpack.c.h.b16 %v768
    %v996 = vunpack.c.l.b16 %v769
    %v997 = vunpack.c.h.b16 %v769
    %v998 = vunpack.c.l.b16 %v770
    %v999 = vunpack.c.h.b16 %v770
    %v1000 = vunpack.c.l.b16 %v771
    %v1001 = vunpack.c.h.b16 %v771
    %v1002 = vunpack.c.l.b16 %v772
    %v1003 = vunpack.c.h.b16 %v772
    %v1004 = vunpack.c.l.b16 %v773
    %v1005 = vunpack.c.h.b16 %v773
    %v1006 = vunpack.c.l.b16 %v774
    %v1007 = vunpack.c.h.b16 %v774
    %v1008 = vunpack.c.l.b16 %v775
    %v1009 = vunpack.c.h.b16 %v775
    %v1010 = vunpack.c.l.b16 %v776
    %v1011 = vunpack.c.h.b16 %v776
    %v1012 = vunpack.c.l.b16 %v777
    %v1013 = vunpack.c.h.b16 %v777
    %v1014 = vunpack.c.l.b16 %v778
    %v1015 = vunpack.c.h.b16 %v778
    %v1016 = vunpack.c.l.b16 %v779
    %v1017 = vunpack.c.h.b16 %v779
    %v1018 = vunpack.c.l.b16 %v780
    %v1019 = vunpack.c.h.b16 %v780
    %v1020 = vunpack.c.l.b16 %v781
    %v1021 = vunpack.c.h.b16 %v781
    %v1022 = vunpack.c.l.b16 %v782
    %v1023 = vunpack.c.h.b16 %v782
    %v1024 = vunpack.c.l.b16 %v783
    %v1025 = vunpack.c.h.b16 %v783
    %v1026 = vunpack.c.l.b16 %v784
    %v1027 = vunpack.c.h.b16 %v784
    %v1028 = vunpack.c.l.b16 %v785
    %v1029 = vunpack.c.h.b16 %v785
    %v1030 = vunpack.c.l.b16 %v786
    %v1031 = vunpack.c.h.b16 %v786
    %v1032 = vunpack.c.l.b16 %v787
    %v1033 = vunpack.c.h.b16 %v787
    %v1034 = vunpack.c.l.b16 %v788
    %v1035 = vunpack.c.h.b16 %v788
    %v1036 = vunpack.c.l.b16 %v789
    %v1037 = vunpack.c.h.b16 %v789
    %v1038 = vunpack.c.l.b16 %v790
    %v1039 = vunpack.c.h.b16 %v790
    %v1040 = vunpack.c.l.b16 %v791
    %v1041 = vunpack.c.h.b16 %v791
    %v1042 = vunpack.c.l.b16 %v792
    %v1043 = vunpack.c.h.b16 %v792
    %v1044 = vunpack.c.l.b16 %v793
    %v1045 = vunpack.c.h.b16 %v793
    %v1046 = vunpack.c.l.b16 %v794
    %v1047 = vunpack.c.h.b16 %v794
    %v1048 = vunpack.c.l.b16 %v795
    %v1049 = vunpack.c.h.b16 %v795
    %v1050 = vunpack.c.l.b16 %v796
    %v1051 = vunpack.c.h.b16 %v796
    %v1052 = vunpack.c.l.b16 %v797
    %v1053 = vunpack.c.h.b16 %v797
    %v1054 = vunpack.c.l.b16 %v798
    %v1055 = vunpack.c.h.b16 %v798
    %v1056 = vunpack.c.l.b16 %v799
    %v1057 = vunpack.c.h.b16 %v799
    %v1058 = vunpack.c.l.b16 %v800
    %v1059 = vunpack.c.h.b16 %v800
    %v1060 = vunpack.c.l.b16 %v801
    %v1061 = vunpack.c.h.b16 %v801
    %v1062 = vunpack.c.l.b16 %v802
    %v1063 = vunpack.c.h.b16 %v802
    %v1064 = vunpack.c.l.b16 %v803
    %v1065 = vunpack.c.h.b16 %v803
    %v1066 = vunpack.c.l.b16 %v804
    %v1067 = vunpack.c.h.b16 %v804
    %v1068 = vunpack.c.l.b16 %v805
    %v1069 = vunpack.c.h.b16 %v805
    %v1070 = vunpack.c.l.b16 %v806
    %v1071 = vunpack.c.h.b16 %v806
    %v1072 = vunpack.c.l.b16 %v807
    %v1073 = vunpack.c.h.b16 %v807
    %v1074 = vunpack.c.l.b16 %v808
    %v1075 = vunpack.c.h.b16 %v808
    %v1076 = vunpack.c.l.b16 %v809
    %v1077 = vunpack.c.h.b16 %v809
    %v1078 = vunpack.c.l.b16 %v810
    %v1079 = vunpack.c.h.b16 %v810
    %v1080 = vunpack.c.l.b16 %v811
    %v1081 = vunpack.c.h.b16 %v811
    %v1082 = vunpack.c.l.b16 %v812
    %v1083 = vunpack.c.h.b16 %v812
    %v1084 = vunpack.c.l.b16 %v813
    %v1085 = vunpack.c.h.b16 %v813
    %v1086 = vunpack.c.l.b16 %v814
    %v1087 = vunpack.c.h.b16 %v814
    %v1088 = vunpack.c.l.b16 %v815
    %v1089 = vunpack.c.h.b16 %v815
    %v1090 = vunpack.c.l.b16 %v816
    %v1091 = vunpack.c.h.b16 %v816
    %v1092 = vunpack.c.l.b16 %v817
    %v1093 = vunpack.c.h.b16 %v817
    %v1094 = vunpack.c.l.b16 %v818
    %v1095 = vunpack.c.h.b16 %v818
    %v1096 = vunpack.c.l.b16 %v819
    %v1097 = vunpack.c.h.b16 %v819
    %v1098 = vunpack.c.l.b16 %v820
    %v1099 = vunpack.c.h.b16 %v820
    %v1100 = vunpack.c.l.b16 %v821
    %v1101 = vunpack.c.h.b16 %v821
    %v1102 = vunpack.c.l.b16 %v822
    %v1103 = vunpack.c.h.b16 %v822
    %v1104 = vunpack.c.l.b16 %v823
    %v1105 = vunpack.c.h.b16 %v823
    %v1106 = vunpack.c.l.b16 %v824
    %v1107 = vunpack.c.h.b16 %v824
    %v1108 = vunpack.c.l.b16 %v825
    %v1109 = vunpack.c.h.b16 %v825
    %v1110 = vunpack.c.l.b16 %v826
    %v1111 = vunpack.c.h.b16 %v826
    %v1112 = vunpack.c.l.b16 %v827
    %v1113 = vunpack.c.h.b16 %v827
    %v1114 = vunpack.c.l.b16 %v828
    %v1115 = vunpack.c.h.b16 %v828
    %v1116 = vunpack.c.l.b16 %v829
    %v1117 = vunpack.c.h.b16 %v829
    %v1118 = vunpack.c.l.b16 %v830
    %v1119 = vunpack.c.h.b16 %v830
    %v1120 = vunpack.c.l.b16 %v831
    %v1121 = vunpack.c.h.b16 %v831
    %v1122 = vunpack.c.l.b16 %v832
    %v1123 = vunpack.c.h.b16 %v832
    %v1124 = vunpack.c.l.b16 %v833
    %v1125 = vunpack.c.h.b16 %v833
    %v1126 = vunpack.c.l.b16 %v834
    %v1127 = vunpack.c.h.b16 %v834
    %v1128 = vunpack.c.l.b16 %v835
    %v1129 = vunpack.c.h.b16 %v835
    %v1130 = vunpack.c.l.b16 %v836
    %v1131 = vunpack.c.h.b16 %v836
    %v1132 = vunpack.c.l.b16 %v837
    %v1133 = vunpack.c.h.b16 %v837
    %v1134 = vunpack.c.l.b16 %v838
    %v1135 = vunpack.c.h.b16 %v838
    %v1136 = vunpack.c.l.b16 %v839
    %v1137 = vunpack.c.h.b16 %v839
    %v1138 = vunpack.c.l.b16 %v840
    %v1139 = vunpack.c.h.b16 %v840
    %v1140 = vunpack.c.l.b16 %v841
    %v1141 = vunpack.c.h.b16 %v841
    %v1142 = vunpack.c.l.b16 %v842
    %v1143 = vunpack.c.h.b16 %v842
    %v1144 = vunpack.c.l.b16 %v843
    %v1145 = vunpack.c.h.b16 %v843
    %v1146 = vunpack.c.l.b16 %v844
    %v1147 = vunpack.c.h.b16 %v844
    %v1148 = vunpack.c.l.b16 %v845
    %v1149 = vunpack.c.h.b16 %v845
    %v1150 = vunpack.c.l.b16 %v846
    %v1151 = vunpack.c.h.b16 %v846
    %v1152 = vunpack.c.l.b16 %v847
    %v1153 = vunpack.c.h.b16 %v847
    %v1154 = vunpack.c.l.b16 %v848
    %v1155 = vunpack.c.h.b16 %v848
    %v1156 = vunpack.c.l.b16 %v849
    %v1157 = vunpack.c.h.b16 %v849
    %v1158 = vunpack.c.l.b16 %v850
    %v1159 = vunpack.c.h.b16 %v850
    %v1160 = vunpack.c.l.b16 %v851
    %v1161 = vunpack.c.h.b16 %v851
    %v1162 = vunpack.c.l.b16 %v852
    %v1163 = vunpack.c.h.b16 %v852
    %v1164 = vunpack.c.l.b16 %v853
    %v1165 = vunpack.c.h.b16 %v853
    %v1166 = vunpack.c.l.b16 %v854
    %v1167 = vunpack.c.h.b16 %v854
    %v1168 = vunpack.c.l.b16 %v855
    %v1169 = vunpack.c.h.b16 %v855
    %v1170 = vunpack.c.l.b16 %v856
    %v1171 = vunpack.c.h.b16 %v856
    %v1172 = vunpack.c.l.b16 %v857
    %v1173 = vunpack.c.h.b16 %v857
    %v1174 = vpack.c.b16 %v994, %v982
    %v1175 = vpack.c.b16 %v995, %v983
    %v1176 = vpack.c.b16 %v996, %v984
    %v1177 = vpack.c.b16 %v997, %v985
    %v1178 = vpack.c.b16 %v998, %v986
    %v1179 = vpack.c.b16 %v999, %v987
    %v1180 = vpack.c.b16 %v1000, %v988
    %v1181 = vpack.c.b16 %v1001, %v989
    %v1182 = vpack.c.b16 %v1002, %v990
    %v1183 = vpack.c.b16 %v1003, %v991
    %v1184 = vpack.c.b16 %v1004, %v992
    %v1185 = vpack.c.b16 %v1005, %v993
    %v1186 = vpack.c.b16 %v1018, %v1006
    %v1187 = vpack.c.b16 %v1019, %v1007
    %v1188 = vpack.c.b16 %v1020, %v1008
    %v1189 = vpack.c.b16 %v1021, %v1009
    %v1190 = vpack.c.b16 %v1022, %v1010
    %v1191 = vpack.c.b16 %v1023, %v1011
    %v1192 = vpack.c.b16 %v1024, %v1012
    %v1193 = vpack.c.b16 %v1025, %v1013
    %v1194 = vpack.c.b16 %v1026, %v1014
    %v1195 = vpack.c.b16 %v1027, %v1015
    %v1196 = vpack.c.b16 %v1028, %v1016
    %v1197 = vpack.c.b16 %v1029, %v1017
    %v1198 = vpack.c.b16 %v1042, %v1030
    %v1199 = vpack.c.b16 %v1043, %v1031
    %v1200 = vpack.c.b16 %v1044, %v1032
    %v1201 = vpack.c.b16 %v1045, %v1033
    %v1202 = vpack.c.b16 %v1046, %v1034
    %v1203 = vpack.c.b16 %v1047, %v1035
    %v1204 = vpack.c.b16 %v1048, %v1036
    %v1205 = vpack.c.b16 %v1049, %v1037
    %v1206 = vpack.c.b16 %v1050, %v1038
    %v1207 = vpack.c.b16 %v1051, %v1039
    %v1208 = vpack.c.b16 %v1052, %v1040
    %v1209 = vpack.c.b16 %v1053, %v1041
    %v1210 = vpack.c.b16 %v1066, %v1054
    %v1211 = vpack.c.b16 %v1067, %v1055
    %v1212 = vpack.c.b16 %v1068, %v1056
    %v1213 = vpack.c.b16 %v1069, %v1057
    %v1214 = vpack.c.b16 %v1070, %v1058
    %v1215 = vpack.c.b16 %v1071, %v1059
    %v1216 = vpack.c.b16 %v1072, %v1060
    %v1217 = vpack.c.b16 %v1073, %v1061
    %v1218 = vpack.c.b16 %v1074, %v1062
    %v1219 = vpack.c.b16 %v1075, %v1063
    %v1220 = vpack.c.b16 %v1076, %v1064
    %v1221 = vpack.c.b16 %v1077, %v1065
    %v1222 = vpack.c.b16 %v1090, %v1078
    %v1223 = vpack.c.b16 %v1091, %v1079
    %v1224 = vpack.c.b16 %v1092, %v1080
    %v1225 = vpack.c.b16 %v1093, %v1081
    %v1226 = vpack.c.b16 %v1094, %v1082
    %v1227 = vpack.c.b16 %v1095, %v1083
    %v1228 = vpack.c.b16 %v1096, %v1084
    %v1229 = vpack.c.b16 %v1097, %v1085
    %v1230 = vpack.c.b16 %v1098, %v1086
    %v1231 = vpack.c.b16 %v1099, %v1087
    %v1232 = vpack.c.b16 %v1100, %v1088
    %v1233 = vpack.c.b16 %v1101, %v1089
    %v1234 = vpack.c.b16 %v1114, %v1102
    %v1235 = vpack.c.b16 %v1115, %v1103
    %v1236 = vpack.c.b16 %v1116, %v1104
    %v1237 = vpack.c.b16 %v1117, %v1105
    %v1238 = vpack.c.b16 %v1118, %v1106
    %v1239 = vpack.c.b16 %v1119, %v1107
    %v1240 = vpack.c.b16 %v1120, %v1108
    %v1241 = vpack.c.b16 %v1121, %v1109
    %v1242 = vpack.c.b16 %v1122, %v1110
    %v1243 = vpack.c.b16 %v1123, %v1111
    %v1244 = vpack.c.b16 %v1124, %v1112
    %v1245 = vpack.c.b16 %v1125, %v1113
    %v1246 = vpack.c.b16 %v1138, %v1126
    %v1247 = vpack.c.b16 %v1139, %v1127
    %v1248 = vpack.c.b16 %v1140, %v1128
    %v1249 = vpack.c.b16 %v1141, %v1129
    %v1250 = vpack.c.b16 %v1142, %v1130
    %v1251 = vpack.c.b16 %v1143, %v1131
    %v1252 = vpack.c.b16 %v1144, %v1132
    %v1253 = vpack.c.b16 %v1145, %v1133
    %v1254 = vpack.c.b16 %v1146, %v1134
    %v1255 = vpack.c.b16 %v1147, %v1135
    %v1256 = vpack.c.b16 %v1148, %v1136
    %v1257 = vpack.c.b16 %v1149, %v1137
    %v1258 = vpack.c.b16 %v1162, %v1150
    %v1259 = vpack.c.b16 %v1163, %v1151
    %v1260 = vpack.c.b16 %v1164, %v1152
    %v1261 = vpack.c.b16 %v1165, %v1153
    %v1262 = vpack.c.b16 %v1166, %v1154
    %v1263 = vpack.c.b16 %v1167, %v1155
    %v1264 = vpack.c.b16 %v1168, %v1156
    %v1265 = vpack.c.b16 %v1169, %v1157
    %v1266 = vpack.c.b16 %v1170, %v1158
    %v1267 = vpack.c.b16 %v1171, %v1159
    %v1268 = vpack.c.b16 %v1172, %v1160
    %v1269 = vpack.c.b16 %v1173, %v1161
    %1366 = vmatpush.bf16.msra.mxu0 %v1258
    %1367 = vmatpush.bf16.msra.mxu0 %v1246
    %1368 = vmatpush.bf16.msra.mxu0 %v1234
    %1369 = vmatpush.bf16.msra.mxu0 %v1222
    %1370 = vmatpush.bf16.msra.mxu0 %v1210
    %1371 = vmatpush.bf16.msra.mxu0 %v1198
    %1372 = vmatpush.bf16.msra.mxu0 %v1186
    %1373 = vmatpush.bf16.msra.mxu0 %v1174
    %1374 = vmatmul.bf16.gmra.mxu0 %v761
    %v1375 = vpop.f32.mrf.mxu0
    %v1376 = vadd.f32 %v862, %v1375
    %v1377 = vpop.f32.mrf.mxu0
    %v1378 = vadd.f32 %v862, %v1377
    %1379 = vdwg.mxu0
    %1380 = vmatpush.bf16.msra.mxu0 %v1259
    %1381 = vmatpush.bf16.msra.mxu0 %v1247
    %1382 = vmatpush.bf16.msra.mxu0 %v1235
    %1383 = vmatpush.bf16.msra.mxu0 %v1223
    %1384 = vmatpush.bf16.msra.mxu0 %v1211
    %1385 = vmatpush.bf16.msra.mxu0 %v1199
    %1386 = vmatpush.bf16.msra.mxu0 %v1187
    %1387 = vmatpush.bf16.msra.mxu0 %v1175
    %1388 = vmatmul.bf16.gmra.mxu0 %v761
    %v1389 = vpop.f32.mrf.mxu0
    %v1390 = vadd.f32 %v863, %v1389
    %v1391 = vpop.f32.mrf.mxu0
    %v1392 = vadd.f32 %v863, %v1391
    %1393 = vdwg.mxu0
    %1394 = vmatpush.bf16.msra.mxu0 %v1260
    %1395 = vmatpush.bf16.msra.mxu0 %v1248
    %1396 = vmatpush.bf16.msra.mxu0 %v1236
    %1397 = vmatpush.bf16.msra.mxu0 %v1224
    %1398 = vmatpush.bf16.msra.mxu0 %v1212
    %1399 = vmatpush.bf16.msra.mxu0 %v1200
    %1400 = vmatpush.bf16.msra.mxu0 %v1188
    %1401 = vmatpush.bf16.msra.mxu0 %v1176
    %1402 = vmatmul.bf16.gmra.mxu0 %v761
    %v1403 = vpop.f32.mrf.mxu0
    %v1404 = vadd.f32 %v864, %v1403
    %v1405 = vpop.f32.mrf.mxu0
    %v1406 = vadd.f32 %v864, %v1405
    %1407 = vdwg.mxu0
    %1408 = vmatpush.bf16.msra.mxu0 %v1261
    %1409 = vmatpush.bf16.msra.mxu0 %v1249
    %1410 = vmatpush.bf16.msra.mxu0 %v1237
    %1411 = vmatpush.bf16.msra.mxu0 %v1225
    %1412 = vmatpush.bf16.msra.mxu0 %v1213
    %1413 = vmatpush.bf16.msra.mxu0 %v1201
    %1414 = vmatpush.bf16.msra.mxu0 %v1189
    %1415 = vmatpush.bf16.msra.mxu0 %v1177
    %1416 = vmatmul.bf16.gmra.mxu0 %v761
    %v1417 = vpop.f32.mrf.mxu0
    %v1418 = vadd.f32 %v865, %v1417
    %v1419 = vpop.f32.mrf.mxu0
    %v1420 = vadd.f32 %v865, %v1419
    %1421 = vdwg.mxu0
    %1422 = vmatpush.bf16.msra.mxu0 %v1262
    %1423 = vmatpush.bf16.msra.mxu0 %v1250
    %1424 = vmatpush.bf16.msra.mxu0 %v1238
    %1425 = vmatpush.bf16.msra.mxu0 %v1226
    %1426 = vmatpush.bf16.msra.mxu0 %v1214
    %1427 = vmatpush.bf16.msra.mxu0 %v1202
    %1428 = vmatpush.bf16.msra.mxu0 %v1190
    %1429 = vmatpush.bf16.msra.mxu0 %v1178
    %1430 = vmatmul.bf16.gmra.mxu0 %v761
    %v1431 = vpop.f32.mrf.mxu0
    %v1432 = vpop.f32.mrf.mxu0
    %v1433 = vadd.f32 %v866, %v1432
    %1434 = vdwg.mxu0
    %1435 = vmatpush.bf16.msra.mxu0 %v1263
    %1436 = vmatpush.bf16.msra.mxu0 %v1251
    %1437 = vmatpush.bf16.msra.mxu0 %v1239
    %1438 = vmatpush.bf16.msra.mxu0 %v1227
    %1439 = vmatpush.bf16.msra.mxu0 %v1215
    %1440 = vmatpush.bf16.msra.mxu0 %v1203
    %1441 = vmatpush.bf16.msra.mxu0 %v1191
    %1442 = vmatpush.bf16.msra.mxu0 %v1179
    %1443 = vmatmul.bf16.gmra.mxu0 %v761
    %v1444 = vpop.f32.mrf.mxu0
    %v1445 = vpop.f32.mrf.mxu0
    %v1446 = vadd.f32 %v867, %v1445
    %1447 = vdwg.mxu0
    %1448 = vmatpush.bf16.msra.mxu0 %v1264
    %1449 = vmatpush.bf16.msra.mxu0 %v1252
    %1450 = vmatpush.bf16.msra.mxu0 %v1240
    %1451 = vmatpush.bf16.msra.mxu0 %v1228
    %1452 = vmatpush.bf16.msra.mxu0 %v1216
    %1453 = vmatpush.bf16.msra.mxu0 %v1204
    %1454 = vmatpush.bf16.msra.mxu0 %v1192
    %1455 = vmatpush.bf16.msra.mxu0 %v1180
    %1456 = vmatmul.bf16.gmra.mxu0 %v761
    %v1457 = vpop.f32.mrf.mxu0
    %v1458 = vpop.f32.mrf.mxu0
    %v1459 = vadd.f32 %v868, %v1458
    %1460 = vdwg.mxu0
    %1461 = vmatpush.bf16.msra.mxu0 %v1265
    %1462 = vmatpush.bf16.msra.mxu0 %v1253
    %1463 = vmatpush.bf16.msra.mxu0 %v1241
    %1464 = vmatpush.bf16.msra.mxu0 %v1229
    %1465 = vmatpush.bf16.msra.mxu0 %v1217
    %1466 = vmatpush.bf16.msra.mxu0 %v1205
    %1467 = vmatpush.bf16.msra.mxu0 %v1193
    %1468 = vmatpush.bf16.msra.mxu0 %v1181
    %1469 = vmatmul.bf16.gmra.mxu0 %v761
    %v1470 = vpop.f32.mrf.mxu0
    %v1471 = vpop.f32.mrf.mxu0
    %v1472 = vadd.f32 %v869, %v1471
    %1473 = vdwg.mxu0
    %1474 = vmatpush.bf16.msra.mxu0 %v1266
    %1475 = vmatpush.bf16.msra.mxu0 %v1254
    %1476 = vmatpush.bf16.msra.mxu0 %v1242
    %1477 = vmatpush.bf16.msra.mxu0 %v1230
    %1478 = vmatpush.bf16.msra.mxu0 %v1218
    %1479 = vmatpush.bf16.msra.mxu0 %v1206
    %1480 = vmatpush.bf16.msra.mxu0 %v1194
    %1481 = vmatpush.bf16.msra.mxu0 %v1182
    %1482 = vmatmul.bf16.gmra.mxu0 %v761
    %v1483 = vpop.f32.mrf.mxu0
    %v1484 = vadd.f32 %v870, %v1483
    %v1485 = vpop.f32.mrf.mxu0
    %v1486 = vadd.f32 %v870, %v1485
    %1487 = vdwg.mxu0
    %1488 = vmatpush.bf16.msra.mxu0 %v1267
    %1489 = vmatpush.bf16.msra.mxu0 %v1255
    %1490 = vmatpush.bf16.msra.mxu0 %v1243
    %1491 = vmatpush.bf16.msra.mxu0 %v1231
    %1492 = vmatpush.bf16.msra.mxu0 %v1219
    %1493 = vmatpush.bf16.msra.mxu0 %v1207
    %1494 = vmatpush.bf16.msra.mxu0 %v1195
    %1495 = vmatpush.bf16.msra.mxu0 %v1183
    %1496 = vmatmul.bf16.gmra.mxu0 %v761
    %v1497 = vpop.f32.mrf.mxu0
    %v1498 = vadd.f32 %v871, %v1497
    %v1499 = vpop.f32.mrf.mxu0
    %v1500 = vadd.f32 %v871, %v1499
    %1501 = vdwg.mxu0
    %1502 = vmatpush.bf16.msra.mxu0 %v1268
    %1503 = vmatpush.bf16.msra.mxu0 %v1256
    %1504 = vmatpush.bf16.msra.mxu0 %v1244
    %1505 = vmatpush.bf16.msra.mxu0 %v1232
    %1506 = vmatpush.bf16.msra.mxu0 %v1220
    %1507 = vmatpush.bf16.msra.mxu0 %v1208
    %1508 = vmatpush.bf16.msra.mxu0 %v1196
    %1509 = vmatpush.bf16.msra.mxu0 %v1184
    %1510 = vmatmul.bf16.gmra.mxu0 %v761
    %v1511 = vpop.f32.mrf.mxu0
    %v1512 = vadd.f32 %v872, %v1511
    %v1513 = vpop.f32.mrf.mxu0
    %v1514 = vadd.f32 %v872, %v1513
    %1515 = vdwg.mxu0
    %1516 = vmatpush.bf16.msra.mxu0 %v1269
    %1517 = vmatpush.bf16.msra.mxu0 %v1257
    %1518 = vmatpush.bf16.msra.mxu0 %v1245
    %1519 = vmatpush.bf16.msra.mxu0 %v1233
    %1520 = vmatpush.bf16.msra.mxu0 %v1221
    %1521 = vmatpush.bf16.msra.mxu0 %v1209
    %1522 = vmatpush.bf16.msra.mxu0 %v1197
    %1523 = vmatpush.bf16.msra.mxu0 %v1185
    %1524 = vmatmul.bf16.gmra.mxu0 %v761
    %v1525 = vpop.f32.mrf.mxu0
    %v1526 = vadd.f32 %v873, %v1525
    %v1527 = vpop.f32.mrf.mxu0
    %v1528 = vadd.f32 %v873, %v1527
    %1529 = vdwg.mxu0
    %v1530 = vxor.u32 %v1376, 2147483648
    %v1531 = vxor.u32 %v1390, 2147483648
    %v1532 = vxor.u32 %v1404, 2147483648
    %v1533 = vxor.u32 %v1418, 2147483648
    %v1534 = vmul.f32 %v1530, 1.442695
    %v1535 = vpow.pop %v1534
    %v1536 = vmul.f32 %v1531, 1.442695
    %v1537 = vpow.pop %v1536
    %v1538 = vmul.f32 %v1532, 1.442695
    %v1539 = vpow.pop %v1538
    %v1540 = vmul.f32 %v1533, 1.442695
    %v1541 = vpow.pop %v1540
    %v1542 = vadd.f32 %v1535, 1.0
    %v1543 = vadd.f32 %v1537, 1.0
    %v1544 = vadd.f32 %v1539, 1.0
    %v1545 = vadd.f32 %v1541, 1.0
    %v1546 = vrcp.pop %v1542
    %v1547 = vmul.f32 %v1542, %v1546
    %v1548 = vsub.f32 1.0, %v1547
    %v1549 = vmul.f32 %v1546, %v1548
    %v1550 = vadd.f32 %v1546, %v1549
    %vm1551 = vweird.f32 %v1542
    %vm1552 = vweird.f32 %v1546
    %vm1553 = vmor %vm1551, %vm1552
    %v1554 = vsel %vm1553, %v1546, %v1550
    %v1555 = vand.u32 2147483647, %v1542
    %vm1556 = vcmp.eq.f32.partialorder %v1555, 8.507059e+37
    %v1557 = vand.u32 %v1542, 2147483648
    %v1558 = vor.u32 1.1754944e-38, %v1557
    %v1559 = vsel %vm1556, %v1558, %v1554
    %v1560 = vmul.f32 1.0, %v1559
    %v1561 = vrcp.pop %v1543
    %v1562 = vmul.f32 %v1543, %v1561
    %v1563 = vsub.f32 1.0, %v1562
    %v1564 = vmul.f32 %v1561, %v1563
    %v1565 = vadd.f32 %v1561, %v1564
    %vm1566 = vweird.f32 %v1543
    %vm1567 = vweird.f32 %v1561
    %vm1568 = vmor %vm1566, %vm1567
    %v1569 = vsel %vm1568, %v1561, %v1565
    %v1570 = vand.u32 2147483647, %v1543
    %vm1571 = vcmp.eq.f32.partialorder %v1570, 8.507059e+37
    %v1572 = vand.u32 %v1543, 2147483648
    %v1573 = vor.u32 1.1754944e-38, %v1572
    %v1574 = vsel %vm1571, %v1573, %v1569
    %v1575 = vmul.f32 1.0, %v1574
    %v1576 = vrcp.pop %v1544
    %v1577 = vmul.f32 %v1544, %v1576
    %v1578 = vsub.f32 1.0, %v1577
    %v1579 = vmul.f32 %v1576, %v1578
    %v1580 = vadd.f32 %v1576, %v1579
    %vm1581 = vweird.f32 %v1544
    %vm1582 = vweird.f32 %v1576
    %vm1583 = vmor %vm1581, %vm1582
    %v1584 = vsel %vm1583, %v1576, %v1580
    %v1585 = vand.u32 2147483647, %v1544
    %vm1586 = vcmp.eq.f32.partialorder %v1585, 8.507059e+37
    %v1587 = vand.u32 %v1544, 2147483648
    %v1588 = vor.u32 1.1754944e-38, %v1587
    %v1589 = vsel %vm1586, %v1588, %v1584
    %v1590 = vmul.f32 1.0, %v1589
    %v1591 = vrcp.pop %v1545
    %v1592 = vmul.f32 %v1545, %v1591
    %v1593 = vsub.f32 1.0, %v1592
    %v1594 = vmul.f32 %v1591, %v1593
    %v1595 = vadd.f32 %v1591, %v1594
    %vm1596 = vweird.f32 %v1545
    %vm1597 = vweird.f32 %v1591
    %vm1598 = vmor %vm1596, %vm1597
    %v1599 = vsel %vm1598, %v1591, %v1595
    %v1600 = vand.u32 2147483647, %v1545
    %vm1601 = vcmp.eq.f32.partialorder %v1600, 8.507059e+37
    %v1602 = vand.u32 %v1545, 2147483648
    %v1603 = vor.u32 1.1754944e-38, %v1602
    %v1604 = vsel %vm1601, %v1603, %v1599
    %v1605 = vmul.f32 1.0, %v1604
    %v1606 = vtanh.pop %v1484
    %v1607 = vtanh.pop %v1498
    %v1608 = vtanh.pop %v1512
    %v1609 = vtanh.pop %v1526
    %v1610 = vmul.f32 %v1560, %v1606
    %v1611 = vmul.f32 %v1575, %v1607
    %v1612 = vmul.f32 %v1590, %v1608
    %v1613 = vmul.f32 %v1605, %v1609
    %s1614 = smul.u32 4, 64
    %s1615 = smul.u32 %s1614, 8
    %s1616 = sshll.u32 %s1615, 4
    %1617 = dma.done [#allocation5], %s1616
    %s1618 = smul.u32 %s1614, 4
    %s1619 = sshll.u32 %s1618, 4
    %1620 = dma.done %s55, %s1619
    %v1621 = vpack.c.bf16 %v1610, %v1610
    %v1622 = vpack.c.bf16 %v1611, %v1611
    %v1623 = vpack.c.bf16 %v1612, %v1612
    %v1624 = vpack.c.bf16 %v1613, %v1613
    %v1625 = vld [vmem:[#allocation2] sm:$0xff]
    %v1626 = vld [vmem:[#allocation2 + $0x8] sm:$0xff]
    %v1627 = vld [vmem:[#allocation2 + $0x10] sm:$0xff]
    %v1628 = vld [vmem:[#allocation2 + $0x18] sm:$0xff]
    %v1629 = vld [vmem:[#allocation2 + $0x20] sm:$0xff]
    %v1630 = vld [vmem:[#allocation2 + $0x28] sm:$0xff]
    %v1631 = vld [vmem:[#allocation2 + $0x30] sm:$0xff]
    %v1632 = vld [vmem:[#allocation2 + $0x38] sm:$0xff]
    %v1633 = vld [vmem:[#allocation2 + $0x40] sm:$0xff]
    %v1634 = vld [vmem:[#allocation2 + $0x48] sm:$0xff]
    %v1635 = vld [vmem:[#allocation2 + $0x50] sm:$0xff]
    %v1636 = vld [vmem:[#allocation2 + $0x58] sm:$0xff]
    %v1637 = vld [vmem:[#allocation2 + $0x60] sm:$0xff]
    %v1638 = vld [vmem:[#allocation2 + $0x68] sm:$0xff]
    %v1639 = vld [vmem:[#allocation2 + $0x70] sm:$0xff]
    %v1640 = vld [vmem:[#allocation2 + $0x78] sm:$0xff]
    %v1641 = vld [vmem:[#allocation2 + $0x80] sm:$0xff]
    %v1642 = vld [vmem:[#allocation2 + $0x88] sm:$0xff]
    %v1643 = vld [vmem:[#allocation2 + $0x90] sm:$0xff]
    %v1644 = vld [vmem:[#allocation2 + $0x98] sm:$0xff]
    %v1645 = vld [vmem:[#allocation2 + $0xa0] sm:$0xff]
    %v1646 = vld [vmem:[#allocation2 + $0xa8] sm:$0xff]
    %v1647 = vld [vmem:[#allocation2 + $0xb0] sm:$0xff]
    %v1648 = vld [vmem:[#allocation2 + $0xb8] sm:$0xff]
    %v1649 = vld [vmem:[#allocation2 + $0xc0] sm:$0xff]
    %v1650 = vld [vmem:[#allocation2 + $0xc8] sm:$0xff]
    %v1651 = vld [vmem:[#allocation2 + $0xd0] sm:$0xff]
    %v1652 = vld [vmem:[#allocation2 + $0xd8] sm:$0xff]
    %v1653 = vld [vmem:[#allocation2 + $0xe0] sm:$0xff]
    %v1654 = vld [vmem:[#allocation2 + $0xe8] sm:$0xff]
    %v1655 = vld [vmem:[#allocation2 + $0xf0] sm:$0xff]
    %v1656 = vld [vmem:[#allocation2 + $0xf8] sm:$0xff]
    %v1657 = vld [vmem:[#allocation2 + $0x100] sm:$0xff]
    %v1658 = vld [vmem:[#allocation2 + $0x108] sm:$0xff]
    %v1659 = vld [vmem:[#allocation2 + $0x110] sm:$0xff]
    %v1660 = vld [vmem:[#allocation2 + $0x118] sm:$0xff]
    %v1661 = vld [vmem:[#allocation2 + $0x120] sm:$0xff]
    %v1662 = vld [vmem:[#allocation2 + $0x128] sm:$0xff]
    %v1663 = vld [vmem:[#allocation2 + $0x130] sm:$0xff]
    %v1664 = vld [vmem:[#allocation2 + $0x138] sm:$0xff]
    %v1665 = vld [vmem:[#allocation2 + $0x140] sm:$0xff]
    %v1666 = vld [vmem:[#allocation2 + $0x148] sm:$0xff]
    %v1667 = vld [vmem:[#allocation2 + $0x150] sm:$0xff]
    %v1668 = vld [vmem:[#allocation2 + $0x158] sm:$0xff]
    %v1669 = vld [vmem:[#allocation2 + $0x160] sm:$0xff]
    %v1670 = vld [vmem:[#allocation2 + $0x168] sm:$0xff]
    %v1671 = vld [vmem:[#allocation2 + $0x170] sm:$0xff]
    %v1672 = vld [vmem:[#allocation2 + $0x178] sm:$0xff]
    %v1673 = vld [vmem:[#allocation2 + $0x180] sm:$0xff]
    %v1674 = vld [vmem:[#allocation2 + $0x188] sm:$0xff]
    %v1675 = vld [vmem:[#allocation2 + $0x190] sm:$0xff]
    %v1676 = vld [vmem:[#allocation2 + $0x198] sm:$0xff]
    %v1677 = vld [vmem:[#allocation2 + $0x1a0] sm:$0xff]
    %v1678 = vld [vmem:[#allocation2 + $0x1a8] sm:$0xff]
    %v1679 = vld [vmem:[#allocation2 + $0x1b0] sm:$0xff]
    %v1680 = vld [vmem:[#allocation2 + $0x1b8] sm:$0xff]
    %v1681 = vld [vmem:[#allocation2 + $0x1c0] sm:$0xff]
    %v1682 = vld [vmem:[#allocation2 + $0x1c8] sm:$0xff]
    %v1683 = vld [vmem:[#allocation2 + $0x1d0] sm:$0xff]
    %v1684 = vld [vmem:[#allocation2 + $0x1d8] sm:$0xff]
    %v1685 = vld [vmem:[#allocation2 + $0x1e0] sm:$0xff]
    %v1686 = vld [vmem:[#allocation2 + $0x1e8] sm:$0xff]
    %v1687 = vld [vmem:[#allocation2 + $0x1f0] sm:$0xff]
    %v1688 = vld [vmem:[#allocation2 + $0x1f8] sm:$0xff]
    %v1689 = vld [vmem:[#allocation2 + $0x200] sm:$0xff]
    %v1690 = vld [vmem:[#allocation2 + $0x208] sm:$0xff]
    %v1691 = vld [vmem:[#allocation2 + $0x210] sm:$0xff]
    %v1692 = vld [vmem:[#allocation2 + $0x218] sm:$0xff]
    %v1693 = vld [vmem:[#allocation2 + $0x220] sm:$0xff]
    %v1694 = vld [vmem:[#allocation2 + $0x228] sm:$0xff]
    %v1695 = vld [vmem:[#allocation2 + $0x230] sm:$0xff]
    %v1696 = vld [vmem:[#allocation2 + $0x238] sm:$0xff]
    %v1697 = vld [vmem:[#allocation2 + $0x240] sm:$0xff]
    %v1698 = vld [vmem:[#allocation2 + $0x248] sm:$0xff]
    %v1699 = vld [vmem:[#allocation2 + $0x250] sm:$0xff]
    %v1700 = vld [vmem:[#allocation2 + $0x258] sm:$0xff]
    %v1701 = vld [vmem:[#allocation2 + $0x260] sm:$0xff]
    %v1702 = vld [vmem:[#allocation2 + $0x268] sm:$0xff]
    %v1703 = vld [vmem:[#allocation2 + $0x270] sm:$0xff]
    %v1704 = vld [vmem:[#allocation2 + $0x278] sm:$0xff]
    %v1705 = vld [vmem:[#allocation2 + $0x280] sm:$0xff]
    %v1706 = vld [vmem:[#allocation2 + $0x288] sm:$0xff]
    %v1707 = vld [vmem:[#allocation2 + $0x290] sm:$0xff]
    %v1708 = vld [vmem:[#allocation2 + $0x298] sm:$0xff]
    %v1709 = vld [vmem:[#allocation2 + $0x2a0] sm:$0xff]
    %v1710 = vld [vmem:[#allocation2 + $0x2a8] sm:$0xff]
    %v1711 = vld [vmem:[#allocation2 + $0x2b0] sm:$0xff]
    %v1712 = vld [vmem:[#allocation2 + $0x2b8] sm:$0xff]
    %v1713 = vld [vmem:[#allocation2 + $0x2c0] sm:$0xff]
    %v1714 = vld [vmem:[#allocation2 + $0x2c8] sm:$0xff]
    %v1715 = vld [vmem:[#allocation2 + $0x2d0] sm:$0xff]
    %v1716 = vld [vmem:[#allocation2 + $0x2d8] sm:$0xff]
    %v1717 = vld [vmem:[#allocation2 + $0x2e0] sm:$0xff]
    %v1718 = vld [vmem:[#allocation2 + $0x2e8] sm:$0xff]
    %v1719 = vld [vmem:[#allocation2 + $0x2f0] sm:$0xff]
    %v1720 = vld [vmem:[#allocation2 + $0x2f8] sm:$0xff]
    %v1721 = vld [vmem:[#allocation2 + $0x300] sm:$0xff]
    %v1722 = vld [vmem:[#allocation2 + $0x308] sm:$0xff]
    %v1723 = vld [vmem:[#allocation2 + $0x310] sm:$0xff]
    %v1724 = vld [vmem:[#allocation2 + $0x318] sm:$0xff]
    %v1725 = vld [vmem:[#allocation2 + $0x320] sm:$0xff]
    %v1726 = vld [vmem:[#allocation2 + $0x328] sm:$0xff]
    %v1727 = vld [vmem:[#allocation2 + $0x330] sm:$0xff]
    %v1728 = vld [vmem:[#allocation2 + $0x338] sm:$0xff]
    %v1729 = vld [vmem:[#allocation2 + $0x340] sm:$0xff]
    %v1730 = vld [vmem:[#allocation2 + $0x348] sm:$0xff]
    %v1731 = vld [vmem:[#allocation2 + $0x350] sm:$0xff]
    %v1732 = vld [vmem:[#allocation2 + $0x358] sm:$0xff]
    %v1733 = vld [vmem:[#allocation2 + $0x360] sm:$0xff]
    %v1734 = vld [vmem:[#allocation2 + $0x368] sm:$0xff]
    %v1735 = vld [vmem:[#allocation2 + $0x370] sm:$0xff]
    %v1736 = vld [vmem:[#allocation2 + $0x378] sm:$0xff]
    %v1737 = vld [vmem:[#allocation2 + $0x380] sm:$0xff]
    %v1738 = vld [vmem:[#allocation2 + $0x388] sm:$0xff]
    %v1739 = vld [vmem:[#allocation2 + $0x390] sm:$0xff]
    %v1740 = vld [vmem:[#allocation2 + $0x398] sm:$0xff]
    %v1741 = vld [vmem:[#allocation2 + $0x3a0] sm:$0xff]
    %v1742 = vld [vmem:[#allocation2 + $0x3a8] sm:$0xff]
    %v1743 = vld [vmem:[#allocation2 + $0x3b0] sm:$0xff]
    %v1744 = vld [vmem:[#allocation2 + $0x3b8] sm:$0xff]
    %v1745 = vld [vmem:[#allocation2 + $0x3c0] sm:$0xff]
    %v1746 = vld [vmem:[#allocation2 + $0x3c8] sm:$0xff]
    %v1747 = vld [vmem:[#allocation2 + $0x3d0] sm:$0xff]
    %v1748 = vld [vmem:[#allocation2 + $0x3d8] sm:$0xff]
    %v1749 = vld [vmem:[#allocation2 + $0x3e0] sm:$0xff]
    %v1750 = vld [vmem:[#allocation2 + $0x3e8] sm:$0xff]
    %v1751 = vld [vmem:[#allocation2 + $0x3f0] sm:$0xff]
    %v1752 = vld [vmem:[#allocation2 + $0x3f8] sm:$0xff]
    %v1753 = vld [vmem:[#allocation2 + $0x400] sm:$0xff]
    %v1754 = vld [vmem:[#allocation2 + $0x408] sm:$0xff]
    %v1755 = vld [vmem:[#allocation2 + $0x410] sm:$0xff]
    %v1756 = vld [vmem:[#allocation2 + $0x418] sm:$0xff]
    %v1757 = vld [vmem:[#allocation2 + $0x420] sm:$0xff]
    %v1758 = vld [vmem:[#allocation2 + $0x428] sm:$0xff]
    %v1759 = vld [vmem:[#allocation2 + $0x430] sm:$0xff]
    %v1760 = vld [vmem:[#allocation2 + $0x438] sm:$0xff]
    %v1761 = vld [vmem:[#allocation2 + $0x440] sm:$0xff]
    %v1762 = vld [vmem:[#allocation2 + $0x448] sm:$0xff]
    %v1763 = vld [vmem:[#allocation2 + $0x450] sm:$0xff]
    %v1764 = vld [vmem:[#allocation2 + $0x458] sm:$0xff]
    %v1765 = vld [vmem:[#allocation2 + $0x460] sm:$0xff]
    %v1766 = vld [vmem:[#allocation2 + $0x468] sm:$0xff]
    %v1767 = vld [vmem:[#allocation2 + $0x470] sm:$0xff]
    %v1768 = vld [vmem:[#allocation2 + $0x478] sm:$0xff]
    %v1769 = vld [vmem:[#allocation2 + $0x480] sm:$0xff]
    %v1770 = vld [vmem:[#allocation2 + $0x488] sm:$0xff]
    %v1771 = vld [vmem:[#allocation2 + $0x490] sm:$0xff]
    %v1772 = vld [vmem:[#allocation2 + $0x498] sm:$0xff]
    %v1773 = vld [vmem:[#allocation2 + $0x4a0] sm:$0xff]
    %v1774 = vld [vmem:[#allocation2 + $0x4a8] sm:$0xff]
    %v1775 = vld [vmem:[#allocation2 + $0x4b0] sm:$0xff]
    %v1776 = vld [vmem:[#allocation2 + $0x4b8] sm:$0xff]
    %v1777 = vld [vmem:[#allocation2 + $0x4c0] sm:$0xff]
    %v1778 = vld [vmem:[#allocation2 + $0x4c8] sm:$0xff]
    %v1779 = vld [vmem:[#allocation2 + $0x4d0] sm:$0xff]
    %v1780 = vld [vmem:[#allocation2 + $0x4d8] sm:$0xff]
    %v1781 = vld [vmem:[#allocation2 + $0x4e0] sm:$0xff]
    %v1782 = vld [vmem:[#allocation2 + $0x4e8] sm:$0xff]
    %v1783 = vld [vmem:[#allocation2 + $0x4f0] sm:$0xff]
    %v1784 = vld [vmem:[#allocation2 + $0x4f8] sm:$0xff]
    %v1785 = vld [vmem:[#allocation2 + $0x500] sm:$0xff]
    %v1786 = vld [vmem:[#allocation2 + $0x508] sm:$0xff]
    %v1787 = vld [vmem:[#allocation2 + $0x510] sm:$0xff]
    %v1788 = vld [vmem:[#allocation2 + $0x518] sm:$0xff]
    %v1789 = vld [vmem:[#allocation2 + $0x520] sm:$0xff]
    %v1790 = vld [vmem:[#allocation2 + $0x528] sm:$0xff]
    %v1791 = vld [vmem:[#allocation2 + $0x530] sm:$0xff]
    %v1792 = vld [vmem:[#allocation2 + $0x538] sm:$0xff]
    %v1793 = vld [vmem:[#allocation2 + $0x540] sm:$0xff]
    %v1794 = vld [vmem:[#allocation2 + $0x548] sm:$0xff]
    %v1795 = vld [vmem:[#allocation2 + $0x550] sm:$0xff]
    %v1796 = vld [vmem:[#allocation2 + $0x558] sm:$0xff]
    %v1797 = vld [vmem:[#allocation2 + $0x560] sm:$0xff]
    %v1798 = vld [vmem:[#allocation2 + $0x568] sm:$0xff]
    %v1799 = vld [vmem:[#allocation2 + $0x570] sm:$0xff]
    %v1800 = vld [vmem:[#allocation2 + $0x578] sm:$0xff]
    %v1801 = vld [vmem:[#allocation2 + $0x580] sm:$0xff]
    %v1802 = vld [vmem:[#allocation2 + $0x588] sm:$0xff]
    %v1803 = vld [vmem:[#allocation2 + $0x590] sm:$0xff]
    %v1804 = vld [vmem:[#allocation2 + $0x598] sm:$0xff]
    %v1805 = vld [vmem:[#allocation2 + $0x5a0] sm:$0xff]
    %v1806 = vld [vmem:[#allocation2 + $0x5a8] sm:$0xff]
    %v1807 = vld [vmem:[#allocation2 + $0x5b0] sm:$0xff]
    %v1808 = vld [vmem:[#allocation2 + $0x5b8] sm:$0xff]
    %v1809 = vld [vmem:[#allocation2 + $0x5c0] sm:$0xff]
    %v1810 = vld [vmem:[#allocation2 + $0x5c8] sm:$0xff]
    %v1811 = vld [vmem:[#allocation2 + $0x5d0] sm:$0xff]
    %v1812 = vld [vmem:[#allocation2 + $0x5d8] sm:$0xff]
    %v1813 = vld [vmem:[#allocation2 + $0x5e0] sm:$0xff]
    %v1814 = vld [vmem:[#allocation2 + $0x5e8] sm:$0xff]
    %v1815 = vld [vmem:[#allocation2 + $0x5f0] sm:$0xff]
    %v1816 = vld [vmem:[#allocation2 + $0x5f8] sm:$0xff]
    %v1817 = vld [vmem:[#allocation2 + $0x600] sm:$0xff]
    %v1818 = vld [vmem:[#allocation2 + $0x608] sm:$0xff]
    %v1819 = vld [vmem:[#allocation2 + $0x610] sm:$0xff]
    %v1820 = vld [vmem:[#allocation2 + $0x618] sm:$0xff]
    %v1821 = vld [vmem:[#allocation2 + $0x620] sm:$0xff]
    %v1822 = vld [vmem:[#allocation2 + $0x628] sm:$0xff]
    %v1823 = vld [vmem:[#allocation2 + $0x630] sm:$0xff]
    %v1824 = vld [vmem:[#allocation2 + $0x638] sm:$0xff]
    %v1825 = vld [vmem:[#allocation2 + $0x640] sm:$0xff]
    %v1826 = vld [vmem:[#allocation2 + $0x648] sm:$0xff]
    %v1827 = vld [vmem:[#allocation2 + $0x650] sm:$0xff]
    %v1828 = vld [vmem:[#allocation2 + $0x658] sm:$0xff]
    %v1829 = vld [vmem:[#allocation2 + $0x660] sm:$0xff]
    %v1830 = vld [vmem:[#allocation2 + $0x668] sm:$0xff]
    %v1831 = vld [vmem:[#allocation2 + $0x670] sm:$0xff]
    %v1832 = vld [vmem:[#allocation2 + $0x678] sm:$0xff]
    %v1833 = vld [vmem:[#allocation2 + $0x680] sm:$0xff]
    %v1834 = vld [vmem:[#allocation2 + $0x688] sm:$0xff]
    %v1835 = vld [vmem:[#allocation2 + $0x690] sm:$0xff]
    %v1836 = vld [vmem:[#allocation2 + $0x698] sm:$0xff]
    %v1837 = vld [vmem:[#allocation2 + $0x6a0] sm:$0xff]
    %v1838 = vld [vmem:[#allocation2 + $0x6a8] sm:$0xff]
    %v1839 = vld [vmem:[#allocation2 + $0x6b0] sm:$0xff]
    %v1840 = vld [vmem:[#allocation2 + $0x6b8] sm:$0xff]
    %v1841 = vld [vmem:[#allocation2 + $0x6c0] sm:$0xff]
    %v1842 = vld [vmem:[#allocation2 + $0x6c8] sm:$0xff]
    %v1843 = vld [vmem:[#allocation2 + $0x6d0] sm:$0xff]
    %v1844 = vld [vmem:[#allocation2 + $0x6d8] sm:$0xff]
    %v1845 = vld [vmem:[#allocation2 + $0x6e0] sm:$0xff]
    %v1846 = vld [vmem:[#allocation2 + $0x6e8] sm:$0xff]
    %v1847 = vld [vmem:[#allocation2 + $0x6f0] sm:$0xff]
    %v1848 = vld [vmem:[#allocation2 + $0x6f8] sm:$0xff]
    %v1849 = vld [vmem:[#allocation2 + $0x700] sm:$0xff]
    %v1850 = vld [vmem:[#allocation2 + $0x708] sm:$0xff]
    %v1851 = vld [vmem:[#allocation2 + $0x710] sm:$0xff]
    %v1852 = vld [vmem:[#allocation2 + $0x718] sm:$0xff]
    %v1853 = vld [vmem:[#allocation2 + $0x720] sm:$0xff]
    %v1854 = vld [vmem:[#allocation2 + $0x728] sm:$0xff]
    %v1855 = vld [vmem:[#allocation2 + $0x730] sm:$0xff]
    %v1856 = vld [vmem:[#allocation2 + $0x738] sm:$0xff]
    %v1857 = vld [vmem:[#allocation2 + $0x740] sm:$0xff]
    %v1858 = vld [vmem:[#allocation2 + $0x748] sm:$0xff]
    %v1859 = vld [vmem:[#allocation2 + $0x750] sm:$0xff]
    %v1860 = vld [vmem:[#allocation2 + $0x758] sm:$0xff]
    %v1861 = vld [vmem:[#allocation2 + $0x760] sm:$0xff]
    %v1862 = vld [vmem:[#allocation2 + $0x768] sm:$0xff]
    %v1863 = vld [vmem:[#allocation2 + $0x770] sm:$0xff]
    %v1864 = vld [vmem:[#allocation2 + $0x778] sm:$0xff]
    %v1865 = vld [vmem:[#allocation2 + $0x780] sm:$0xff]
    %v1866 = vld [vmem:[#allocation2 + $0x788] sm:$0xff]
    %v1867 = vld [vmem:[#allocation2 + $0x790] sm:$0xff]
    %v1868 = vld [vmem:[#allocation2 + $0x798] sm:$0xff]
    %v1869 = vld [vmem:[#allocation2 + $0x7a0] sm:$0xff]
    %v1870 = vld [vmem:[#allocation2 + $0x7a8] sm:$0xff]
    %v1871 = vld [vmem:[#allocation2 + $0x7b0] sm:$0xff]
    %v1872 = vld [vmem:[#allocation2 + $0x7b8] sm:$0xff]
    %v1873 = vld [vmem:[#allocation2 + $0x7c0] sm:$0xff]
    %v1874 = vld [vmem:[#allocation2 + $0x7c8] sm:$0xff]
    %v1875 = vld [vmem:[#allocation2 + $0x7d0] sm:$0xff]
    %v1876 = vld [vmem:[#allocation2 + $0x7d8] sm:$0xff]
    %v1877 = vld [vmem:[#allocation2 + $0x7e0] sm:$0xff]
    %v1878 = vld [vmem:[#allocation2 + $0x7e8] sm:$0xff]
    %v1879 = vld [vmem:[#allocation2 + $0x7f0] sm:$0xff]
    %v1880 = vld [vmem:[#allocation2 + $0x7f8] sm:$0xff]
    %v2137 = vunpack.c.l.b16 %v1625
    %v2138 = vunpack.c.h.b16 %v1625
    %v2139 = vunpack.c.l.b16 %v1626
    %v2140 = vunpack.c.h.b16 %v1626
    %v2141 = vunpack.c.l.b16 %v1627
    %v2142 = vunpack.c.h.b16 %v1627
    %v2143 = vunpack.c.l.b16 %v1628
    %v2144 = vunpack.c.h.b16 %v1628
    %v2145 = vunpack.c.l.b16 %v1629
    %v2146 = vunpack.c.h.b16 %v1629
    %v2147 = vunpack.c.l.b16 %v1630
    %v2148 = vunpack.c.h.b16 %v1630
    %v2149 = vunpack.c.l.b16 %v1631
    %v2150 = vunpack.c.h.b16 %v1631
    %v2151 = vunpack.c.l.b16 %v1632
    %v2152 = vunpack.c.h.b16 %v1632
    %v2153 = vunpack.c.l.b16 %v1633
    %v2154 = vunpack.c.h.b16 %v1633
    %v2155 = vunpack.c.l.b16 %v1634
    %v2156 = vunpack.c.h.b16 %v1634
    %v2157 = vunpack.c.l.b16 %v1635
    %v2158 = vunpack.c.h.b16 %v1635
    %v2159 = vunpack.c.l.b16 %v1636
    %v2160 = vunpack.c.h.b16 %v1636
    %v2161 = vunpack.c.l.b16 %v1637
    %v2162 = vunpack.c.h.b16 %v1637
    %v2163 = vunpack.c.l.b16 %v1638
    %v2164 = vunpack.c.h.b16 %v1638
    %v2165 = vunpack.c.l.b16 %v1639
    %v2166 = vunpack.c.h.b16 %v1639
    %v2167 = vunpack.c.l.b16 %v1640
    %v2168 = vunpack.c.h.b16 %v1640
    %v2169 = vunpack.c.l.b16 %v1641
    %v2170 = vunpack.c.h.b16 %v1641
    %v2171 = vunpack.c.l.b16 %v1642
    %v2172 = vunpack.c.h.b16 %v1642
    %v2173 = vunpack.c.l.b16 %v1643
    %v2174 = vunpack.c.h.b16 %v1643
    %v2175 = vunpack.c.l.b16 %v1644
    %v2176 = vunpack.c.h.b16 %v1644
    %v2177 = vunpack.c.l.b16 %v1645
    %v2178 = vunpack.c.h.b16 %v1645
    %v2179 = vunpack.c.l.b16 %v1646
    %v2180 = vunpack.c.h.b16 %v1646
    %v2181 = vunpack.c.l.b16 %v1647
    %v2182 = vunpack.c.h.b16 %v1647
    %v2183 = vunpack.c.l.b16 %v1648
    %v2184 = vunpack.c.h.b16 %v1648
    %v2185 = vunpack.c.l.b16 %v1649
    %v2186 = vunpack.c.h.b16 %v1649
    %v2187 = vunpack.c.l.b16 %v1650
    %v2188 = vunpack.c.h.b16 %v1650
    %v2189 = vunpack.c.l.b16 %v1651
    %v2190 = vunpack.c.h.b16 %v1651
    %v2191 = vunpack.c.l.b16 %v1652
    %v2192 = vunpack.c.h.b16 %v1652
    %v2193 = vunpack.c.l.b16 %v1653
    %v2194 = vunpack.c.h.b16 %v1653
    %v2195 = vunpack.c.l.b16 %v1654
    %v2196 = vunpack.c.h.b16 %v1654
    %v2197 = vunpack.c.l.b16 %v1655
    %v2198 = vunpack.c.h.b16 %v1655
    %v2199 = vunpack.c.l.b16 %v1656
    %v2200 = vunpack.c.h.b16 %v1656
    %v2201 = vunpack.c.l.b16 %v1657
    %v2202 = vunpack.c.h.b16 %v1657
    %v2203 = vunpack.c.l.b16 %v1658
    %v2204 = vunpack.c.h.b16 %v1658
    %v2205 = vunpack.c.l.b16 %v1659
    %v2206 = vunpack.c.h.b16 %v1659
    %v2207 = vunpack.c.l.b16 %v1660
    %v2208 = vunpack.c.h.b16 %v1660
    %v2209 = vunpack.c.l.b16 %v1661
    %v2210 = vunpack.c.h.b16 %v1661
    %v2211 = vunpack.c.l.b16 %v1662
    %v2212 = vunpack.c.h.b16 %v1662
    %v2213 = vunpack.c.l.b16 %v1663
    %v2214 = vunpack.c.h.b16 %v1663
    %v2215 = vunpack.c.l.b16 %v1664
    %v2216 = vunpack.c.h.b16 %v1664
    %v2217 = vunpack.c.l.b16 %v1665
    %v2218 = vunpack.c.h.b16 %v1665
    %v2219 = vunpack.c.l.b16 %v1666
    %v2220 = vunpack.c.h.b16 %v1666
    %v2221 = vunpack.c.l.b16 %v1667
    %v2222 = vunpack.c.h.b16 %v1667
    %v2223 = vunpack.c.l.b16 %v1668
    %v2224 = vunpack.c.h.b16 %v1668
    %v2225 = vunpack.c.l.b16 %v1669
    %v2226 = vunpack.c.h.b16 %v1669
    %v2227 = vunpack.c.l.b16 %v1670
    %v2228 = vunpack.c.h.b16 %v1670
    %v2229 = vunpack.c.l.b16 %v1671
    %v2230 = vunpack.c.h.b16 %v1671
    %v2231 = vunpack.c.l.b16 %v1672
    %v2232 = vunpack.c.h.b16 %v1672
    %v2233 = vunpack.c.l.b16 %v1673
    %v2234 = vunpack.c.h.b16 %v1673
    %v2235 = vunpack.c.l.b16 %v1674
    %v2236 = vunpack.c.h.b16 %v1674
    %v2237 = vunpack.c.l.b16 %v1675
    %v2238 = vunpack.c.h.b16 %v1675
    %v2239 = vunpack.c.l.b16 %v1676
    %v2240 = vunpack.c.h.b16 %v1676
    %v2241 = vunpack.c.l.b16 %v1677
    %v2242 = vunpack.c.h.b16 %v1677
    %v2243 = vunpack.c.l.b16 %v1678
    %v2244 = vunpack.c.h.b16 %v1678
    %v2245 = vunpack.c.l.b16 %v1679
    %v2246 = vunpack.c.h.b16 %v1679
    %v2247 = vunpack.c.l.b16 %v1680
    %v2248 = vunpack.c.h.b16 %v1680
    %v2249 = vunpack.c.l.b16 %v1681
    %v2250 = vunpack.c.h.b16 %v1681
    %v2251 = vunpack.c.l.b16 %v1682
    %v2252 = vunpack.c.h.b16 %v1682
    %v2253 = vunpack.c.l.b16 %v1683
    %v2254 = vunpack.c.h.b16 %v1683
    %v2255 = vunpack.c.l.b16 %v1684
    %v2256 = vunpack.c.h.b16 %v1684
    %v2257 = vunpack.c.l.b16 %v1685
    %v2258 = vunpack.c.h.b16 %v1685
    %v2259 = vunpack.c.l.b16 %v1686
    %v2260 = vunpack.c.h.b16 %v1686
    %v2261 = vunpack.c.l.b16 %v1687
    %v2262 = vunpack.c.h.b16 %v1687
    %v2263 = vunpack.c.l.b16 %v1688
    %v2264 = vunpack.c.h.b16 %v1688
    %v2265 = vunpack.c.l.b16 %v1689
    %v2266 = vunpack.c.h.b16 %v1689
    %v2267 = vunpack.c.l.b16 %v1690
    %v2268 = vunpack.c.h.b16 %v1690
    %v2269 = vunpack.c.l.b16 %v1691
    %v2270 = vunpack.c.h.b16 %v1691
    %v2271 = vunpack.c.l.b16 %v1692
    %v2272 = vunpack.c.h.b16 %v1692
    %v2273 = vunpack.c.l.b16 %v1693
    %v2274 = vunpack.c.h.b16 %v1693
    %v2275 = vunpack.c.l.b16 %v1694
    %v2276 = vunpack.c.h.b16 %v1694
    %v2277 = vunpack.c.l.b16 %v1695
    %v2278 = vunpack.c.h.b16 %v1695
    %v2279 = vunpack.c.l.b16 %v1696
    %v2280 = vunpack.c.h.b16 %v1696
    %v2281 = vunpack.c.l.b16 %v1697
    %v2282 = vunpack.c.h.b16 %v1697
    %v2283 = vunpack.c.l.b16 %v1698
    %v2284 = vunpack.c.h.b16 %v1698
    %v2285 = vunpack.c.l.b16 %v1699
    %v2286 = vunpack.c.h.b16 %v1699
    %v2287 = vunpack.c.l.b16 %v1700
    %v2288 = vunpack.c.h.b16 %v1700
    %v2289 = vunpack.c.l.b16 %v1701
    %v2290 = vunpack.c.h.b16 %v1701
    %v2291 = vunpack.c.l.b16 %v1702
    %v2292 = vunpack.c.h.b16 %v1702
    %v2293 = vunpack.c.l.b16 %v1703
    %v2294 = vunpack.c.h.b16 %v1703
    %v2295 = vunpack.c.l.b16 %v1704
    %v2296 = vunpack.c.h.b16 %v1704
    %v2297 = vunpack.c.l.b16 %v1705
    %v2298 = vunpack.c.h.b16 %v1705
    %v2299 = vunpack.c.l.b16 %v1706
    %v2300 = vunpack.c.h.b16 %v1706
    %v2301 = vunpack.c.l.b16 %v1707
    %v2302 = vunpack.c.h.b16 %v1707
    %v2303 = vunpack.c.l.b16 %v1708
    %v2304 = vunpack.c.h.b16 %v1708
    %v2305 = vunpack.c.l.b16 %v1709
    %v2306 = vunpack.c.h.b16 %v1709
    %v2307 = vunpack.c.l.b16 %v1710
    %v2308 = vunpack.c.h.b16 %v1710
    %v2309 = vunpack.c.l.b16 %v1711
    %v2310 = vunpack.c.h.b16 %v1711
    %v2311 = vunpack.c.l.b16 %v1712
    %v2312 = vunpack.c.h.b16 %v1712
    %v2313 = vunpack.c.l.b16 %v1713
    %v2314 = vunpack.c.h.b16 %v1713
    %v2315 = vunpack.c.l.b16 %v1714
    %v2316 = vunpack.c.h.b16 %v1714
    %v2317 = vunpack.c.l.b16 %v1715
    %v2318 = vunpack.c.h.b16 %v1715
    %v2319 = vunpack.c.l.b16 %v1716
    %v2320 = vunpack.c.h.b16 %v1716
    %v2321 = vunpack.c.l.b16 %v1717
    %v2322 = vunpack.c.h.b16 %v1717
    %v2323 = vunpack.c.l.b16 %v1718
    %v2324 = vunpack.c.h.b16 %v1718
    %v2325 = vunpack.c.l.b16 %v1719
    %v2326 = vunpack.c.h.b16 %v1719
    %v2327 = vunpack.c.l.b16 %v1720
    %v2328 = vunpack.c.h.b16 %v1720
    %v2329 = vunpack.c.l.b16 %v1721
    %v2330 = vunpack.c.h.b16 %v1721
    %v2331 = vunpack.c.l.b16 %v1722
    %v2332 = vunpack.c.h.b16 %v1722
    %v2333 = vunpack.c.l.b16 %v1723
    %v2334 = vunpack.c.h.b16 %v1723
    %v2335 = vunpack.c.l.b16 %v1724
    %v2336 = vunpack.c.h.b16 %v1724
    %v2337 = vunpack.c.l.b16 %v1725
    %v2338 = vunpack.c.h.b16 %v1725
    %v2339 = vunpack.c.l.b16 %v1726
    %v2340 = vunpack.c.h.b16 %v1726
    %v2341 = vunpack.c.l.b16 %v1727
    %v2342 = vunpack.c.h.b16 %v1727
    %v2343 = vunpack.c.l.b16 %v1728
    %v2344 = vunpack.c.h.b16 %v1728
    %v2345 = vunpack.c.l.b16 %v1729
    %v2346 = vunpack.c.h.b16 %v1729
    %v2347 = vunpack.c.l.b16 %v1730
    %v2348 = vunpack.c.h.b16 %v1730
    %v2349 = vunpack.c.l.b16 %v1731
    %v2350 = vunpack.c.h.b16 %v1731
    %v2351 = vunpack.c.l.b16 %v1732
    %v2352 = vunpack.c.h.b16 %v1732
    %v2353 = vunpack.c.l.b16 %v1733
    %v2354 = vunpack.c.h.b16 %v1733
    %v2355 = vunpack.c.l.b16 %v1734
    %v2356 = vunpack.c.h.b16 %v1734
    %v2357 = vunpack.c.l.b16 %v1735
    %v2358 = vunpack.c.h.b16 %v1735
    %v2359 = vunpack.c.l.b16 %v1736
    %v2360 = vunpack.c.h.b16 %v1736
    %v2361 = vunpack.c.l.b16 %v1737
    %v2362 = vunpack.c.h.b16 %v1737
    %v2363 = vunpack.c.l.b16 %v1738
    %v2364 = vunpack.c.h.b16 %v1738
    %v2365 = vunpack.c.l.b16 %v1739
    %v2366 = vunpack.c.h.b16 %v1739
    %v2367 = vunpack.c.l.b16 %v1740
    %v2368 = vunpack.c.h.b16 %v1740
    %v2369 = vunpack.c.l.b16 %v1741
    %v2370 = vunpack.c.h.b16 %v1741
    %v2371 = vunpack.c.l.b16 %v1742
    %v2372 = vunpack.c.h.b16 %v1742
    %v2373 = vunpack.c.l.b16 %v1743
    %v2374 = vunpack.c.h.b16 %v1743
    %v2375 = vunpack.c.l.b16 %v1744
    %v2376 = vunpack.c.h.b16 %v1744
    %v2377 = vunpack.c.l.b16 %v1745
    %v2378 = vunpack.c.h.b16 %v1745
    %v2379 = vunpack.c.l.b16 %v1746
    %v2380 = vunpack.c.h.b16 %v1746
    %v2381 = vunpack.c.l.b16 %v1747
    %v2382 = vunpack.c.h.b16 %v1747
    %v2383 = vunpack.c.l.b16 %v1748
    %v2384 = vunpack.c.h.b16 %v1748
    %v2385 = vunpack.c.l.b16 %v1749
    %v2386 = vunpack.c.h.b16 %v1749
    %v2387 = vunpack.c.l.b16 %v1750
    %v2388 = vunpack.c.h.b16 %v1750
    %v2389 = vunpack.c.l.b16 %v1751
    %v2390 = vunpack.c.h.b16 %v1751
    %v2391 = vunpack.c.l.b16 %v1752
    %v2392 = vunpack.c.h.b16 %v1752
    %v2393 = vunpack.c.l.b16 %v1753
    %v2394 = vunpack.c.h.b16 %v1753
    %v2395 = vunpack.c.l.b16 %v1754
    %v2396 = vunpack.c.h.b16 %v1754
    %v2397 = vunpack.c.l.b16 %v1755
    %v2398 = vunpack.c.h.b16 %v1755
    %v2399 = vunpack.c.l.b16 %v1756
    %v2400 = vunpack.c.h.b16 %v1756
    %v2401 = vunpack.c.l.b16 %v1757
    %v2402 = vunpack.c.h.b16 %v1757
    %v2403 = vunpack.c.l.b16 %v1758
    %v2404 = vunpack.c.h.b16 %v1758
    %v2405 = vunpack.c.l.b16 %v1759
    %v2406 = vunpack.c.h.b16 %v1759
    %v2407 = vunpack.c.l.b16 %v1760
    %v2408 = vunpack.c.h.b16 %v1760
    %v2409 = vunpack.c.l.b16 %v1761
    %v2410 = vunpack.c.h.b16 %v1761
    %v2411 = vunpack.c.l.b16 %v1762
    %v2412 = vunpack.c.h.b16 %v1762
    %v2413 = vunpack.c.l.b16 %v1763
    %v2414 = vunpack.c.h.b16 %v1763
    %v2415 = vunpack.c.l.b16 %v1764
    %v2416 = vunpack.c.h.b16 %v1764
    %v2417 = vunpack.c.l.b16 %v1765
    %v2418 = vunpack.c.h.b16 %v1765
    %v2419 = vunpack.c.l.b16 %v1766
    %v2420 = vunpack.c.h.b16 %v1766
    %v2421 = vunpack.c.l.b16 %v1767
    %v2422 = vunpack.c.h.b16 %v1767
    %v2423 = vunpack.c.l.b16 %v1768
    %v2424 = vunpack.c.h.b16 %v1768
    %v2425 = vunpack.c.l.b16 %v1769
    %v2426 = vunpack.c.h.b16 %v1769
    %v2427 = vunpack.c.l.b16 %v1770
    %v2428 = vunpack.c.h.b16 %v1770
    %v2429 = vunpack.c.l.b16 %v1771
    %v2430 = vunpack.c.h.b16 %v1771
    %v2431 = vunpack.c.l.b16 %v1772
    %v2432 = vunpack.c.h.b16 %v1772
    %v2433 = vunpack.c.l.b16 %v1773
    %v2434 = vunpack.c.h.b16 %v1773
    %v2435 = vunpack.c.l.b16 %v1774
    %v2436 = vunpack.c.h.b16 %v1774
    %v2437 = vunpack.c.l.b16 %v1775
    %v2438 = vunpack.c.h.b16 %v1775
    %v2439 = vunpack.c.l.b16 %v1776
    %v2440 = vunpack.c.h.b16 %v1776
    %v2441 = vunpack.c.l.b16 %v1777
    %v2442 = vunpack.c.h.b16 %v1777
    %v2443 = vunpack.c.l.b16 %v1778
    %v2444 = vunpack.c.h.b16 %v1778
    %v2445 = vunpack.c.l.b16 %v1779
    %v2446 = vunpack.c.h.b16 %v1779
    %v2447 = vunpack.c.l.b16 %v1780
    %v2448 = vunpack.c.h.b16 %v1780
    %v2449 = vunpack.c.l.b16 %v1781
    %v2450 = vunpack.c.h.b16 %v1781
    %v2451 = vunpack.c.l.b16 %v1782
    %v2452 = vunpack.c.h.b16 %v1782
    %v2453 = vunpack.c.l.b16 %v1783
    %v2454 = vunpack.c.h.b16 %v1783
    %v2455 = vunpack.c.l.b16 %v1784
    %v2456 = vunpack.c.h.b16 %v1784
    %v2457 = vunpack.c.l.b16 %v1785
    %v2458 = vunpack.c.h.b16 %v1785
    %v2459 = vunpack.c.l.b16 %v1786
    %v2460 = vunpack.c.h.b16 %v1786
    %v2461 = vunpack.c.l.b16 %v1787
    %v2462 = vunpack.c.h.b16 %v1787
    %v2463 = vunpack.c.l.b16 %v1788
    %v2464 = vunpack.c.h.b16 %v1788
    %v2465 = vunpack.c.l.b16 %v1789
    %v2466 = vunpack.c.h.b16 %v1789
    %v2467 = vunpack.c.l.b16 %v1790
    %v2468 = vunpack.c.h.b16 %v1790
    %v2469 = vunpack.c.l.b16 %v1791
    %v2470 = vunpack.c.h.b16 %v1791
    %v2471 = vunpack.c.l.b16 %v1792
    %v2472 = vunpack.c.h.b16 %v1792
    %v2473 = vunpack.c.l.b16 %v1793
    %v2474 = vunpack.c.h.b16 %v1793
    %v2475 = vunpack.c.l.b16 %v1794
    %v2476 = vunpack.c.h.b16 %v1794
    %v2477 = vunpack.c.l.b16 %v1795
    %v2478 = vunpack.c.h.b16 %v1795
    %v2479 = vunpack.c.l.b16 %v1796
    %v2480 = vunpack.c.h.b16 %v1796
    %v2481 = vunpack.c.l.b16 %v1797
    %v2482 = vunpack.c.h.b16 %v1797
    %v2483 = vunpack.c.l.b16 %v1798
    %v2484 = vunpack.c.h.b16 %v1798
    %v2485 = vunpack.c.l.b16 %v1799
    %v2486 = vunpack.c.h.b16 %v1799
    %v2487 = vunpack.c.l.b16 %v1800
    %v2488 = vunpack.c.h.b16 %v1800
    %v2489 = vunpack.c.l.b16 %v1801
    %v2490 = vunpack.c.h.b16 %v1801
    %v2491 = vunpack.c.l.b16 %v1802
    %v2492 = vunpack.c.h.b16 %v1802
    %v2493 = vunpack.c.l.b16 %v1803
    %v2494 = vunpack.c.h.b16 %v1803
    %v2495 = vunpack.c.l.b16 %v1804
    %v2496 = vunpack.c.h.b16 %v1804
    %v2497 = vunpack.c.l.b16 %v1805
    %v2498 = vunpack.c.h.b16 %v1805
    %v2499 = vunpack.c.l.b16 %v1806
    %v2500 = vunpack.c.h.b16 %v1806
    %v2501 = vunpack.c.l.b16 %v1807
    %v2502 = vunpack.c.h.b16 %v1807
    %v2503 = vunpack.c.l.b16 %v1808
    %v2504 = vunpack.c.h.b16 %v1808
    %v2505 = vunpack.c.l.b16 %v1809
    %v2506 = vunpack.c.h.b16 %v1809
    %v2507 = vunpack.c.l.b16 %v1810
    %v2508 = vunpack.c.h.b16 %v1810
    %v2509 = vunpack.c.l.b16 %v1811
    %v2510 = vunpack.c.h.b16 %v1811
    %v2511 = vunpack.c.l.b16 %v1812
    %v2512 = vunpack.c.h.b16 %v1812
    %v2513 = vunpack.c.l.b16 %v1813
    %v2514 = vunpack.c.h.b16 %v1813
    %v2515 = vunpack.c.l.b16 %v1814
    %v2516 = vunpack.c.h.b16 %v1814
    %v2517 = vunpack.c.l.b16 %v1815
    %v2518 = vunpack.c.h.b16 %v1815
    %v2519 = vunpack.c.l.b16 %v1816
    %v2520 = vunpack.c.h.b16 %v1816
    %v2521 = vunpack.c.l.b16 %v1817
    %v2522 = vunpack.c.h.b16 %v1817
    %v2523 = vunpack.c.l.b16 %v1818
    %v2524 = vunpack.c.h.b16 %v1818
    %v2525 = vunpack.c.l.b16 %v1819
    %v2526 = vunpack.c.h.b16 %v1819
    %v2527 = vunpack.c.l.b16 %v1820
    %v2528 = vunpack.c.h.b16 %v1820
    %v2529 = vunpack.c.l.b16 %v1821
    %v2530 = vunpack.c.h.b16 %v1821
    %v2531 = vunpack.c.l.b16 %v1822
    %v2532 = vunpack.c.h.b16 %v1822
    %v2533 = vunpack.c.l.b16 %v1823
    %v2534 = vunpack.c.h.b16 %v1823
    %v2535 = vunpack.c.l.b16 %v1824
    %v2536 = vunpack.c.h.b16 %v1824
    %v2537 = vunpack.c.l.b16 %v1825
    %v2538 = vunpack.c.h.b16 %v1825
    %v2539 = vunpack.c.l.b16 %v1826
    %v2540 = vunpack.c.h.b16 %v1826
    %v2541 = vunpack.c.l.b16 %v1827
    %v2542 = vunpack.c.h.b16 %v1827
    %v2543 = vunpack.c.l.b16 %v1828
    %v2544 = vunpack.c.h.b16 %v1828
    %v2545 = vunpack.c.l.b16 %v1829
    %v2546 = vunpack.c.h.b16 %v1829
    %v2547 = vunpack.c.l.b16 %v1830
    %v2548 = vunpack.c.h.b16 %v1830
    %v2549 = vunpack.c.l.b16 %v1831
    %v2550 = vunpack.c.h.b16 %v1831
    %v2551 = vunpack.c.l.b16 %v1832
    %v2552 = vunpack.c.h.b16 %v1832
    %v2553 = vunpack.c.l.b16 %v1833
    %v2554 = vunpack.c.h.b16 %v1833
    %v2555 = vunpack.c.l.b16 %v1834
    %v2556 = vunpack.c.h.b16 %v1834
    %v2557 = vunpack.c.l.b16 %v1835
    %v2558 = vunpack.c.h.b16 %v1835
    %v2559 = vunpack.c.l.b16 %v1836
    %v2560 = vunpack.c.h.b16 %v1836
    %v2561 = vunpack.c.l.b16 %v1837
    %v2562 = vunpack.c.h.b16 %v1837
    %v2563 = vunpack.c.l.b16 %v1838
    %v2564 = vunpack.c.h.b16 %v1838
    %v2565 = vunpack.c.l.b16 %v1839
    %v2566 = vunpack.c.h.b16 %v1839
    %v2567 = vunpack.c.l.b16 %v1840
    %v2568 = vunpack.c.h.b16 %v1840
    %v2569 = vunpack.c.l.b16 %v1841
    %v2570 = vunpack.c.h.b16 %v1841
    %v2571 = vunpack.c.l.b16 %v1842
    %v2572 = vunpack.c.h.b16 %v1842
    %v2573 = vunpack.c.l.b16 %v1843
    %v2574 = vunpack.c.h.b16 %v1843
    %v2575 = vunpack.c.l.b16 %v1844
    %v2576 = vunpack.c.h.b16 %v1844
    %v2577 = vunpack.c.l.b16 %v1845
    %v2578 = vunpack.c.h.b16 %v1845
    %v2579 = vunpack.c.l.b16 %v1846
    %v2580 = vunpack.c.h.b16 %v1846
    %v2581 = vunpack.c.l.b16 %v1847
    %v2582 = vunpack.c.h.b16 %v1847
    %v2583 = vunpack.c.l.b16 %v1848
    %v2584 = vunpack.c.h.b16 %v1848
    %v2585 = vunpack.c.l.b16 %v1849
    %v2586 = vunpack.c.h.b16 %v1849
    %v2587 = vunpack.c.l.b16 %v1850
    %v2588 = vunpack.c.h.b16 %v1850
    %v2589 = vunpack.c.l.b16 %v1851
    %v2590 = vunpack.c.h.b16 %v1851
    %v2591 = vunpack.c.l.b16 %v1852
    %v2592 = vunpack.c.h.b16 %v1852
    %v2593 = vunpack.c.l.b16 %v1853
    %v2594 = vunpack.c.h.b16 %v1853
    %v2595 = vunpack.c.l.b16 %v1854
    %v2596 = vunpack.c.h.b16 %v1854
    %v2597 = vunpack.c.l.b16 %v1855
    %v2598 = vunpack.c.h.b16 %v1855
    %v2599 = vunpack.c.l.b16 %v1856
    %v2600 = vunpack.c.h.b16 %v1856
    %v2601 = vunpack.c.l.b16 %v1857
    %v2602 = vunpack.c.h.b16 %v1857
    %v2603 = vunpack.c.l.b16 %v1858
    %v2604 = vunpack.c.h.b16 %v1858
    %v2605 = vunpack.c.l.b16 %v1859
    %v2606 = vunpack.c.h.b16 %v1859
    %v2607 = vunpack.c.l.b16 %v1860
    %v2608 = vunpack.c.h.b16 %v1860
    %v2609 = vunpack.c.l.b16 %v1861
    %v2610 = vunpack.c.h.b16 %v1861
    %v2611 = vunpack.c.l.b16 %v1862
    %v2612 = vunpack.c.h.b16 %v1862
    %v2613 = vunpack.c.l.b16 %v1863
    %v2614 = vunpack.c.h.b16 %v1863
    %v2615 = vunpack.c.l.b16 %v1864
    %v2616 = vunpack.c.h.b16 %v1864
    %v2617 = vunpack.c.l.b16 %v1865
    %v2618 = vunpack.c.h.b16 %v1865
    %v2619 = vunpack.c.l.b16 %v1866
    %v2620 = vunpack.c.h.b16 %v1866
    %v2621 = vunpack.c.l.b16 %v1867
    %v2622 = vunpack.c.h.b16 %v1867
    %v2623 = vunpack.c.l.b16 %v1868
    %v2624 = vunpack.c.h.b16 %v1868
    %v2625 = vunpack.c.l.b16 %v1869
    %v2626 = vunpack.c.h.b16 %v1869
    %v2627 = vunpack.c.l.b16 %v1870
    %v2628 = vunpack.c.h.b16 %v1870
    %v2629 = vunpack.c.l.b16 %v1871
    %v2630 = vunpack.c.h.b16 %v1871
    %v2631 = vunpack.c.l.b16 %v1872
    %v2632 = vunpack.c.h.b16 %v1872
    %v2633 = vunpack.c.l.b16 %v1873
    %v2634 = vunpack.c.h.b16 %v1873
    %v2635 = vunpack.c.l.b16 %v1874
    %v2636 = vunpack.c.h.b16 %v1874
    %v2637 = vunpack.c.l.b16 %v1875
    %v2638 = vunpack.c.h.b16 %v1875
    %v2639 = vunpack.c.l.b16 %v1876
    %v2640 = vunpack.c.h.b16 %v1876
    %v2641 = vunpack.c.l.b16 %v1877
    %v2642 = vunpack.c.h.b16 %v1877
    %v2643 = vunpack.c.l.b16 %v1878
    %v2644 = vunpack.c.h.b16 %v1878
    %v2645 = vunpack.c.l.b16 %v1879
    %v2646 = vunpack.c.h.b16 %v1879
    %v2647 = vunpack.c.l.b16 %v1880
    %v2648 = vunpack.c.h.b16 %v1880
    %v2649 = vpack.c.b16 %v2145, %v2137
    %v2650 = vpack.c.b16 %v2146, %v2138
    %v2651 = vpack.c.b16 %v2147, %v2139
    %v2652 = vpack.c.b16 %v2148, %v2140
    %v2653 = vpack.c.b16 %v2149, %v2141
    %v2654 = vpack.c.b16 %v2150, %v2142
    %v2655 = vpack.c.b16 %v2151, %v2143
    %v2656 = vpack.c.b16 %v2152, %v2144
    %v2657 = vpack.c.b16 %v2161, %v2153
    %v2658 = vpack.c.b16 %v2162, %v2154
    %v2659 = vpack.c.b16 %v2163, %v2155
    %v2660 = vpack.c.b16 %v2164, %v2156
    %v2661 = vpack.c.b16 %v2165, %v2157
    %v2662 = vpack.c.b16 %v2166, %v2158
    %v2663 = vpack.c.b16 %v2167, %v2159
    %v2664 = vpack.c.b16 %v2168, %v2160
    %v2665 = vpack.c.b16 %v2177, %v2169
    %v2666 = vpack.c.b16 %v2178, %v2170
    %v2667 = vpack.c.b16 %v2179, %v2171
    %v2668 = vpack.c.b16 %v2180, %v2172
    %v2669 = vpack.c.b16 %v2181, %v2173
    %v2670 = vpack.c.b16 %v2182, %v2174
    %v2671 = vpack.c.b16 %v2183, %v2175
    %v2672 = vpack.c.b16 %v2184, %v2176
    %v2673 = vpack.c.b16 %v2193, %v2185
    %v2674 = vpack.c.b16 %v2194, %v2186
    %v2675 = vpack.c.b16 %v2195, %v2187
    %v2676 = vpack.c.b16 %v2196, %v2188
    %v2677 = vpack.c.b16 %v2197, %v2189
    %v2678 = vpack.c.b16 %v2198, %v2190
    %v2679 = vpack.c.b16 %v2199, %v2191
    %v2680 = vpack.c.b16 %v2200, %v2192
    %v2681 = vpack.c.b16 %v2209, %v2201
    %v2682 = vpack.c.b16 %v2210, %v2202
    %v2683 = vpack.c.b16 %v2211, %v2203
    %v2684 = vpack.c.b16 %v2212, %v2204
    %v2685 = vpack.c.b16 %v2213, %v2205
    %v2686 = vpack.c.b16 %v2214, %v2206
    %v2687 = vpack.c.b16 %v2215, %v2207
    %v2688 = vpack.c.b16 %v2216, %v2208
    %v2689 = vpack.c.b16 %v2225, %v2217
    %v2690 = vpack.c.b16 %v2226, %v2218
    %v2691 = vpack.c.b16 %v2227, %v2219
    %v2692 = vpack.c.b16 %v2228, %v2220
    %v2693 = vpack.c.b16 %v2229, %v2221
    %v2694 = vpack.c.b16 %v2230, %v2222
    %v2695 = vpack.c.b16 %v2231, %v2223
    %v2696 = vpack.c.b16 %v2232, %v2224
    %v2697 = vpack.c.b16 %v2241, %v2233
    %v2698 = vpack.c.b16 %v2242, %v2234
    %v2699 = vpack.c.b16 %v2243, %v2235
    %v2700 = vpack.c.b16 %v2244, %v2236
    %v2701 = vpack.c.b16 %v2245, %v2237
    %v2702 = vpack.c.b16 %v2246, %v2238
    %v2703 = vpack.c.b16 %v2247, %v2239
    %v2704 = vpack.c.b16 %v2248, %v2240
    %v2705 = vpack.c.b16 %v2257, %v2249
    %v2706 = vpack.c.b16 %v2258, %v2250
    %v2707 = vpack.c.b16 %v2259, %v2251
    %v2708 = vpack.c.b16 %v2260, %v2252
    %v2709 = vpack.c.b16 %v2261, %v2253
    %v2710 = vpack.c.b16 %v2262, %v2254
    %v2711 = vpack.c.b16 %v2263, %v2255
    %v2712 = vpack.c.b16 %v2264, %v2256
    %v2713 = vpack.c.b16 %v2273, %v2265
    %v2714 = vpack.c.b16 %v2274, %v2266
    %v2715 = vpack.c.b16 %v2275, %v2267
    %v2716 = vpack.c.b16 %v2276, %v2268
    %v2717 = vpack.c.b16 %v2277, %v2269
    %v2718 = vpack.c.b16 %v2278, %v2270
    %v2719 = vpack.c.b16 %v2279, %v2271
    %v2720 = vpack.c.b16 %v2280, %v2272
    %v2721 = vpack.c.b16 %v2289, %v2281
    %v2722 = vpack.c.b16 %v2290, %v2282
    %v2723 = vpack.c.b16 %v2291, %v2283
    %v2724 = vpack.c.b16 %v2292, %v2284
    %v2725 = vpack.c.b16 %v2293, %v2285
    %v2726 = vpack.c.b16 %v2294, %v2286
    %v2727 = vpack.c.b16 %v2295, %v2287
    %v2728 = vpack.c.b16 %v2296, %v2288
    %v2729 = vpack.c.b16 %v2305, %v2297
    %v2730 = vpack.c.b16 %v2306, %v2298
    %v2731 = vpack.c.b16 %v2307, %v2299
    %v2732 = vpack.c.b16 %v2308, %v2300
    %v2733 = vpack.c.b16 %v2309, %v2301
    %v2734 = vpack.c.b16 %v2310, %v2302
    %v2735 = vpack.c.b16 %v2311, %v2303
    %v2736 = vpack.c.b16 %v2312, %v2304
    %v2737 = vpack.c.b16 %v2321, %v2313
    %v2738 = vpack.c.b16 %v2322, %v2314
    %v2739 = vpack.c.b16 %v2323, %v2315
    %v2740 = vpack.c.b16 %v2324, %v2316
    %v2741 = vpack.c.b16 %v2325, %v2317
    %v2742 = vpack.c.b16 %v2326, %v2318
    %v2743 = vpack.c.b16 %v2327, %v2319
    %v2744 = vpack.c.b16 %v2328, %v2320
    %v2745 = vpack.c.b16 %v2337, %v2329
    %v2746 = vpack.c.b16 %v2338, %v2330
    %v2747 = vpack.c.b16 %v2339, %v2331
    %v2748 = vpack.c.b16 %v2340, %v2332
    %v2749 = vpack.c.b16 %v2341, %v2333
    %v2750 = vpack.c.b16 %v2342, %v2334
    %v2751 = vpack.c.b16 %v2343, %v2335
    %v2752 = vpack.c.b16 %v2344, %v2336
    %v2753 = vpack.c.b16 %v2353, %v2345
    %v2754 = vpack.c.b16 %v2354, %v2346
    %v2755 = vpack.c.b16 %v2355, %v2347
    %v2756 = vpack.c.b16 %v2356, %v2348
    %v2757 = vpack.c.b16 %v2357, %v2349
    %v2758 = vpack.c.b16 %v2358, %v2350
    %v2759 = vpack.c.b16 %v2359, %v2351
    %v2760 = vpack.c.b16 %v2360, %v2352
    %v2761 = vpack.c.b16 %v2369, %v2361
    %v2762 = vpack.c.b16 %v2370, %v2362
    %v2763 = vpack.c.b16 %v2371, %v2363
    %v2764 = vpack.c.b16 %v2372, %v2364
    %v2765 = vpack.c.b16 %v2373, %v2365
    %v2766 = vpack.c.b16 %v2374, %v2366
    %v2767 = vpack.c.b16 %v2375, %v2367
    %v2768 = vpack.c.b16 %v2376, %v2368
    %v2769 = vpack.c.b16 %v2385, %v2377
    %v2770 = vpack.c.b16 %v2386, %v2378
    %v2771 = vpack.c.b16 %v2387, %v2379
    %v2772 = vpack.c.b16 %v2388, %v2380
    %v2773 = vpack.c.b16 %v2389, %v2381
    %v2774 = vpack.c.b16 %v2390, %v2382
    %v2775 = vpack.c.b16 %v2391, %v2383
    %v2776 = vpack.c.b16 %v2392, %v2384
    %v2777 = vpack.c.b16 %v2401, %v2393
    %v2778 = vpack.c.b16 %v2402, %v2394
    %v2779 = vpack.c.b16 %v2403, %v2395
    %v2780 = vpack.c.b16 %v2404, %v2396
    %v2781 = vpack.c.b16 %v2405, %v2397
    %v2782 = vpack.c.b16 %v2406, %v2398
    %v2783 = vpack.c.b16 %v2407, %v2399
    %v2784 = vpack.c.b16 %v2408, %v2400
    %v2785 = vpack.c.b16 %v2417, %v2409
    %v2786 = vpack.c.b16 %v2418, %v2410
    %v2787 = vpack.c.b16 %v2419, %v2411
    %v2788 = vpack.c.b16 %v2420, %v2412
    %v2789 = vpack.c.b16 %v2421, %v2413
    %v2790 = vpack.c.b16 %v2422, %v2414
    %v2791 = vpack.c.b16 %v2423, %v2415
    %v2792 = vpack.c.b16 %v2424, %v2416
    %v2793 = vpack.c.b16 %v2433, %v2425
    %v2794 = vpack.c.b16 %v2434, %v2426
    %v2795 = vpack.c.b16 %v2435, %v2427
    %v2796 = vpack.c.b16 %v2436, %v2428
    %v2797 = vpack.c.b16 %v2437, %v2429
    %v2798 = vpack.c.b16 %v2438, %v2430
    %v2799 = vpack.c.b16 %v2439, %v2431
    %v2800 = vpack.c.b16 %v2440, %v2432
    %v2801 = vpack.c.b16 %v2449, %v2441
    %v2802 = vpack.c.b16 %v2450, %v2442
    %v2803 = vpack.c.b16 %v2451, %v2443
    %v2804 = vpack.c.b16 %v2452, %v2444
    %v2805 = vpack.c.b16 %v2453, %v2445
    %v2806 = vpack.c.b16 %v2454, %v2446
    %v2807 = vpack.c.b16 %v2455, %v2447
    %v2808 = vpack.c.b16 %v2456, %v2448
    %v2809 = vpack.c.b16 %v2465, %v2457
    %v2810 = vpack.c.b16 %v2466, %v2458
    %v2811 = vpack.c.b16 %v2467, %v2459
    %v2812 = vpack.c.b16 %v2468, %v2460
    %v2813 = vpack.c.b16 %v2469, %v2461
    %v2814 = vpack.c.b16 %v2470, %v2462
    %v2815 = vpack.c.b16 %v2471, %v2463
    %v2816 = vpack.c.b16 %v2472, %v2464
    %v2817 = vpack.c.b16 %v2481, %v2473
    %v2818 = vpack.c.b16 %v2482, %v2474
    %v2819 = vpack.c.b16 %v2483, %v2475
    %v2820 = vpack.c.b16 %v2484, %v2476
    %v2821 = vpack.c.b16 %v2485, %v2477
    %v2822 = vpack.c.b16 %v2486, %v2478
    %v2823 = vpack.c.b16 %v2487, %v2479
    %v2824 = vpack.c.b16 %v2488, %v2480
    %v2825 = vpack.c.b16 %v2497, %v2489
    %v2826 = vpack.c.b16 %v2498, %v2490
    %v2827 = vpack.c.b16 %v2499, %v2491
    %v2828 = vpack.c.b16 %v2500, %v2492
    %v2829 = vpack.c.b16 %v2501, %v2493
    %v2830 = vpack.c.b16 %v2502, %v2494
    %v2831 = vpack.c.b16 %v2503, %v2495
    %v2832 = vpack.c.b16 %v2504, %v2496
    %v2833 = vpack.c.b16 %v2513, %v2505
    %v2834 = vpack.c.b16 %v2514, %v2506
    %v2835 = vpack.c.b16 %v2515, %v2507
    %v2836 = vpack.c.b16 %v2516, %v2508
    %v2837 = vpack.c.b16 %v2517, %v2509
    %v2838 = vpack.c.b16 %v2518, %v2510
    %v2839 = vpack.c.b16 %v2519, %v2511
    %v2840 = vpack.c.b16 %v2520, %v2512
    %v2841 = vpack.c.b16 %v2529, %v2521
    %v2842 = vpack.c.b16 %v2530, %v2522
    %v2843 = vpack.c.b16 %v2531, %v2523
    %v2844 = vpack.c.b16 %v2532, %v2524
    %v2845 = vpack.c.b16 %v2533, %v2525
    %v2846 = vpack.c.b16 %v2534, %v2526
    %v2847 = vpack.c.b16 %v2535, %v2527
    %v2848 = vpack.c.b16 %v2536, %v2528
    %v2849 = vpack.c.b16 %v2545, %v2537
    %v2850 = vpack.c.b16 %v2546, %v2538
    %v2851 = vpack.c.b16 %v2547, %v2539
    %v2852 = vpack.c.b16 %v2548, %v2540
    %v2853 = vpack.c.b16 %v2549, %v2541
    %v2854 = vpack.c.b16 %v2550, %v2542
    %v2855 = vpack.c.b16 %v2551, %v2543
    %v2856 = vpack.c.b16 %v2552, %v2544
    %v2857 = vpack.c.b16 %v2561, %v2553
    %v2858 = vpack.c.b16 %v2562, %v2554
    %v2859 = vpack.c.b16 %v2563, %v2555
    %v2860 = vpack.c.b16 %v2564, %v2556
    %v2861 = vpack.c.b16 %v2565, %v2557
    %v2862 = vpack.c.b16 %v2566, %v2558
    %v2863 = vpack.c.b16 %v2567, %v2559
    %v2864 = vpack.c.b16 %v2568, %v2560
    %v2865 = vpack.c.b16 %v2577, %v2569
    %v2866 = vpack.c.b16 %v2578, %v2570
    %v2867 = vpack.c.b16 %v2579, %v2571
    %v2868 = vpack.c.b16 %v2580, %v2572
    %v2869 = vpack.c.b16 %v2581, %v2573
    %v2870 = vpack.c.b16 %v2582, %v2574
    %v2871 = vpack.c.b16 %v2583, %v2575
    %v2872 = vpack.c.b16 %v2584, %v2576
    %v2873 = vpack.c.b16 %v2593, %v2585
    %v2874 = vpack.c.b16 %v2594, %v2586
    %v2875 = vpack.c.b16 %v2595, %v2587
    %v2876 = vpack.c.b16 %v2596, %v2588
    %v2877 = vpack.c.b16 %v2597, %v2589
    %v2878 = vpack.c.b16 %v2598, %v2590
    %v2879 = vpack.c.b16 %v2599, %v2591
    %v2880 = vpack.c.b16 %v2600, %v2592
    %v2881 = vpack.c.b16 %v2609, %v2601
    %v2882 = vpack.c.b16 %v2610, %v2602
    %v2883 = vpack.c.b16 %v2611, %v2603
    %v2884 = vpack.c.b16 %v2612, %v2604
    %v2885 = vpack.c.b16 %v2613, %v2605
    %v2886 = vpack.c.b16 %v2614, %v2606
    %v2887 = vpack.c.b16 %v2615, %v2607
    %v2888 = vpack.c.b16 %v2616, %v2608
    %v2889 = vpack.c.b16 %v2625, %v2617
    %v2890 = vpack.c.b16 %v2626, %v2618
    %v2891 = vpack.c.b16 %v2627, %v2619
    %v2892 = vpack.c.b16 %v2628, %v2620
    %v2893 = vpack.c.b16 %v2629, %v2621
    %v2894 = vpack.c.b16 %v2630, %v2622
    %v2895 = vpack.c.b16 %v2631, %v2623
    %v2896 = vpack.c.b16 %v2632, %v2624
    %v2897 = vpack.c.b16 %v2641, %v2633
    %v2898 = vpack.c.b16 %v2642, %v2634
    %v2899 = vpack.c.b16 %v2643, %v2635
    %v2900 = vpack.c.b16 %v2644, %v2636
    %v2901 = vpack.c.b16 %v2645, %v2637
    %v2902 = vpack.c.b16 %v2646, %v2638
    %v2903 = vpack.c.b16 %v2647, %v2639
    %v2904 = vpack.c.b16 %v2648, %v2640
    %3161 = vmatpush.bf16.msra.mxu0 %v2705
    %3162 = vmatpush.bf16.msra.mxu0 %v2697
    %3163 = vmatpush.bf16.msra.mxu0 %v2689
    %3164 = vmatpush.bf16.msra.mxu0 %v2681
    %3165 = vmatpush.bf16.msra.mxu0 %v2673
    %3166 = vmatpush.bf16.msra.mxu0 %v2665
    %3167 = vmatpush.bf16.msra.mxu0 %v2657
    %3168 = vmatpush.bf16.msra.mxu0 %v2649
    %3169 = vmatmul.bf16.gmra.mxu0 %v1621
    %v3170 = vpop.f32.mrf.mxu0
    %v3171 = vadd.f32 0.0, %v3170
    %v3172 = vpop.f32.mrf.mxu0
    %3173 = vdwg.mxu0
    %3174 = vmatpush.bf16.msra.mxu0 %v2769
    %3175 = vmatpush.bf16.msra.mxu0 %v2761
    %3176 = vmatpush.bf16.msra.mxu0 %v2753
    %3177 = vmatpush.bf16.msra.mxu0 %v2745
    %3178 = vmatpush.bf16.msra.mxu0 %v2737
    %3179 = vmatpush.bf16.msra.mxu0 %v2729
    %3180 = vmatpush.bf16.msra.mxu0 %v2721
    %3181 = vmatpush.bf16.msra.mxu0 %v2713
    %3182 = vmatmul.bf16.gmra.mxu0 %v1622
    %v3183 = vpop.f32.mrf.mxu0
    %v3184 = vadd.f32 %v3171, %v3183
    %v3185 = vpop.f32.mrf.mxu0
    %3186 = vdwg.mxu0
    %3187 = vmatpush.bf16.msra.mxu0 %v2833
    %3188 = vmatpush.bf16.msra.mxu0 %v2825
    %3189 = vmatpush.bf16.msra.mxu0 %v2817
    %3190 = vmatpush.bf16.msra.mxu0 %v2809
    %3191 = vmatpush.bf16.msra.mxu0 %v2801
    %3192 = vmatpush.bf16.msra.mxu0 %v2793
    %3193 = vmatpush.bf16.msra.mxu0 %v2785
    %3194 = vmatpush.bf16.msra.mxu0 %v2777
    %3195 = vmatmul.bf16.gmra.mxu0 %v1623
    %v3196 = vpop.f32.mrf.mxu0
    %v3197 = vadd.f32 %v3184, %v3196
    %v3198 = vpop.f32.mrf.mxu0
    %3199 = vdwg.mxu0
    %3200 = vmatpush.bf16.msra.mxu0 %v2897
    %3201 = vmatpush.bf16.msra.mxu0 %v2889
    %3202 = vmatpush.bf16.msra.mxu0 %v2881
    %3203 = vmatpush.bf16.msra.mxu0 %v2873
    %3204 = vmatpush.bf16.msra.mxu0 %v2865
    %3205 = vmatpush.bf16.msra.mxu0 %v2857
    %3206 = vmatpush.bf16.msra.mxu0 %v2849
    %3207 = vmatpush.bf16.msra.mxu0 %v2841
    %3208 = vmatmul.bf16.gmra.mxu0 %v1624
    %v3209 = vpop.f32.mrf.mxu0
    %v3210 = vadd.f32 %v3197, %v3209
    %v3211 = vpop.f32.mrf.mxu0
    %3212 = vdwg.mxu0
    %3213 = vmatpush.bf16.msra.mxu0 %v2706
    %3214 = vmatpush.bf16.msra.mxu0 %v2698
    %3215 = vmatpush.bf16.msra.mxu0 %v2690
    %3216 = vmatpush.bf16.msra.mxu0 %v2682
    %3217 = vmatpush.bf16.msra.mxu0 %v2674
    %3218 = vmatpush.bf16.msra.mxu0 %v2666
    %3219 = vmatpush.bf16.msra.mxu0 %v2658
    %3220 = vmatpush.bf16.msra.mxu0 %v2650
    %3221 = vmatmul.bf16.gmra.mxu0 %v1621
    %v3222 = vpop.f32.mrf.mxu0
    %v3223 = vadd.f32 0.0, %v3222
    %v3224 = vpop.f32.mrf.mxu0
    %3225 = vdwg.mxu0
    %3226 = vmatpush.bf16.msra.mxu0 %v2770
    %3227 = vmatpush.bf16.msra.mxu0 %v2762
    %3228 = vmatpush.bf16.msra.mxu0 %v2754
    %3229 = vmatpush.bf16.msra.mxu0 %v2746
    %3230 = vmatpush.bf16.msra.mxu0 %v2738
    %3231 = vmatpush.bf16.msra.mxu0 %v2730
    %3232 = vmatpush.bf16.msra.mxu0 %v2722
    %3233 = vmatpush.bf16.msra.mxu0 %v2714
    %3234 = vmatmul.bf16.gmra.mxu0 %v1622
    %v3235 = vpop.f32.mrf.mxu0
    %v3236 = vadd.f32 %v3223, %v3235
    %v3237 = vpop.f32.mrf.mxu0
    %3238 = vdwg.mxu0
    %3239 = vmatpush.bf16.msra.mxu0 %v2834
    %3240 = vmatpush.bf16.msra.mxu0 %v2826
    %3241 = vmatpush.bf16.msra.mxu0 %v2818
    %3242 = vmatpush.bf16.msra.mxu0 %v2810
    %3243 = vmatpush.bf16.msra.mxu0 %v2802
    %3244 = vmatpush.bf16.msra.mxu0 %v2794
    %3245 = vmatpush.bf16.msra.mxu0 %v2786
    %3246 = vmatpush.bf16.msra.mxu0 %v2778
    %3247 = vmatmul.bf16.gmra.mxu0 %v1623
    %v3248 = vpop.f32.mrf.mxu0
    %v3249 = vadd.f32 %v3236, %v3248
    %v3250 = vpop.f32.mrf.mxu0
    %3251 = vdwg.mxu0
    %3252 = vmatpush.bf16.msra.mxu0 %v2898
    %3253 = vmatpush.bf16.msra.mxu0 %v2890
    %3254 = vmatpush.bf16.msra.mxu0 %v2882
    %3255 = vmatpush.bf16.msra.mxu0 %v2874
    %3256 = vmatpush.bf16.msra.mxu0 %v2866
    %3257 = vmatpush.bf16.msra.mxu0 %v2858
    %3258 = vmatpush.bf16.msra.mxu0 %v2850
    %3259 = vmatpush.bf16.msra.mxu0 %v2842
    %3260 = vmatmul.bf16.gmra.mxu0 %v1624
    %v3261 = vpop.f32.mrf.mxu0
    %v3262 = vadd.f32 %v3249, %v3261
    %v3263 = vpop.f32.mrf.mxu0
    %3264 = vdwg.mxu0
    %3265 = vmatpush.bf16.msra.mxu0 %v2707
    %3266 = vmatpush.bf16.msra.mxu0 %v2699
    %3267 = vmatpush.bf16.msra.mxu0 %v2691
    %3268 = vmatpush.bf16.msra.mxu0 %v2683
    %3269 = vmatpush.bf16.msra.mxu0 %v2675
    %3270 = vmatpush.bf16.msra.mxu0 %v2667
    %3271 = vmatpush.bf16.msra.mxu0 %v2659
    %3272 = vmatpush.bf16.msra.mxu0 %v2651
    %3273 = vmatmul.bf16.gmra.mxu0 %v1621
    %v3274 = vpop.f32.mrf.mxu0
    %v3275 = vadd.f32 0.0, %v3274
    %v3276 = vpop.f32.mrf.mxu0
    %3277 = vdwg.mxu0
    %3278 = vmatpush.bf16.msra.mxu0 %v2771
    %3279 = vmatpush.bf16.msra.mxu0 %v2763
    %3280 = vmatpush.bf16.msra.mxu0 %v2755
    %3281 = vmatpush.bf16.msra.mxu0 %v2747
    %3282 = vmatpush.bf16.msra.mxu0 %v2739
    %3283 = vmatpush.bf16.msra.mxu0 %v2731
    %3284 = vmatpush.bf16.msra.mxu0 %v2723
    %3285 = vmatpush.bf16.msra.mxu0 %v2715
    %3286 = vmatmul.bf16.gmra.mxu0 %v1622
    %v3287 = vpop.f32.mrf.mxu0
    %v3288 = vadd.f32 %v3275, %v3287
    %v3289 = vpop.f32.mrf.mxu0
    %3290 = vdwg.mxu0
    %3291 = vmatpush.bf16.msra.mxu0 %v2835
    %3292 = vmatpush.bf16.msra.mxu0 %v2827
    %3293 = vmatpush.bf16.msra.mxu0 %v2819
    %3294 = vmatpush.bf16.msra.mxu0 %v2811
    %3295 = vmatpush.bf16.msra.mxu0 %v2803
    %3296 = vmatpush.bf16.msra.mxu0 %v2795
    %3297 = vmatpush.bf16.msra.mxu0 %v2787
    %3298 = vmatpush.bf16.msra.mxu0 %v2779
    %3299 = vmatmul.bf16.gmra.mxu0 %v1623
    %v3300 = vpop.f32.mrf.mxu0
    %v3301 = vadd.f32 %v3288, %v3300
    %v3302 = vpop.f32.mrf.mxu0
    %3303 = vdwg.mxu0
    %3304 = vmatpush.bf16.msra.mxu0 %v2899
    %3305 = vmatpush.bf16.msra.mxu0 %v2891
    %3306 = vmatpush.bf16.msra.mxu0 %v2883
    %3307 = vmatpush.bf16.msra.mxu0 %v2875
    %3308 = vmatpush.bf16.msra.mxu0 %v2867
    %3309 = vmatpush.bf16.msra.mxu0 %v2859
    %3310 = vmatpush.bf16.msra.mxu0 %v2851
    %3311 = vmatpush.bf16.msra.mxu0 %v2843
    %3312 = vmatmul.bf16.gmra.mxu0 %v1624
    %v3313 = vpop.f32.mrf.mxu0
    %v3314 = vadd.f32 %v3301, %v3313
    %v3315 = vpop.f32.mrf.mxu0
    %3316 = vdwg.mxu0
    %3317 = vmatpush.bf16.msra.mxu0 %v2708
    %3318 = vmatpush.bf16.msra.mxu0 %v2700
    %3319 = vmatpush.bf16.msra.mxu0 %v2692
    %3320 = vmatpush.bf16.msra.mxu0 %v2684
    %3321 = vmatpush.bf16.msra.mxu0 %v2676
    %3322 = vmatpush.bf16.msra.mxu0 %v2668
    %3323 = vmatpush.bf16.msra.mxu0 %v2660
    %3324 = vmatpush.bf16.msra.mxu0 %v2652
    %3325 = vmatmul.bf16.gmra.mxu0 %v1621
    %v3326 = vpop.f32.mrf.mxu0
    %v3327 = vadd.f32 0.0, %v3326
    %v3328 = vpop.f32.mrf.mxu0
    %3329 = vdwg.mxu0
    %3330 = vmatpush.bf16.msra.mxu0 %v2772
    %3331 = vmatpush.bf16.msra.mxu0 %v2764
    %3332 = vmatpush.bf16.msra.mxu0 %v2756
    %3333 = vmatpush.bf16.msra.mxu0 %v2748
    %3334 = vmatpush.bf16.msra.mxu0 %v2740
    %3335 = vmatpush.bf16.msra.mxu0 %v2732
    %3336 = vmatpush.bf16.msra.mxu0 %v2724
    %3337 = vmatpush.bf16.msra.mxu0 %v2716
    %3338 = vmatmul.bf16.gmra.mxu0 %v1622
    %v3339 = vpop.f32.mrf.mxu0
    %v3340 = vadd.f32 %v3327, %v3339
    %v3341 = vpop.f32.mrf.mxu0
    %3342 = vdwg.mxu0
    %3343 = vmatpush.bf16.msra.mxu0 %v2836
    %3344 = vmatpush.bf16.msra.mxu0 %v2828
    %3345 = vmatpush.bf16.msra.mxu0 %v2820
    %3346 = vmatpush.bf16.msra.mxu0 %v2812
    %3347 = vmatpush.bf16.msra.mxu0 %v2804
    %3348 = vmatpush.bf16.msra.mxu0 %v2796
    %3349 = vmatpush.bf16.msra.mxu0 %v2788
    %3350 = vmatpush.bf16.msra.mxu0 %v2780
    %3351 = vmatmul.bf16.gmra.mxu0 %v1623
    %v3352 = vpop.f32.mrf.mxu0
    %v3353 = vadd.f32 %v3340, %v3352
    %v3354 = vpop.f32.mrf.mxu0
    %3355 = vdwg.mxu0
    %3356 = vmatpush.bf16.msra.mxu0 %v2900
    %3357 = vmatpush.bf16.msra.mxu0 %v2892
    %3358 = vmatpush.bf16.msra.mxu0 %v2884
    %3359 = vmatpush.bf16.msra.mxu0 %v2876
    %3360 = vmatpush.bf16.msra.mxu0 %v2868
    %3361 = vmatpush.bf16.msra.mxu0 %v2860
    %3362 = vmatpush.bf16.msra.mxu0 %v2852
    %3363 = vmatpush.bf16.msra.mxu0 %v2844
    %3364 = vmatmul.bf16.gmra.mxu0 %v1624
    %v3365 = vpop.f32.mrf.mxu0
    %v3366 = vadd.f32 %v3353, %v3365
    %v3367 = vpop.f32.mrf.mxu0
    %3368 = vdwg.mxu0
    %3369 = vmatpush.bf16.msra.mxu0 %v2709
    %3370 = vmatpush.bf16.msra.mxu0 %v2701
    %3371 = vmatpush.bf16.msra.mxu0 %v2693
    %3372 = vmatpush.bf16.msra.mxu0 %v2685
    %3373 = vmatpush.bf16.msra.mxu0 %v2677
    %3374 = vmatpush.bf16.msra.mxu0 %v2669
    %3375 = vmatpush.bf16.msra.mxu0 %v2661
    %3376 = vmatpush.bf16.msra.mxu0 %v2653
    %3377 = vmatmul.bf16.gmra.mxu0 %v1621
    %v3378 = vpop.f32.mrf.mxu0
    %v3379 = vadd.f32 0.0, %v3378
    %v3380 = vpop.f32.mrf.mxu0
    %3381 = vdwg.mxu0
    %3382 = vmatpush.bf16.msra.mxu0 %v2773
    %3383 = vmatpush.bf16.msra.mxu0 %v2765
    %3384 = vmatpush.bf16.msra.mxu0 %v2757
    %3385 = vmatpush.bf16.msra.mxu0 %v2749
    %3386 = vmatpush.bf16.msra.mxu0 %v2741
    %3387 = vmatpush.bf16.msra.mxu0 %v2733
    %3388 = vmatpush.bf16.msra.mxu0 %v2725
    %3389 = vmatpush.bf16.msra.mxu0 %v2717
    %3390 = vmatmul.bf16.gmra.mxu0 %v1622
    %v3391 = vpop.f32.mrf.mxu0
    %v3392 = vadd.f32 %v3379, %v3391
    %v3393 = vpop.f32.mrf.mxu0
    %3394 = vdwg.mxu0
    %3395 = vmatpush.bf16.msra.mxu0 %v2837
    %3396 = vmatpush.bf16.msra.mxu0 %v2829
    %3397 = vmatpush.bf16.msra.mxu0 %v2821
    %3398 = vmatpush.bf16.msra.mxu0 %v2813
    %3399 = vmatpush.bf16.msra.mxu0 %v2805
    %3400 = vmatpush.bf16.msra.mxu0 %v2797
    %3401 = vmatpush.bf16.msra.mxu0 %v2789
    %3402 = vmatpush.bf16.msra.mxu0 %v2781
    %3403 = vmatmul.bf16.gmra.mxu0 %v1623
    %v3404 = vpop.f32.mrf.mxu0
    %v3405 = vadd.f32 %v3392, %v3404
    %v3406 = vpop.f32.mrf.mxu0
    %3407 = vdwg.mxu0
    %3408 = vmatpush.bf16.msra.mxu0 %v2901
    %3409 = vmatpush.bf16.msra.mxu0 %v2893
    %3410 = vmatpush.bf16.msra.mxu0 %v2885
    %3411 = vmatpush.bf16.msra.mxu0 %v2877
    %3412 = vmatpush.bf16.msra.mxu0 %v2869
    %3413 = vmatpush.bf16.msra.mxu0 %v2861
    %3414 = vmatpush.bf16.msra.mxu0 %v2853
    %3415 = vmatpush.bf16.msra.mxu0 %v2845
    %3416 = vmatmul.bf16.gmra.mxu0 %v1624
    %v3417 = vpop.f32.mrf.mxu0
    %v3418 = vadd.f32 %v3405, %v3417
    %v3419 = vpop.f32.mrf.mxu0
    %3420 = vdwg.mxu0
    %3421 = vmatpush.bf16.msra.mxu0 %v2710
    %3422 = vmatpush.bf16.msra.mxu0 %v2702
    %3423 = vmatpush.bf16.msra.mxu0 %v2694
    %3424 = vmatpush.bf16.msra.mxu0 %v2686
    %3425 = vmatpush.bf16.msra.mxu0 %v2678
    %3426 = vmatpush.bf16.msra.mxu0 %v2670
    %3427 = vmatpush.bf16.msra.mxu0 %v2662
    %3428 = vmatpush.bf16.msra.mxu0 %v2654
    %3429 = vmatmul.bf16.gmra.mxu0 %v1621
    %v3430 = vpop.f32.mrf.mxu0
    %v3431 = vadd.f32 0.0, %v3430
    %v3432 = vpop.f32.mrf.mxu0
    %3433 = vdwg.mxu0
    %3434 = vmatpush.bf16.msra.mxu0 %v2774
    %3435 = vmatpush.bf16.msra.mxu0 %v2766
    %3436 = vmatpush.bf16.msra.mxu0 %v2758
    %3437 = vmatpush.bf16.msra.mxu0 %v2750
    %3438 = vmatpush.bf16.msra.mxu0 %v2742
    %3439 = vmatpush.bf16.msra.mxu0 %v2734
    %3440 = vmatpush.bf16.msra.mxu0 %v2726
    %3441 = vmatpush.bf16.msra.mxu0 %v2718
    %3442 = vmatmul.bf16.gmra.mxu0 %v1622
    %v3443 = vpop.f32.mrf.mxu0
    %v3444 = vadd.f32 %v3431, %v3443
    %v3445 = vpop.f32.mrf.mxu0
    %3446 = vdwg.mxu0
    %3447 = vmatpush.bf16.msra.mxu0 %v2838
    %3448 = vmatpush.bf16.msra.mxu0 %v2830
    %3449 = vmatpush.bf16.msra.mxu0 %v2822
    %3450 = vmatpush.bf16.msra.mxu0 %v2814
    %3451 = vmatpush.bf16.msra.mxu0 %v2806
    %3452 = vmatpush.bf16.msra.mxu0 %v2798
    %3453 = vmatpush.bf16.msra.mxu0 %v2790
    %3454 = vmatpush.bf16.msra.mxu0 %v2782
    %3455 = vmatmul.bf16.gmra.mxu0 %v1623
    %v3456 = vpop.f32.mrf.mxu0
    %v3457 = vadd.f32 %v3444, %v3456
    %v3458 = vpop.f32.mrf.mxu0
    %3459 = vdwg.mxu0
    %3460 = vmatpush.bf16.msra.mxu0 %v2902
    %3461 = vmatpush.bf16.msra.mxu0 %v2894
    %3462 = vmatpush.bf16.msra.mxu0 %v2886
    %3463 = vmatpush.bf16.msra.mxu0 %v2878
    %3464 = vmatpush.bf16.msra.mxu0 %v2870
    %3465 = vmatpush.bf16.msra.mxu0 %v2862
    %3466 = vmatpush.bf16.msra.mxu0 %v2854
    %3467 = vmatpush.bf16.msra.mxu0 %v2846
    %3468 = vmatmul.bf16.gmra.mxu0 %v1624
    %v3469 = vpop.f32.mrf.mxu0
    %v3470 = vadd.f32 %v3457, %v3469
    %v3471 = vpop.f32.mrf.mxu0
    %3472 = vdwg.mxu0
    %3473 = vmatpush.bf16.msra.mxu0 %v2711
    %3474 = vmatpush.bf16.msra.mxu0 %v2703
    %3475 = vmatpush.bf16.msra.mxu0 %v2695
    %3476 = vmatpush.bf16.msra.mxu0 %v2687
    %3477 = vmatpush.bf16.msra.mxu0 %v2679
    %3478 = vmatpush.bf16.msra.mxu0 %v2671
    %3479 = vmatpush.bf16.msra.mxu0 %v2663
    %3480 = vmatpush.bf16.msra.mxu0 %v2655
    %3481 = vmatmul.bf16.gmra.mxu0 %v1621
    %v3482 = vpop.f32.mrf.mxu0
    %v3483 = vadd.f32 0.0, %v3482
    %v3484 = vpop.f32.mrf.mxu0
    %3485 = vdwg.mxu0
    %3486 = vmatpush.bf16.msra.mxu0 %v2775
    %3487 = vmatpush.bf16.msra.mxu0 %v2767
    %3488 = vmatpush.bf16.msra.mxu0 %v2759
    %3489 = vmatpush.bf16.msra.mxu0 %v2751
    %3490 = vmatpush.bf16.msra.mxu0 %v2743
    %3491 = vmatpush.bf16.msra.mxu0 %v2735
    %3492 = vmatpush.bf16.msra.mxu0 %v2727
    %3493 = vmatpush.bf16.msra.mxu0 %v2719
    %3494 = vmatmul.bf16.gmra.mxu0 %v1622
    %v3495 = vpop.f32.mrf.mxu0
    %v3496 = vadd.f32 %v3483, %v3495
    %v3497 = vpop.f32.mrf.mxu0
    %3498 = vdwg.mxu0
    %3499 = vmatpush.bf16.msra.mxu0 %v2839
    %3500 = vmatpush.bf16.msra.mxu0 %v2831
    %3501 = vmatpush.bf16.msra.mxu0 %v2823
    %3502 = vmatpush.bf16.msra.mxu0 %v2815
    %3503 = vmatpush.bf16.msra.mxu0 %v2807
    %3504 = vmatpush.bf16.msra.mxu0 %v2799
    %3505 = vmatpush.bf16.msra.mxu0 %v2791
    %3506 = vmatpush.bf16.msra.mxu0 %v2783
    %3507 = vmatmul.bf16.gmra.mxu0 %v1623
    %v3508 = vpop.f32.mrf.mxu0
    %v3509 = vadd.f32 %v3496, %v3508
    %v3510 = vpop.f32.mrf.mxu0
    %3511 = vdwg.mxu0
    %3512 = vmatpush.bf16.msra.mxu0 %v2903
    %3513 = vmatpush.bf16.msra.mxu0 %v2895
    %3514 = vmatpush.bf16.msra.mxu0 %v2887
    %3515 = vmatpush.bf16.msra.mxu0 %v2879
    %3516 = vmatpush.bf16.msra.mxu0 %v2871
    %3517 = vmatpush.bf16.msra.mxu0 %v2863
    %3518 = vmatpush.bf16.msra.mxu0 %v2855
    %3519 = vmatpush.bf16.msra.mxu0 %v2847
    %3520 = vmatmul.bf16.gmra.mxu0 %v1624
    %v3521 = vpop.f32.mrf.mxu0
    %v3522 = vadd.f32 %v3509, %v3521
    %v3523 = vpop.f32.mrf.mxu0
    %3524 = vdwg.mxu0
    %3525 = vmatpush.bf16.msra.mxu0 %v2712
    %3526 = vmatpush.bf16.msra.mxu0 %v2704
    %3527 = vmatpush.bf16.msra.mxu0 %v2696
    %3528 = vmatpush.bf16.msra.mxu0 %v2688
    %3529 = vmatpush.bf16.msra.mxu0 %v2680
    %3530 = vmatpush.bf16.msra.mxu0 %v2672
    %3531 = vmatpush.bf16.msra.mxu0 %v2664
    %3532 = vmatpush.bf16.msra.mxu0 %v2656
    %3533 = vmatmul.bf16.gmra.mxu0 %v1621
    %v3534 = vpop.f32.mrf.mxu0
    %v3535 = vadd.f32 0.0, %v3534
    %v3536 = vpop.f32.mrf.mxu0
    %3537 = vdwg.mxu0
    %3538 = vmatpush.bf16.msra.mxu0 %v2776
    %3539 = vmatpush.bf16.msra.mxu0 %v2768
    %3540 = vmatpush.bf16.msra.mxu0 %v2760
    %3541 = vmatpush.bf16.msra.mxu0 %v2752
    %3542 = vmatpush.bf16.msra.mxu0 %v2744
    %3543 = vmatpush.bf16.msra.mxu0 %v2736
    %3544 = vmatpush.bf16.msra.mxu0 %v2728
    %3545 = vmatpush.bf16.msra.mxu0 %v2720
    %3546 = vmatmul.bf16.gmra.mxu0 %v1622
    %v3547 = vpop.f32.mrf.mxu0
    %v3548 = vadd.f32 %v3535, %v3547
    %v3549 = vpop.f32.mrf.mxu0
    %3550 = vdwg.mxu0
    %3551 = vmatpush.bf16.msra.mxu0 %v2840
    %3552 = vmatpush.bf16.msra.mxu0 %v2832
    %3553 = vmatpush.bf16.msra.mxu0 %v2824
    %3554 = vmatpush.bf16.msra.mxu0 %v2816
    %3555 = vmatpush.bf16.msra.mxu0 %v2808
    %3556 = vmatpush.bf16.msra.mxu0 %v2800
    %3557 = vmatpush.bf16.msra.mxu0 %v2792
    %3558 = vmatpush.bf16.msra.mxu0 %v2784
    %3559 = vmatmul.bf16.gmra.mxu0 %v1623
    %v3560 = vpop.f32.mrf.mxu0
    %v3561 = vadd.f32 %v3548, %v3560
    %v3562 = vpop.f32.mrf.mxu0
    %3563 = vdwg.mxu0
    %3564 = vmatpush.bf16.msra.mxu0 %v2904
    %3565 = vmatpush.bf16.msra.mxu0 %v2896
    %3566 = vmatpush.bf16.msra.mxu0 %v2888
    %3567 = vmatpush.bf16.msra.mxu0 %v2880
    %3568 = vmatpush.bf16.msra.mxu0 %v2872
    %3569 = vmatpush.bf16.msra.mxu0 %v2864
    %3570 = vmatpush.bf16.msra.mxu0 %v2856
    %3571 = vmatpush.bf16.msra.mxu0 %v2848
    %3572 = vmatmul.bf16.gmra.mxu0 %v1624
    %v3573 = vpop.f32.mrf.mxu0
    %v3574 = vadd.f32 %v3561, %v3573
    %v3575 = vpop.f32.mrf.mxu0
    %3576 = vdwg.mxu0
    %v3577 = vadd.f32 %v1378, %v3210
    %v3578 = vadd.f32 %v1392, %v3262
    %v3579 = vadd.f32 %v1406, %v3314
    %v3580 = vadd.f32 %v1420, %v3366
    %v3581 = vxor.u32 %v3577, 2147483648
    %v3582 = vxor.u32 %v3578, 2147483648
    %v3583 = vxor.u32 %v3579, 2147483648
    %v3584 = vxor.u32 %v3580, 2147483648
    %v3585 = vmul.f32 %v3581, 1.442695
    %v3586 = vpow.pop %v3585
    %v3587 = vmul.f32 %v3582, 1.442695
    %v3588 = vpow.pop %v3587
    %v3589 = vmul.f32 %v3583, 1.442695
    %v3590 = vpow.pop %v3589
    %v3591 = vmul.f32 %v3584, 1.442695
    %v3592 = vpow.pop %v3591
    %v3593 = vadd.f32 %v3586, 1.0
    %v3594 = vadd.f32 %v3588, 1.0
    %v3595 = vadd.f32 %v3590, 1.0
    %v3596 = vadd.f32 %v3592, 1.0
    %v3597 = vrcp.pop %v3593
    %v3598 = vmul.f32 %v3593, %v3597
    %v3599 = vsub.f32 1.0, %v3598
    %v3600 = vmul.f32 %v3597, %v3599
    %v3601 = vadd.f32 %v3597, %v3600
    %vm3602 = vweird.f32 %v3593
    %vm3603 = vweird.f32 %v3597
    %vm3604 = vmor %vm3602, %vm3603
    %v3605 = vsel %vm3604, %v3597, %v3601
    %v3606 = vand.u32 2147483647, %v3593
    %vm3607 = vcmp.eq.f32.partialorder %v3606, 8.507059e+37
    %v3608 = vand.u32 %v3593, 2147483648
    %v3609 = vor.u32 1.1754944e-38, %v3608
    %v3610 = vsel %vm3607, %v3609, %v3605
    %v3611 = vmul.f32 1.0, %v3610
    %v3612 = vrcp.pop %v3594
    %v3613 = vmul.f32 %v3594, %v3612
    %v3614 = vsub.f32 1.0, %v3613
    %v3615 = vmul.f32 %v3612, %v3614
    %v3616 = vadd.f32 %v3612, %v3615
    %vm3617 = vweird.f32 %v3594
    %vm3618 = vweird.f32 %v3612
    %vm3619 = vmor %vm3617, %vm3618
    %v3620 = vsel %vm3619, %v3612, %v3616
    %v3621 = vand.u32 2147483647, %v3594
    %vm3622 = vcmp.eq.f32.partialorder %v3621, 8.507059e+37
    %v3623 = vand.u32 %v3594, 2147483648
    %v3624 = vor.u32 1.1754944e-38, %v3623
    %v3625 = vsel %vm3622, %v3624, %v3620
    %v3626 = vmul.f32 1.0, %v3625
    %v3627 = vrcp.pop %v3595
    %v3628 = vmul.f32 %v3595, %v3627
    %v3629 = vsub.f32 1.0, %v3628
    %v3630 = vmul.f32 %v3627, %v3629
    %v3631 = vadd.f32 %v3627, %v3630
    %vm3632 = vweird.f32 %v3595
    %vm3633 = vweird.f32 %v3627
    %vm3634 = vmor %vm3632, %vm3633
    %v3635 = vsel %vm3634, %v3627, %v3631
    %v3636 = vand.u32 2147483647, %v3595
    %vm3637 = vcmp.eq.f32.partialorder %v3636, 8.507059e+37
    %v3638 = vand.u32 %v3595, 2147483648
    %v3639 = vor.u32 1.1754944e-38, %v3638
    %v3640 = vsel %vm3637, %v3639, %v3635
    %v3641 = vmul.f32 1.0, %v3640
    %v3642 = vrcp.pop %v3596
    %v3643 = vmul.f32 %v3596, %v3642
    %v3644 = vsub.f32 1.0, %v3643
    %v3645 = vmul.f32 %v3642, %v3644
    %v3646 = vadd.f32 %v3642, %v3645
    %vm3647 = vweird.f32 %v3596
    %vm3648 = vweird.f32 %v3642
    %vm3649 = vmor %vm3647, %vm3648
    %v3650 = vsel %vm3649, %v3642, %v3646
    %v3651 = vand.u32 2147483647, %v3596
    %vm3652 = vcmp.eq.f32.partialorder %v3651, 8.507059e+37
    %v3653 = vand.u32 %v3596, 2147483648
    %v3654 = vor.u32 1.1754944e-38, %v3653
    %v3655 = vsel %vm3652, %v3654, %v3650
    %v3656 = vmul.f32 1.0, %v3655
    %v3657 = vadd.f32 %v1433, %v3418
    %v3658 = vadd.f32 %v1446, %v3470
    %v3659 = vadd.f32 %v1459, %v3522
    %v3660 = vadd.f32 %v1472, %v3574
    %v3661 = vxor.u32 %v3657, 2147483648
    %v3662 = vxor.u32 %v3658, 2147483648
    %v3663 = vxor.u32 %v3659, 2147483648
    %v3664 = vxor.u32 %v3660, 2147483648
    %v3665 = vmul.f32 %v3661, 1.442695
    %v3666 = vpow.pop %v3665
    %v3667 = vmul.f32 %v3662, 1.442695
    %v3668 = vpow.pop %v3667
    %v3669 = vmul.f32 %v3663, 1.442695
    %v3670 = vpow.pop %v3669
    %v3671 = vmul.f32 %v3664, 1.442695
    %v3672 = vpow.pop %v3671
    %v3673 = vadd.f32 %v3666, 1.0
    %v3674 = vadd.f32 %v3668, 1.0
    %v3675 = vadd.f32 %v3670, 1.0
    %v3676 = vadd.f32 %v3672, 1.0
    %v3677 = vrcp.pop %v3673
    %v3678 = vmul.f32 %v3673, %v3677
    %v3679 = vsub.f32 1.0, %v3678
    %v3680 = vmul.f32 %v3677, %v3679
    %v3681 = vadd.f32 %v3677, %v3680
    %vm3682 = vweird.f32 %v3673
    %vm3683 = vweird.f32 %v3677
    %vm3684 = vmor %vm3682, %vm3683
    %v3685 = vsel %vm3684, %v3677, %v3681
    %v3686 = vand.u32 2147483647, %v3673
    %vm3687 = vcmp.eq.f32.partialorder %v3686, 8.507059e+37
    %v3688 = vand.u32 %v3673, 2147483648
    %v3689 = vor.u32 1.1754944e-38, %v3688
    %v3690 = vsel %vm3687, %v3689, %v3685
    %v3691 = vmul.f32 1.0, %v3690
    %v3692 = vrcp.pop %v3674
    %v3693 = vmul.f32 %v3674, %v3692
    %v3694 = vsub.f32 1.0, %v3693
    %v3695 = vmul.f32 %v3692, %v3694
    %v3696 = vadd.f32 %v3692, %v3695
    %vm3697 = vweird.f32 %v3674
    %vm3698 = vweird.f32 %v3692
    %vm3699 = vmor %vm3697, %vm3698
    %v3700 = vsel %vm3699, %v3692, %v3696
    %v3701 = vand.u32 2147483647, %v3674
    %vm3702 = vcmp.eq.f32.partialorder %v3701, 8.507059e+37
    %v3703 = vand.u32 %v3674, 2147483648
    %v3704 = vor.u32 1.1754944e-38, %v3703
    %v3705 = vsel %vm3702, %v3704, %v3700
    %v3706 = vmul.f32 1.0, %v3705
    %v3707 = vrcp.pop %v3675
    %v3708 = vmul.f32 %v3675, %v3707
    %v3709 = vsub.f32 1.0, %v3708
    %v3710 = vmul.f32 %v3707, %v3709
    %v3711 = vadd.f32 %v3707, %v3710
    %vm3712 = vweird.f32 %v3675
    %vm3713 = vweird.f32 %v3707
    %vm3714 = vmor %vm3712, %vm3713
    %v3715 = vsel %vm3714, %v3707, %v3711
    %v3716 = vand.u32 2147483647, %v3675
    %vm3717 = vcmp.eq.f32.partialorder %v3716, 8.507059e+37
    %v3718 = vand.u32 %v3675, 2147483648
    %v3719 = vor.u32 1.1754944e-38, %v3718
    %v3720 = vsel %vm3717, %v3719, %v3715
    %v3721 = vmul.f32 1.0, %v3720
    %v3722 = vrcp.pop %v3676
    %v3723 = vmul.f32 %v3676, %v3722
    %v3724 = vsub.f32 1.0, %v3723
    %v3725 = vmul.f32 %v3722, %v3724
    %v3726 = vadd.f32 %v3722, %v3725
    %vm3727 = vweird.f32 %v3676
    %vm3728 = vweird.f32 %v3722
    %vm3729 = vmor %vm3727, %vm3728
    %v3730 = vsel %vm3729, %v3722, %v3726
    %v3731 = vand.u32 2147483647, %v3676
    %vm3732 = vcmp.eq.f32.partialorder %v3731, 8.507059e+37
    %v3733 = vand.u32 %v3676, 2147483648
    %v3734 = vor.u32 1.1754944e-38, %v3733
    %v3735 = vsel %vm3732, %v3734, %v3730
    %v3736 = vmul.f32 1.0, %v3735
    %v3737 = vmul.f32 %v3691, %v1610
    %v3738 = vmul.f32 %v3706, %v1611
    %v3739 = vmul.f32 %v3721, %v1612
    %v3740 = vmul.f32 %v3736, %v1613
    %v3741 = vpack.c.bf16 %v3737, %v3737
    %v3742 = vpack.c.bf16 %v3738, %v3738
    %v3743 = vpack.c.bf16 %v3739, %v3739
    %v3744 = vpack.c.bf16 %v3740, %v3740
    %v3745 = vld [vmem:[#allocation3] sm:$0xff]
    %v3746 = vld [vmem:[#allocation3 + $0x8] sm:$0xff]
    %v3747 = vld [vmem:[#allocation3 + $0x10] sm:$0xff]
    %v3748 = vld [vmem:[#allocation3 + $0x18] sm:$0xff]
    %v3749 = vld [vmem:[#allocation3 + $0x20] sm:$0xff]
    %v3750 = vld [vmem:[#allocation3 + $0x28] sm:$0xff]
    %v3751 = vld [vmem:[#allocation3 + $0x30] sm:$0xff]
    %v3752 = vld [vmem:[#allocation3 + $0x38] sm:$0xff]
    %v3753 = vld [vmem:[#allocation3 + $0x40] sm:$0xff]
    %v3754 = vld [vmem:[#allocation3 + $0x48] sm:$0xff]
    %v3755 = vld [vmem:[#allocation3 + $0x50] sm:$0xff]
    %v3756 = vld [vmem:[#allocation3 + $0x58] sm:$0xff]
    %v3757 = vld [vmem:[#allocation3 + $0x60] sm:$0xff]
    %v3758 = vld [vmem:[#allocation3 + $0x68] sm:$0xff]
    %v3759 = vld [vmem:[#allocation3 + $0x70] sm:$0xff]
    %v3760 = vld [vmem:[#allocation3 + $0x78] sm:$0xff]
    %v3761 = vld [vmem:[#allocation3 + $0x80] sm:$0xff]
    %v3762 = vld [vmem:[#allocation3 + $0x88] sm:$0xff]
    %v3763 = vld [vmem:[#allocation3 + $0x90] sm:$0xff]
    %v3764 = vld [vmem:[#allocation3 + $0x98] sm:$0xff]
    %v3765 = vld [vmem:[#allocation3 + $0xa0] sm:$0xff]
    %v3766 = vld [vmem:[#allocation3 + $0xa8] sm:$0xff]
    %v3767 = vld [vmem:[#allocation3 + $0xb0] sm:$0xff]
    %v3768 = vld [vmem:[#allocation3 + $0xb8] sm:$0xff]
    %v3769 = vld [vmem:[#allocation3 + $0xc0] sm:$0xff]
    %v3770 = vld [vmem:[#allocation3 + $0xc8] sm:$0xff]
    %v3771 = vld [vmem:[#allocation3 + $0xd0] sm:$0xff]
    %v3772 = vld [vmem:[#allocation3 + $0xd8] sm:$0xff]
    %v3773 = vld [vmem:[#allocation3 + $0xe0] sm:$0xff]
    %v3774 = vld [vmem:[#allocation3 + $0xe8] sm:$0xff]
    %v3775 = vld [vmem:[#allocation3 + $0xf0] sm:$0xff]
    %v3776 = vld [vmem:[#allocation3 + $0xf8] sm:$0xff]
    %v3777 = vld [vmem:[#allocation3 + $0x100] sm:$0xff]
    %v3778 = vld [vmem:[#allocation3 + $0x108] sm:$0xff]
    %v3779 = vld [vmem:[#allocation3 + $0x110] sm:$0xff]
    %v3780 = vld [vmem:[#allocation3 + $0x118] sm:$0xff]
    %v3781 = vld [vmem:[#allocation3 + $0x120] sm:$0xff]
    %v3782 = vld [vmem:[#allocation3 + $0x128] sm:$0xff]
    %v3783 = vld [vmem:[#allocation3 + $0x130] sm:$0xff]
    %v3784 = vld [vmem:[#allocation3 + $0x138] sm:$0xff]
    %v3785 = vld [vmem:[#allocation3 + $0x140] sm:$0xff]
    %v3786 = vld [vmem:[#allocation3 + $0x148] sm:$0xff]
    %v3787 = vld [vmem:[#allocation3 + $0x150] sm:$0xff]
    %v3788 = vld [vmem:[#allocation3 + $0x158] sm:$0xff]
    %v3789 = vld [vmem:[#allocation3 + $0x160] sm:$0xff]
    %v3790 = vld [vmem:[#allocation3 + $0x168] sm:$0xff]
    %v3791 = vld [vmem:[#allocation3 + $0x170] sm:$0xff]
    %v3792 = vld [vmem:[#allocation3 + $0x178] sm:$0xff]
    %v3793 = vld [vmem:[#allocation3 + $0x180] sm:$0xff]
    %v3794 = vld [vmem:[#allocation3 + $0x188] sm:$0xff]
    %v3795 = vld [vmem:[#allocation3 + $0x190] sm:$0xff]
    %v3796 = vld [vmem:[#allocation3 + $0x198] sm:$0xff]
    %v3797 = vld [vmem:[#allocation3 + $0x1a0] sm:$0xff]
    %v3798 = vld [vmem:[#allocation3 + $0x1a8] sm:$0xff]
    %v3799 = vld [vmem:[#allocation3 + $0x1b0] sm:$0xff]
    %v3800 = vld [vmem:[#allocation3 + $0x1b8] sm:$0xff]
    %v3801 = vld [vmem:[#allocation3 + $0x1c0] sm:$0xff]
    %v3802 = vld [vmem:[#allocation3 + $0x1c8] sm:$0xff]
    %v3803 = vld [vmem:[#allocation3 + $0x1d0] sm:$0xff]
    %v3804 = vld [vmem:[#allocation3 + $0x1d8] sm:$0xff]
    %v3805 = vld [vmem:[#allocation3 + $0x1e0] sm:$0xff]
    %v3806 = vld [vmem:[#allocation3 + $0x1e8] sm:$0xff]
    %v3807 = vld [vmem:[#allocation3 + $0x1f0] sm:$0xff]
    %v3808 = vld [vmem:[#allocation3 + $0x1f8] sm:$0xff]
    %v3809 = vld [vmem:[#allocation3 + $0x200] sm:$0xff]
    %v3810 = vld [vmem:[#allocation3 + $0x208] sm:$0xff]
    %v3811 = vld [vmem:[#allocation3 + $0x210] sm:$0xff]
    %v3812 = vld [vmem:[#allocation3 + $0x218] sm:$0xff]
    %v3813 = vld [vmem:[#allocation3 + $0x220] sm:$0xff]
    %v3814 = vld [vmem:[#allocation3 + $0x228] sm:$0xff]
    %v3815 = vld [vmem:[#allocation3 + $0x230] sm:$0xff]
    %v3816 = vld [vmem:[#allocation3 + $0x238] sm:$0xff]
    %v3817 = vld [vmem:[#allocation3 + $0x240] sm:$0xff]
    %v3818 = vld [vmem:[#allocation3 + $0x248] sm:$0xff]
    %v3819 = vld [vmem:[#allocation3 + $0x250] sm:$0xff]
    %v3820 = vld [vmem:[#allocation3 + $0x258] sm:$0xff]
    %v3821 = vld [vmem:[#allocation3 + $0x260] sm:$0xff]
    %v3822 = vld [vmem:[#allocation3 + $0x268] sm:$0xff]
    %v3823 = vld [vmem:[#allocation3 + $0x270] sm:$0xff]
    %v3824 = vld [vmem:[#allocation3 + $0x278] sm:$0xff]
    %v3825 = vld [vmem:[#allocation3 + $0x280] sm:$0xff]
    %v3826 = vld [vmem:[#allocation3 + $0x288] sm:$0xff]
    %v3827 = vld [vmem:[#allocation3 + $0x290] sm:$0xff]
    %v3828 = vld [vmem:[#allocation3 + $0x298] sm:$0xff]
    %v3829 = vld [vmem:[#allocation3 + $0x2a0] sm:$0xff]
    %v3830 = vld [vmem:[#allocation3 + $0x2a8] sm:$0xff]
    %v3831 = vld [vmem:[#allocation3 + $0x2b0] sm:$0xff]
    %v3832 = vld [vmem:[#allocation3 + $0x2b8] sm:$0xff]
    %v3833 = vld [vmem:[#allocation3 + $0x2c0] sm:$0xff]
    %v3834 = vld [vmem:[#allocation3 + $0x2c8] sm:$0xff]
    %v3835 = vld [vmem:[#allocation3 + $0x2d0] sm:$0xff]
    %v3836 = vld [vmem:[#allocation3 + $0x2d8] sm:$0xff]
    %v3837 = vld [vmem:[#allocation3 + $0x2e0] sm:$0xff]
    %v3838 = vld [vmem:[#allocation3 + $0x2e8] sm:$0xff]
    %v3839 = vld [vmem:[#allocation3 + $0x2f0] sm:$0xff]
    %v3840 = vld [vmem:[#allocation3 + $0x2f8] sm:$0xff]
    %v3841 = vld [vmem:[#allocation3 + $0x300] sm:$0xff]
    %v3842 = vld [vmem:[#allocation3 + $0x308] sm:$0xff]
    %v3843 = vld [vmem:[#allocation3 + $0x310] sm:$0xff]
    %v3844 = vld [vmem:[#allocation3 + $0x318] sm:$0xff]
    %v3845 = vld [vmem:[#allocation3 + $0x320] sm:$0xff]
    %v3846 = vld [vmem:[#allocation3 + $0x328] sm:$0xff]
    %v3847 = vld [vmem:[#allocation3 + $0x330] sm:$0xff]
    %v3848 = vld [vmem:[#allocation3 + $0x338] sm:$0xff]
    %v3849 = vld [vmem:[#allocation3 + $0x340] sm:$0xff]
    %v3850 = vld [vmem:[#allocation3 + $0x348] sm:$0xff]
    %v3851 = vld [vmem:[#allocation3 + $0x350] sm:$0xff]
    %v3852 = vld [vmem:[#allocation3 + $0x358] sm:$0xff]
    %v3853 = vld [vmem:[#allocation3 + $0x360] sm:$0xff]
    %v3854 = vld [vmem:[#allocation3 + $0x368] sm:$0xff]
    %v3855 = vld [vmem:[#allocation3 + $0x370] sm:$0xff]
    %v3856 = vld [vmem:[#allocation3 + $0x378] sm:$0xff]
    %v3857 = vld [vmem:[#allocation3 + $0x380] sm:$0xff]
    %v3858 = vld [vmem:[#allocation3 + $0x388] sm:$0xff]
    %v3859 = vld [vmem:[#allocation3 + $0x390] sm:$0xff]
    %v3860 = vld [vmem:[#allocation3 + $0x398] sm:$0xff]
    %v3861 = vld [vmem:[#allocation3 + $0x3a0] sm:$0xff]
    %v3862 = vld [vmem:[#allocation3 + $0x3a8] sm:$0xff]
    %v3863 = vld [vmem:[#allocation3 + $0x3b0] sm:$0xff]
    %v3864 = vld [vmem:[#allocation3 + $0x3b8] sm:$0xff]
    %v3865 = vld [vmem:[#allocation3 + $0x3c0] sm:$0xff]
    %v3866 = vld [vmem:[#allocation3 + $0x3c8] sm:$0xff]
    %v3867 = vld [vmem:[#allocation3 + $0x3d0] sm:$0xff]
    %v3868 = vld [vmem:[#allocation3 + $0x3d8] sm:$0xff]
    %v3869 = vld [vmem:[#allocation3 + $0x3e0] sm:$0xff]
    %v3870 = vld [vmem:[#allocation3 + $0x3e8] sm:$0xff]
    %v3871 = vld [vmem:[#allocation3 + $0x3f0] sm:$0xff]
    %v3872 = vld [vmem:[#allocation3 + $0x3f8] sm:$0xff]
    %v4001 = vunpack.c.l.b16 %v3745
    %v4002 = vunpack.c.h.b16 %v3745
    %v4003 = vunpack.c.l.b16 %v3746
    %v4004 = vunpack.c.h.b16 %v3746
    %v4005 = vunpack.c.l.b16 %v3747
    %v4006 = vunpack.c.h.b16 %v3747
    %v4007 = vunpack.c.l.b16 %v3748
    %v4008 = vunpack.c.h.b16 %v3748
    %v4009 = vunpack.c.l.b16 %v3749
    %v4010 = vunpack.c.h.b16 %v3749
    %v4011 = vunpack.c.l.b16 %v3750
    %v4012 = vunpack.c.h.b16 %v3750
    %v4013 = vunpack.c.l.b16 %v3751
    %v4014 = vunpack.c.h.b16 %v3751
    %v4015 = vunpack.c.l.b16 %v3752
    %v4016 = vunpack.c.h.b16 %v3752
    %v4017 = vunpack.c.l.b16 %v3753
    %v4018 = vunpack.c.h.b16 %v3753
    %v4019 = vunpack.c.l.b16 %v3754
    %v4020 = vunpack.c.h.b16 %v3754
    %v4021 = vunpack.c.l.b16 %v3755
    %v4022 = vunpack.c.h.b16 %v3755
    %v4023 = vunpack.c.l.b16 %v3756
    %v4024 = vunpack.c.h.b16 %v3756
    %v4025 = vunpack.c.l.b16 %v3757
    %v4026 = vunpack.c.h.b16 %v3757
    %v4027 = vunpack.c.l.b16 %v3758
    %v4028 = vunpack.c.h.b16 %v3758
    %v4029 = vunpack.c.l.b16 %v3759
    %v4030 = vunpack.c.h.b16 %v3759
    %v4031 = vunpack.c.l.b16 %v3760
    %v4032 = vunpack.c.h.b16 %v3760
    %v4033 = vunpack.c.l.b16 %v3761
    %v4034 = vunpack.c.h.b16 %v3761
    %v4035 = vunpack.c.l.b16 %v3762
    %v4036 = vunpack.c.h.b16 %v3762
    %v4037 = vunpack.c.l.b16 %v3763
    %v4038 = vunpack.c.h.b16 %v3763
    %v4039 = vunpack.c.l.b16 %v3764
    %v4040 = vunpack.c.h.b16 %v3764
    %v4041 = vunpack.c.l.b16 %v3765
    %v4042 = vunpack.c.h.b16 %v3765
    %v4043 = vunpack.c.l.b16 %v3766
    %v4044 = vunpack.c.h.b16 %v3766
    %v4045 = vunpack.c.l.b16 %v3767
    %v4046 = vunpack.c.h.b16 %v3767
    %v4047 = vunpack.c.l.b16 %v3768
    %v4048 = vunpack.c.h.b16 %v3768
    %v4049 = vunpack.c.l.b16 %v3769
    %v4050 = vunpack.c.h.b16 %v3769
    %v4051 = vunpack.c.l.b16 %v3770
    %v4052 = vunpack.c.h.b16 %v3770
    %v4053 = vunpack.c.l.b16 %v3771
    %v4054 = vunpack.c.h.b16 %v3771
    %v4055 = vunpack.c.l.b16 %v3772
    %v4056 = vunpack.c.h.b16 %v3772
    %v4057 = vunpack.c.l.b16 %v3773
    %v4058 = vunpack.c.h.b16 %v3773
    %v4059 = vunpack.c.l.b16 %v3774
    %v4060 = vunpack.c.h.b16 %v3774
    %v4061 = vunpack.c.l.b16 %v3775
    %v4062 = vunpack.c.h.b16 %v3775
    %v4063 = vunpack.c.l.b16 %v3776
    %v4064 = vunpack.c.h.b16 %v3776
    %v4065 = vunpack.c.l.b16 %v3777
    %v4066 = vunpack.c.h.b16 %v3777
    %v4067 = vunpack.c.l.b16 %v3778
    %v4068 = vunpack.c.h.b16 %v3778
    %v4069 = vunpack.c.l.b16 %v3779
    %v4070 = vunpack.c.h.b16 %v3779
    %v4071 = vunpack.c.l.b16 %v3780
    %v4072 = vunpack.c.h.b16 %v3780
    %v4073 = vunpack.c.l.b16 %v3781
    %v4074 = vunpack.c.h.b16 %v3781
    %v4075 = vunpack.c.l.b16 %v3782
    %v4076 = vunpack.c.h.b16 %v3782
    %v4077 = vunpack.c.l.b16 %v3783
    %v4078 = vunpack.c.h.b16 %v3783
    %v4079 = vunpack.c.l.b16 %v3784
    %v4080 = vunpack.c.h.b16 %v3784
    %v4081 = vunpack.c.l.b16 %v3785
    %v4082 = vunpack.c.h.b16 %v3785
    %v4083 = vunpack.c.l.b16 %v3786
    %v4084 = vunpack.c.h.b16 %v3786
    %v4085 = vunpack.c.l.b16 %v3787
    %v4086 = vunpack.c.h.b16 %v3787
    %v4087 = vunpack.c.l.b16 %v3788
    %v4088 = vunpack.c.h.b16 %v3788
    %v4089 = vunpack.c.l.b16 %v3789
    %v4090 = vunpack.c.h.b16 %v3789
    %v4091 = vunpack.c.l.b16 %v3790
    %v4092 = vunpack.c.h.b16 %v3790
    %v4093 = vunpack.c.l.b16 %v3791
    %v4094 = vunpack.c.h.b16 %v3791
    %v4095 = vunpack.c.l.b16 %v3792
    %v4096 = vunpack.c.h.b16 %v3792
    %v4097 = vunpack.c.l.b16 %v3793
    %v4098 = vunpack.c.h.b16 %v3793
    %v4099 = vunpack.c.l.b16 %v3794
    %v4100 = vunpack.c.h.b16 %v3794
    %v4101 = vunpack.c.l.b16 %v3795
    %v4102 = vunpack.c.h.b16 %v3795
    %v4103 = vunpack.c.l.b16 %v3796
    %v4104 = vunpack.c.h.b16 %v3796
    %v4105 = vunpack.c.l.b16 %v3797
    %v4106 = vunpack.c.h.b16 %v3797
    %v4107 = vunpack.c.l.b16 %v3798
    %v4108 = vunpack.c.h.b16 %v3798
    %v4109 = vunpack.c.l.b16 %v3799
    %v4110 = vunpack.c.h.b16 %v3799
    %v4111 = vunpack.c.l.b16 %v3800
    %v4112 = vunpack.c.h.b16 %v3800
    %v4113 = vunpack.c.l.b16 %v3801
    %v4114 = vunpack.c.h.b16 %v3801
    %v4115 = vunpack.c.l.b16 %v3802
    %v4116 = vunpack.c.h.b16 %v3802
    %v4117 = vunpack.c.l.b16 %v3803
    %v4118 = vunpack.c.h.b16 %v3803
    %v4119 = vunpack.c.l.b16 %v3804
    %v4120 = vunpack.c.h.b16 %v3804
    %v4121 = vunpack.c.l.b16 %v3805
    %v4122 = vunpack.c.h.b16 %v3805
    %v4123 = vunpack.c.l.b16 %v3806
    %v4124 = vunpack.c.h.b16 %v3806
    %v4125 = vunpack.c.l.b16 %v3807
    %v4126 = vunpack.c.h.b16 %v3807
    %v4127 = vunpack.c.l.b16 %v3808
    %v4128 = vunpack.c.h.b16 %v3808
    %v4129 = vunpack.c.l.b16 %v3809
    %v4130 = vunpack.c.h.b16 %v3809
    %v4131 = vunpack.c.l.b16 %v3810
    %v4132 = vunpack.c.h.b16 %v3810
    %v4133 = vunpack.c.l.b16 %v3811
    %v4134 = vunpack.c.h.b16 %v3811
    %v4135 = vunpack.c.l.b16 %v3812
    %v4136 = vunpack.c.h.b16 %v3812
    %v4137 = vunpack.c.l.b16 %v3813
    %v4138 = vunpack.c.h.b16 %v3813
    %v4139 = vunpack.c.l.b16 %v3814
    %v4140 = vunpack.c.h.b16 %v3814
    %v4141 = vunpack.c.l.b16 %v3815
    %v4142 = vunpack.c.h.b16 %v3815
    %v4143 = vunpack.c.l.b16 %v3816
    %v4144 = vunpack.c.h.b16 %v3816
    %v4145 = vunpack.c.l.b16 %v3817
    %v4146 = vunpack.c.h.b16 %v3817
    %v4147 = vunpack.c.l.b16 %v3818
    %v4148 = vunpack.c.h.b16 %v3818
    %v4149 = vunpack.c.l.b16 %v3819
    %v4150 = vunpack.c.h.b16 %v3819
    %v4151 = vunpack.c.l.b16 %v3820
    %v4152 = vunpack.c.h.b16 %v3820
    %v4153 = vunpack.c.l.b16 %v3821
    %v4154 = vunpack.c.h.b16 %v3821
    %v4155 = vunpack.c.l.b16 %v3822
    %v4156 = vunpack.c.h.b16 %v3822
    %v4157 = vunpack.c.l.b16 %v3823
    %v4158 = vunpack.c.h.b16 %v3823
    %v4159 = vunpack.c.l.b16 %v3824
    %v4160 = vunpack.c.h.b16 %v3824
    %v4161 = vunpack.c.l.b16 %v3825
    %v4162 = vunpack.c.h.b16 %v3825
    %v4163 = vunpack.c.l.b16 %v3826
    %v4164 = vunpack.c.h.b16 %v3826
    %v4165 = vunpack.c.l.b16 %v3827
    %v4166 = vunpack.c.h.b16 %v3827
    %v4167 = vunpack.c.l.b16 %v3828
    %v4168 = vunpack.c.h.b16 %v3828
    %v4169 = vunpack.c.l.b16 %v3829
    %v4170 = vunpack.c.h.b16 %v3829
    %v4171 = vunpack.c.l.b16 %v3830
    %v4172 = vunpack.c.h.b16 %v3830
    %v4173 = vunpack.c.l.b16 %v3831
    %v4174 = vunpack.c.h.b16 %v3831
    %v4175 = vunpack.c.l.b16 %v3832
    %v4176 = vunpack.c.h.b16 %v3832
    %v4177 = vunpack.c.l.b16 %v3833
    %v4178 = vunpack.c.h.b16 %v3833
    %v4179 = vunpack.c.l.b16 %v3834
    %v4180 = vunpack.c.h.b16 %v3834
    %v4181 = vunpack.c.l.b16 %v3835
    %v4182 = vunpack.c.h.b16 %v3835
    %v4183 = vunpack.c.l.b16 %v3836
    %v4184 = vunpack.c.h.b16 %v3836
    %v4185 = vunpack.c.l.b16 %v3837
    %v4186 = vunpack.c.h.b16 %v3837
    %v4187 = vunpack.c.l.b16 %v3838
    %v4188 = vunpack.c.h.b16 %v3838
    %v4189 = vunpack.c.l.b16 %v3839
    %v4190 = vunpack.c.h.b16 %v3839
    %v4191 = vunpack.c.l.b16 %v3840
    %v4192 = vunpack.c.h.b16 %v3840
    %v4193 = vunpack.c.l.b16 %v3841
    %v4194 = vunpack.c.h.b16 %v3841
    %v4195 = vunpack.c.l.b16 %v3842
    %v4196 = vunpack.c.h.b16 %v3842
    %v4197 = vunpack.c.l.b16 %v3843
    %v4198 = vunpack.c.h.b16 %v3843
    %v4199 = vunpack.c.l.b16 %v3844
    %v4200 = vunpack.c.h.b16 %v3844
    %v4201 = vunpack.c.l.b16 %v3845
    %v4202 = vunpack.c.h.b16 %v3845
    %v4203 = vunpack.c.l.b16 %v3846
    %v4204 = vunpack.c.h.b16 %v3846
    %v4205 = vunpack.c.l.b16 %v3847
    %v4206 = vunpack.c.h.b16 %v3847
    %v4207 = vunpack.c.l.b16 %v3848
    %v4208 = vunpack.c.h.b16 %v3848
    %v4209 = vunpack.c.l.b16 %v3849
    %v4210 = vunpack.c.h.b16 %v3849
    %v4211 = vunpack.c.l.b16 %v3850
    %v4212 = vunpack.c.h.b16 %v3850
    %v4213 = vunpack.c.l.b16 %v3851
    %v4214 = vunpack.c.h.b16 %v3851
    %v4215 = vunpack.c.l.b16 %v3852
    %v4216 = vunpack.c.h.b16 %v3852
    %v4217 = vunpack.c.l.b16 %v3853
    %v4218 = vunpack.c.h.b16 %v3853
    %v4219 = vunpack.c.l.b16 %v3854
    %v4220 = vunpack.c.h.b16 %v3854
    %v4221 = vunpack.c.l.b16 %v3855
    %v4222 = vunpack.c.h.b16 %v3855
    %v4223 = vunpack.c.l.b16 %v3856
    %v4224 = vunpack.c.h.b16 %v3856
    %v4225 = vunpack.c.l.b16 %v3857
    %v4226 = vunpack.c.h.b16 %v3857
    %v4227 = vunpack.c.l.b16 %v3858
    %v4228 = vunpack.c.h.b16 %v3858
    %v4229 = vunpack.c.l.b16 %v3859
    %v4230 = vunpack.c.h.b16 %v3859
    %v4231 = vunpack.c.l.b16 %v3860
    %v4232 = vunpack.c.h.b16 %v3860
    %v4233 = vunpack.c.l.b16 %v3861
    %v4234 = vunpack.c.h.b16 %v3861
    %v4235 = vunpack.c.l.b16 %v3862
    %v4236 = vunpack.c.h.b16 %v3862
    %v4237 = vunpack.c.l.b16 %v3863
    %v4238 = vunpack.c.h.b16 %v3863
    %v4239 = vunpack.c.l.b16 %v3864
    %v4240 = vunpack.c.h.b16 %v3864
    %v4241 = vunpack.c.l.b16 %v3865
    %v4242 = vunpack.c.h.b16 %v3865
    %v4243 = vunpack.c.l.b16 %v3866
    %v4244 = vunpack.c.h.b16 %v3866
    %v4245 = vunpack.c.l.b16 %v3867
    %v4246 = vunpack.c.h.b16 %v3867
    %v4247 = vunpack.c.l.b16 %v3868
    %v4248 = vunpack.c.h.b16 %v3868
    %v4249 = vunpack.c.l.b16 %v3869
    %v4250 = vunpack.c.h.b16 %v3869
    %v4251 = vunpack.c.l.b16 %v3870
    %v4252 = vunpack.c.h.b16 %v3870
    %v4253 = vunpack.c.l.b16 %v3871
    %v4254 = vunpack.c.h.b16 %v3871
    %v4255 = vunpack.c.l.b16 %v3872
    %v4256 = vunpack.c.h.b16 %v3872
    %v4257 = vpack.c.b16 %v4005, %v4001
    %v4258 = vpack.c.b16 %v4006, %v4002
    %v4259 = vpack.c.b16 %v4007, %v4003
    %v4260 = vpack.c.b16 %v4008, %v4004
    %v4261 = vpack.c.b16 %v4013, %v4009
    %v4262 = vpack.c.b16 %v4014, %v4010
    %v4263 = vpack.c.b16 %v4015, %v4011
    %v4264 = vpack.c.b16 %v4016, %v4012
    %v4265 = vpack.c.b16 %v4021, %v4017
    %v4266 = vpack.c.b16 %v4022, %v4018
    %v4267 = vpack.c.b16 %v4023, %v4019
    %v4268 = vpack.c.b16 %v4024, %v4020
    %v4269 = vpack.c.b16 %v4029, %v4025
    %v4270 = vpack.c.b16 %v4030, %v4026
    %v4271 = vpack.c.b16 %v4031, %v4027
    %v4272 = vpack.c.b16 %v4032, %v4028
    %v4273 = vpack.c.b16 %v4037, %v4033
    %v4274 = vpack.c.b16 %v4038, %v4034
    %v4275 = vpack.c.b16 %v4039, %v4035
    %v4276 = vpack.c.b16 %v4040, %v4036
    %v4277 = vpack.c.b16 %v4045, %v4041
    %v4278 = vpack.c.b16 %v4046, %v4042
    %v4279 = vpack.c.b16 %v4047, %v4043
    %v4280 = vpack.c.b16 %v4048, %v4044
    %v4281 = vpack.c.b16 %v4053, %v4049
    %v4282 = vpack.c.b16 %v4054, %v4050
    %v4283 = vpack.c.b16 %v4055, %v4051
    %v4284 = vpack.c.b16 %v4056, %v4052
    %v4285 = vpack.c.b16 %v4061, %v4057
    %v4286 = vpack.c.b16 %v4062, %v4058
    %v4287 = vpack.c.b16 %v4063, %v4059
    %v4288 = vpack.c.b16 %v4064, %v4060
    %v4289 = vpack.c.b16 %v4069, %v4065
    %v4290 = vpack.c.b16 %v4070, %v4066
    %v4291 = vpack.c.b16 %v4071, %v4067
    %v4292 = vpack.c.b16 %v4072, %v4068
    %v4293 = vpack.c.b16 %v4077, %v4073
    %v4294 = vpack.c.b16 %v4078, %v4074
    %v4295 = vpack.c.b16 %v4079, %v4075
    %v4296 = vpack.c.b16 %v4080, %v4076
    %v4297 = vpack.c.b16 %v4085, %v4081
    %v4298 = vpack.c.b16 %v4086, %v4082
    %v4299 = vpack.c.b16 %v4087, %v4083
    %v4300 = vpack.c.b16 %v4088, %v4084
    %v4301 = vpack.c.b16 %v4093, %v4089
    %v4302 = vpack.c.b16 %v4094, %v4090
    %v4303 = vpack.c.b16 %v4095, %v4091
    %v4304 = vpack.c.b16 %v4096, %v4092
    %v4305 = vpack.c.b16 %v4101, %v4097
    %v4306 = vpack.c.b16 %v4102, %v4098
    %v4307 = vpack.c.b16 %v4103, %v4099
    %v4308 = vpack.c.b16 %v4104, %v4100
    %v4309 = vpack.c.b16 %v4109, %v4105
    %v4310 = vpack.c.b16 %v4110, %v4106
    %v4311 = vpack.c.b16 %v4111, %v4107
    %v4312 = vpack.c.b16 %v4112, %v4108
    %v4313 = vpack.c.b16 %v4117, %v4113
    %v4314 = vpack.c.b16 %v4118, %v4114
    %v4315 = vpack.c.b16 %v4119, %v4115
    %v4316 = vpack.c.b16 %v4120, %v4116
    %v4317 = vpack.c.b16 %v4125, %v4121
    %v4318 = vpack.c.b16 %v4126, %v4122
    %v4319 = vpack.c.b16 %v4127, %v4123
    %v4320 = vpack.c.b16 %v4128, %v4124
    %v4321 = vpack.c.b16 %v4133, %v4129
    %v4322 = vpack.c.b16 %v4134, %v4130
    %v4323 = vpack.c.b16 %v4135, %v4131
    %v4324 = vpack.c.b16 %v4136, %v4132
    %v4325 = vpack.c.b16 %v4141, %v4137
    %v4326 = vpack.c.b16 %v4142, %v4138
    %v4327 = vpack.c.b16 %v4143, %v4139
    %v4328 = vpack.c.b16 %v4144, %v4140
    %v4329 = vpack.c.b16 %v4149, %v4145
    %v4330 = vpack.c.b16 %v4150, %v4146
    %v4331 = vpack.c.b16 %v4151, %v4147
    %v4332 = vpack.c.b16 %v4152, %v4148
    %v4333 = vpack.c.b16 %v4157, %v4153
    %v4334 = vpack.c.b16 %v4158, %v4154
    %v4335 = vpack.c.b16 %v4159, %v4155
    %v4336 = vpack.c.b16 %v4160, %v4156
    %v4337 = vpack.c.b16 %v4165, %v4161
    %v4338 = vpack.c.b16 %v4166, %v4162
    %v4339 = vpack.c.b16 %v4167, %v4163
    %v4340 = vpack.c.b16 %v4168, %v4164
    %v4341 = vpack.c.b16 %v4173, %v4169
    %v4342 = vpack.c.b16 %v4174, %v4170
    %v4343 = vpack.c.b16 %v4175, %v4171
    %v4344 = vpack.c.b16 %v4176, %v4172
    %v4345 = vpack.c.b16 %v4181, %v4177
    %v4346 = vpack.c.b16 %v4182, %v4178
    %v4347 = vpack.c.b16 %v4183, %v4179
    %v4348 = vpack.c.b16 %v4184, %v4180
    %v4349 = vpack.c.b16 %v4189, %v4185
    %v4350 = vpack.c.b16 %v4190, %v4186
    %v4351 = vpack.c.b16 %v4191, %v4187
    %v4352 = vpack.c.b16 %v4192, %v4188
    %v4353 = vpack.c.b16 %v4197, %v4193
    %v4354 = vpack.c.b16 %v4198, %v4194
    %v4355 = vpack.c.b16 %v4199, %v4195
    %v4356 = vpack.c.b16 %v4200, %v4196
    %v4357 = vpack.c.b16 %v4205, %v4201
    %v4358 = vpack.c.b16 %v4206, %v4202
    %v4359 = vpack.c.b16 %v4207, %v4203
    %v4360 = vpack.c.b16 %v4208, %v4204
    %v4361 = vpack.c.b16 %v4213, %v4209
    %v4362 = vpack.c.b16 %v4214, %v4210
    %v4363 = vpack.c.b16 %v4215, %v4211
    %v4364 = vpack.c.b16 %v4216, %v4212
    %v4365 = vpack.c.b16 %v4221, %v4217
    %v4366 = vpack.c.b16 %v4222, %v4218
    %v4367 = vpack.c.b16 %v4223, %v4219
    %v4368 = vpack.c.b16 %v4224, %v4220
    %v4369 = vpack.c.b16 %v4229, %v4225
    %v4370 = vpack.c.b16 %v4230, %v4226
    %v4371 = vpack.c.b16 %v4231, %v4227
    %v4372 = vpack.c.b16 %v4232, %v4228
    %v4373 = vpack.c.b16 %v4237, %v4233
    %v4374 = vpack.c.b16 %v4238, %v4234
    %v4375 = vpack.c.b16 %v4239, %v4235
    %v4376 = vpack.c.b16 %v4240, %v4236
    %v4377 = vpack.c.b16 %v4245, %v4241
    %v4378 = vpack.c.b16 %v4246, %v4242
    %v4379 = vpack.c.b16 %v4247, %v4243
    %v4380 = vpack.c.b16 %v4248, %v4244
    %v4381 = vpack.c.b16 %v4253, %v4249
    %v4382 = vpack.c.b16 %v4254, %v4250
    %v4383 = vpack.c.b16 %v4255, %v4251
    %v4384 = vpack.c.b16 %v4256, %v4252
    %4513 = vmatpush.bf16.msra.mxu0 %v4285
    %4514 = vmatpush.bf16.msra.mxu0 %v4281
    %4515 = vmatpush.bf16.msra.mxu0 %v4277
    %4516 = vmatpush.bf16.msra.mxu0 %v4273
    %4517 = vmatpush.bf16.msra.mxu0 %v4269
    %4518 = vmatpush.bf16.msra.mxu0 %v4265
    %4519 = vmatpush.bf16.msra.mxu0 %v4261
    %4520 = vmatpush.bf16.msra.mxu0 %v4257
    %4521 = vmatmul.bf16.gmra.mxu0 %v3741
    %v4522 = vpop.f32.mrf.mxu0
    %v4523 = vadd.f32 0.0, %v4522
    %v4524 = vpop.f32.mrf.mxu0
    %4525 = vdwg.mxu0
    %4526 = vmatpush.bf16.msra.mxu0 %v4317
    %4527 = vmatpush.bf16.msra.mxu0 %v4313
    %4528 = vmatpush.bf16.msra.mxu0 %v4309
    %4529 = vmatpush.bf16.msra.mxu0 %v4305
    %4530 = vmatpush.bf16.msra.mxu0 %v4301
    %4531 = vmatpush.bf16.msra.mxu0 %v4297
    %4532 = vmatpush.bf16.msra.mxu0 %v4293
    %4533 = vmatpush.bf16.msra.mxu0 %v4289
    %4534 = vmatmul.bf16.gmra.mxu0 %v3742
    %v4535 = vpop.f32.mrf.mxu0
    %v4536 = vadd.f32 %v4523, %v4535
    %v4537 = vpop.f32.mrf.mxu0
    %4538 = vdwg.mxu0
    %4539 = vmatpush.bf16.msra.mxu0 %v4349
    %4540 = vmatpush.bf16.msra.mxu0 %v4345
    %4541 = vmatpush.bf16.msra.mxu0 %v4341
    %4542 = vmatpush.bf16.msra.mxu0 %v4337
    %4543 = vmatpush.bf16.msra.mxu0 %v4333
    %4544 = vmatpush.bf16.msra.mxu0 %v4329
    %4545 = vmatpush.bf16.msra.mxu0 %v4325
    %4546 = vmatpush.bf16.msra.mxu0 %v4321
    %4547 = vmatmul.bf16.gmra.mxu0 %v3743
    %v4548 = vpop.f32.mrf.mxu0
    %v4549 = vadd.f32 %v4536, %v4548
    %v4550 = vpop.f32.mrf.mxu0
    %4551 = vdwg.mxu0
    %4552 = vmatpush.bf16.msra.mxu0 %v4381
    %4553 = vmatpush.bf16.msra.mxu0 %v4377
    %4554 = vmatpush.bf16.msra.mxu0 %v4373
    %4555 = vmatpush.bf16.msra.mxu0 %v4369
    %4556 = vmatpush.bf16.msra.mxu0 %v4365
    %4557 = vmatpush.bf16.msra.mxu0 %v4361
    %4558 = vmatpush.bf16.msra.mxu0 %v4357
    %4559 = vmatpush.bf16.msra.mxu0 %v4353
    %4560 = vmatmul.bf16.gmra.mxu0 %v3744
    %v4561 = vpop.f32.mrf.mxu0
    %v4562 = vadd.f32 %v4549, %v4561
    %v4563 = vpop.f32.mrf.mxu0
    %4564 = vdwg.mxu0
    %4565 = vmatpush.bf16.msra.mxu0 %v4286
    %4566 = vmatpush.bf16.msra.mxu0 %v4282
    %4567 = vmatpush.bf16.msra.mxu0 %v4278
    %4568 = vmatpush.bf16.msra.mxu0 %v4274
    %4569 = vmatpush.bf16.msra.mxu0 %v4270
    %4570 = vmatpush.bf16.msra.mxu0 %v4266
    %4571 = vmatpush.bf16.msra.mxu0 %v4262
    %4572 = vmatpush.bf16.msra.mxu0 %v4258
    %4573 = vmatmul.bf16.gmra.mxu0 %v3741
    %v4574 = vpop.f32.mrf.mxu0
    %v4575 = vadd.f32 0.0, %v4574
    %v4576 = vpop.f32.mrf.mxu0
    %4577 = vdwg.mxu0
    %4578 = vmatpush.bf16.msra.mxu0 %v4318
    %4579 = vmatpush.bf16.msra.mxu0 %v4314
    %4580 = vmatpush.bf16.msra.mxu0 %v4310
    %4581 = vmatpush.bf16.msra.mxu0 %v4306
    %4582 = vmatpush.bf16.msra.mxu0 %v4302
    %4583 = vmatpush.bf16.msra.mxu0 %v4298
    %4584 = vmatpush.bf16.msra.mxu0 %v4294
    %4585 = vmatpush.bf16.msra.mxu0 %v4290
    %4586 = vmatmul.bf16.gmra.mxu0 %v3742
    %v4587 = vpop.f32.mrf.mxu0
    %v4588 = vadd.f32 %v4575, %v4587
    %v4589 = vpop.f32.mrf.mxu0
    %4590 = vdwg.mxu0
    %4591 = vmatpush.bf16.msra.mxu0 %v4350
    %4592 = vmatpush.bf16.msra.mxu0 %v4346
    %4593 = vmatpush.bf16.msra.mxu0 %v4342
    %4594 = vmatpush.bf16.msra.mxu0 %v4338
    %4595 = vmatpush.bf16.msra.mxu0 %v4334
    %4596 = vmatpush.bf16.msra.mxu0 %v4330
    %4597 = vmatpush.bf16.msra.mxu0 %v4326
    %4598 = vmatpush.bf16.msra.mxu0 %v4322
    %4599 = vmatmul.bf16.gmra.mxu0 %v3743
    %v4600 = vpop.f32.mrf.mxu0
    %v4601 = vadd.f32 %v4588, %v4600
    %v4602 = vpop.f32.mrf.mxu0
    %4603 = vdwg.mxu0
    %4604 = vmatpush.bf16.msra.mxu0 %v4382
    %4605 = vmatpush.bf16.msra.mxu0 %v4378
    %4606 = vmatpush.bf16.msra.mxu0 %v4374
    %4607 = vmatpush.bf16.msra.mxu0 %v4370
    %4608 = vmatpush.bf16.msra.mxu0 %v4366
    %4609 = vmatpush.bf16.msra.mxu0 %v4362
    %4610 = vmatpush.bf16.msra.mxu0 %v4358
    %4611 = vmatpush.bf16.msra.mxu0 %v4354
    %4612 = vmatmul.bf16.gmra.mxu0 %v3744
    %v4613 = vpop.f32.mrf.mxu0
    %v4614 = vadd.f32 %v4601, %v4613
    %v4615 = vpop.f32.mrf.mxu0
    %4616 = vdwg.mxu0
    %4617 = vmatpush.bf16.msra.mxu0 %v4287
    %4618 = vmatpush.bf16.msra.mxu0 %v4283
    %4619 = vmatpush.bf16.msra.mxu0 %v4279
    %4620 = vmatpush.bf16.msra.mxu0 %v4275
    %4621 = vmatpush.bf16.msra.mxu0 %v4271
    %4622 = vmatpush.bf16.msra.mxu0 %v4267
    %4623 = vmatpush.bf16.msra.mxu0 %v4263
    %4624 = vmatpush.bf16.msra.mxu0 %v4259
    %4625 = vmatmul.bf16.gmra.mxu0 %v3741
    %v4626 = vpop.f32.mrf.mxu0
    %v4627 = vadd.f32 0.0, %v4626
    %v4628 = vpop.f32.mrf.mxu0
    %4629 = vdwg.mxu0
    %4630 = vmatpush.bf16.msra.mxu0 %v4319
    %4631 = vmatpush.bf16.msra.mxu0 %v4315
    %4632 = vmatpush.bf16.msra.mxu0 %v4311
    %4633 = vmatpush.bf16.msra.mxu0 %v4307
    %4634 = vmatpush.bf16.msra.mxu0 %v4303
    %4635 = vmatpush.bf16.msra.mxu0 %v4299
    %4636 = vmatpush.bf16.msra.mxu0 %v4295
    %4637 = vmatpush.bf16.msra.mxu0 %v4291
    %4638 = vmatmul.bf16.gmra.mxu0 %v3742
    %v4639 = vpop.f32.mrf.mxu0
    %v4640 = vadd.f32 %v4627, %v4639
    %v4641 = vpop.f32.mrf.mxu0
    %4642 = vdwg.mxu0
    %4643 = vmatpush.bf16.msra.mxu0 %v4351
    %4644 = vmatpush.bf16.msra.mxu0 %v4347
    %4645 = vmatpush.bf16.msra.mxu0 %v4343
    %4646 = vmatpush.bf16.msra.mxu0 %v4339
    %4647 = vmatpush.bf16.msra.mxu0 %v4335
    %4648 = vmatpush.bf16.msra.mxu0 %v4331
    %4649 = vmatpush.bf16.msra.mxu0 %v4327
    %4650 = vmatpush.bf16.msra.mxu0 %v4323
    %4651 = vmatmul.bf16.gmra.mxu0 %v3743
    %v4652 = vpop.f32.mrf.mxu0
    %v4653 = vadd.f32 %v4640, %v4652
    %v4654 = vpop.f32.mrf.mxu0
    %4655 = vdwg.mxu0
    %4656 = vmatpush.bf16.msra.mxu0 %v4383
    %4657 = vmatpush.bf16.msra.mxu0 %v4379
    %4658 = vmatpush.bf16.msra.mxu0 %v4375
    %4659 = vmatpush.bf16.msra.mxu0 %v4371
    %4660 = vmatpush.bf16.msra.mxu0 %v4367
    %4661 = vmatpush.bf16.msra.mxu0 %v4363
    %4662 = vmatpush.bf16.msra.mxu0 %v4359
    %4663 = vmatpush.bf16.msra.mxu0 %v4355
    %4664 = vmatmul.bf16.gmra.mxu0 %v3744
    %v4665 = vpop.f32.mrf.mxu0
    %v4666 = vadd.f32 %v4653, %v4665
    %v4667 = vpop.f32.mrf.mxu0
    %4668 = vdwg.mxu0
    %4669 = vmatpush.bf16.msra.mxu0 %v4288
    %4670 = vmatpush.bf16.msra.mxu0 %v4284
    %4671 = vmatpush.bf16.msra.mxu0 %v4280
    %4672 = vmatpush.bf16.msra.mxu0 %v4276
    %4673 = vmatpush.bf16.msra.mxu0 %v4272
    %4674 = vmatpush.bf16.msra.mxu0 %v4268
    %4675 = vmatpush.bf16.msra.mxu0 %v4264
    %4676 = vmatpush.bf16.msra.mxu0 %v4260
    %4677 = vmatmul.bf16.gmra.mxu0 %v3741
    %v4678 = vpop.f32.mrf.mxu0
    %v4679 = vadd.f32 0.0, %v4678
    %v4680 = vpop.f32.mrf.mxu0
    %4681 = vdwg.mxu0
    %4682 = vmatpush.bf16.msra.mxu0 %v4320
    %4683 = vmatpush.bf16.msra.mxu0 %v4316
    %4684 = vmatpush.bf16.msra.mxu0 %v4312
    %4685 = vmatpush.bf16.msra.mxu0 %v4308
    %4686 = vmatpush.bf16.msra.mxu0 %v4304
    %4687 = vmatpush.bf16.msra.mxu0 %v4300
    %4688 = vmatpush.bf16.msra.mxu0 %v4296
    %4689 = vmatpush.bf16.msra.mxu0 %v4292
    %4690 = vmatmul.bf16.gmra.mxu0 %v3742
    %v4691 = vpop.f32.mrf.mxu0
    %v4692 = vadd.f32 %v4679, %v4691
    %v4693 = vpop.f32.mrf.mxu0
    %4694 = vdwg.mxu0
    %4695 = vmatpush.bf16.msra.mxu0 %v4352
    %4696 = vmatpush.bf16.msra.mxu0 %v4348
    %4697 = vmatpush.bf16.msra.mxu0 %v4344
    %4698 = vmatpush.bf16.msra.mxu0 %v4340
    %4699 = vmatpush.bf16.msra.mxu0 %v4336
    %4700 = vmatpush.bf16.msra.mxu0 %v4332
    %4701 = vmatpush.bf16.msra.mxu0 %v4328
    %4702 = vmatpush.bf16.msra.mxu0 %v4324
    %4703 = vmatmul.bf16.gmra.mxu0 %v3743
    %v4704 = vpop.f32.mrf.mxu0
    %v4705 = vadd.f32 %v4692, %v4704
    %v4706 = vpop.f32.mrf.mxu0
    %4707 = vdwg.mxu0
    %4708 = vmatpush.bf16.msra.mxu0 %v4384
    %4709 = vmatpush.bf16.msra.mxu0 %v4380
    %4710 = vmatpush.bf16.msra.mxu0 %v4376
    %4711 = vmatpush.bf16.msra.mxu0 %v4372
    %4712 = vmatpush.bf16.msra.mxu0 %v4368
    %4713 = vmatpush.bf16.msra.mxu0 %v4364
    %4714 = vmatpush.bf16.msra.mxu0 %v4360
    %4715 = vmatpush.bf16.msra.mxu0 %v4356
    %4716 = vmatmul.bf16.gmra.mxu0 %v3744
    %v4717 = vpop.f32.mrf.mxu0
    %v4718 = vadd.f32 %v4705, %v4717
    %v4719 = vpop.f32.mrf.mxu0
    %4720 = vdwg.mxu0
    %v4721 = vadd.f32 %v1486, %v4562
    %v4722 = vadd.f32 %v1500, %v4614
    %v4723 = vadd.f32 %v1514, %v4666
    %v4724 = vadd.f32 %v1528, %v4718
    %v4725 = vtanh.pop %v4721
    %v4726 = vtanh.pop %v4722
    %v4727 = vtanh.pop %v4723
    %v4728 = vtanh.pop %v4724
    %v4729 = vmul.f32 %v3611, %v4725
    %v4730 = vmul.f32 %v3626, %v4726
    %v4731 = vmul.f32 %v3641, %v4727
    %v4732 = vmul.f32 %v3656, %v4728
    %v4733 = vsub.f32 1.0, %v3611
    %v4734 = vsub.f32 1.0, %v3626
    %v4735 = vsub.f32 1.0, %v3641
    %v4736 = vsub.f32 1.0, %v3656
    %v4737 = vmul.f32 %v4733, %v1610
    %v4738 = vmul.f32 %v4734, %v1611
    %v4739 = vmul.f32 %v4735, %v1612
    %v4740 = vmul.f32 %v4736, %v1613
    %v4741 = vadd.f32 %v4729, %v4737
    %v4742 = vadd.f32 %v4730, %v4738
    %v4743 = vadd.f32 %v4731, %v4739
    %v4744 = vadd.f32 %v4732, %v4740
    %s4745 = smul.u32 %s1614, 2
    %s4746 = sshll.u32 %s4745, 4
    %4747 = dma.done %s69, %s4746
    %v4748 = vpack.c.bf16 %v4741, %v4741
    %v4749 = vpack.c.bf16 %v4742, %v4742
    %v4750 = vpack.c.bf16 %v4743, %v4743
    %v4751 = vpack.c.bf16 %v4744, %v4744
    %v4752 = vld [vmem:[#allocation4] sm:$0xff]
    %v4753 = vld [vmem:[#allocation4 + $0x8] sm:$0xff]
    %v4754 = vld [vmem:[#allocation4 + $0x10] sm:$0xff]
    %v4755 = vld [vmem:[#allocation4 + $0x18] sm:$0xff]
    %v4756 = vld [vmem:[#allocation4 + $0x20] sm:$0xff]
    %v4757 = vld [vmem:[#allocation4 + $0x28] sm:$0xff]
    %v4758 = vld [vmem:[#allocation4 + $0x30] sm:$0xff]
    %v4759 = vld [vmem:[#allocation4 + $0x38] sm:$0xff]
    %v4760 = vld [vmem:[#allocation4 + $0x40] sm:$0xff]
    %v4761 = vld [vmem:[#allocation4 + $0x48] sm:$0xff]
    %v4762 = vld [vmem:[#allocation4 + $0x50] sm:$0xff]
    %v4763 = vld [vmem:[#allocation4 + $0x58] sm:$0xff]
    %v4764 = vld [vmem:[#allocation4 + $0x60] sm:$0xff]
    %v4765 = vld [vmem:[#allocation4 + $0x68] sm:$0xff]
    %v4766 = vld [vmem:[#allocation4 + $0x70] sm:$0xff]
    %v4767 = vld [vmem:[#allocation4 + $0x78] sm:$0xff]
    %v4768 = vld [vmem:[#allocation4 + $0x80] sm:$0xff]
    %v4769 = vld [vmem:[#allocation4 + $0x88] sm:$0xff]
    %v4770 = vld [vmem:[#allocation4 + $0x90] sm:$0xff]
    %v4771 = vld [vmem:[#allocation4 + $0x98] sm:$0xff]
    %v4772 = vld [vmem:[#allocation4 + $0xa0] sm:$0xff]
    %v4773 = vld [vmem:[#allocation4 + $0xa8] sm:$0xff]
    %v4774 = vld [vmem:[#allocation4 + $0xb0] sm:$0xff]
    %v4775 = vld [vmem:[#allocation4 + $0xb8] sm:$0xff]
    %v4776 = vld [vmem:[#allocation4 + $0xc0] sm:$0xff]
    %v4777 = vld [vmem:[#allocation4 + $0xc8] sm:$0xff]
    %v4778 = vld [vmem:[#allocation4 + $0xd0] sm:$0xff]
    %v4779 = vld [vmem:[#allocation4 + $0xd8] sm:$0xff]
    %v4780 = vld [vmem:[#allocation4 + $0xe0] sm:$0xff]
    %v4781 = vld [vmem:[#allocation4 + $0xe8] sm:$0xff]
    %v4782 = vld [vmem:[#allocation4 + $0xf0] sm:$0xff]
    %v4783 = vld [vmem:[#allocation4 + $0xf8] sm:$0xff]
    %v4784 = vld [vmem:[#allocation4 + $0x100] sm:$0xff]
    %v4785 = vld [vmem:[#allocation4 + $0x108] sm:$0xff]
    %v4786 = vld [vmem:[#allocation4 + $0x110] sm:$0xff]
    %v4787 = vld [vmem:[#allocation4 + $0x118] sm:$0xff]
    %v4788 = vld [vmem:[#allocation4 + $0x120] sm:$0xff]
    %v4789 = vld [vmem:[#allocation4 + $0x128] sm:$0xff]
    %v4790 = vld [vmem:[#allocation4 + $0x130] sm:$0xff]
    %v4791 = vld [vmem:[#allocation4 + $0x138] sm:$0xff]
    %v4792 = vld [vmem:[#allocation4 + $0x140] sm:$0xff]
    %v4793 = vld [vmem:[#allocation4 + $0x148] sm:$0xff]
    %v4794 = vld [vmem:[#allocation4 + $0x150] sm:$0xff]
    %v4795 = vld [vmem:[#allocation4 + $0x158] sm:$0xff]
    %v4796 = vld [vmem:[#allocation4 + $0x160] sm:$0xff]
    %v4797 = vld [vmem:[#allocation4 + $0x168] sm:$0xff]
    %v4798 = vld [vmem:[#allocation4 + $0x170] sm:$0xff]
    %v4799 = vld [vmem:[#allocation4 + $0x178] sm:$0xff]
    %v4800 = vld [vmem:[#allocation4 + $0x180] sm:$0xff]
    %v4801 = vld [vmem:[#allocation4 + $0x188] sm:$0xff]
    %v4802 = vld [vmem:[#allocation4 + $0x190] sm:$0xff]
    %v4803 = vld [vmem:[#allocation4 + $0x198] sm:$0xff]
    %v4804 = vld [vmem:[#allocation4 + $0x1a0] sm:$0xff]
    %v4805 = vld [vmem:[#allocation4 + $0x1a8] sm:$0xff]
    %v4806 = vld [vmem:[#allocation4 + $0x1b0] sm:$0xff]
    %v4807 = vld [vmem:[#allocation4 + $0x1b8] sm:$0xff]
    %v4808 = vld [vmem:[#allocation4 + $0x1c0] sm:$0xff]
    %v4809 = vld [vmem:[#allocation4 + $0x1c8] sm:$0xff]
    %v4810 = vld [vmem:[#allocation4 + $0x1d0] sm:$0xff]
    %v4811 = vld [vmem:[#allocation4 + $0x1d8] sm:$0xff]
    %v4812 = vld [vmem:[#allocation4 + $0x1e0] sm:$0xff]
    %v4813 = vld [vmem:[#allocation4 + $0x1e8] sm:$0xff]
    %v4814 = vld [vmem:[#allocation4 + $0x1f0] sm:$0xff]
    %v4815 = vld [vmem:[#allocation4 + $0x1f8] sm:$0xff]
    %v4816 = vld [vmem:[%s8] sm:$0x3]
    %v4818 = vperm.slane %v4816, 0
    %v4819 = vperm.slane %v4816, 1
    %v4886 = vunpack.c.l.b16 %v4752
    %v4887 = vunpack.c.h.b16 %v4752
    %v4888 = vunpack.c.l.b16 %v4753
    %v4889 = vunpack.c.h.b16 %v4753
    %v4890 = vunpack.c.l.b16 %v4754
    %v4891 = vunpack.c.h.b16 %v4754
    %v4892 = vunpack.c.l.b16 %v4755
    %v4893 = vunpack.c.h.b16 %v4755
    %v4894 = vunpack.c.l.b16 %v4756
    %v4895 = vunpack.c.h.b16 %v4756
    %v4896 = vunpack.c.l.b16 %v4757
    %v4897 = vunpack.c.h.b16 %v4757
    %v4898 = vunpack.c.l.b16 %v4758
    %v4899 = vunpack.c.h.b16 %v4758
    %v4900 = vunpack.c.l.b16 %v4759
    %v4901 = vunpack.c.h.b16 %v4759
    %v4902 = vunpack.c.l.b16 %v4760
    %v4903 = vunpack.c.h.b16 %v4760
    %v4904 = vunpack.c.l.b16 %v4761
    %v4905 = vunpack.c.h.b16 %v4761
    %v4906 = vunpack.c.l.b16 %v4762
    %v4907 = vunpack.c.h.b16 %v4762
    %v4908 = vunpack.c.l.b16 %v4763
    %v4909 = vunpack.c.h.b16 %v4763
    %v4910 = vunpack.c.l.b16 %v4764
    %v4911 = vunpack.c.h.b16 %v4764
    %v4912 = vunpack.c.l.b16 %v4765
    %v4913 = vunpack.c.h.b16 %v4765
    %v4914 = vunpack.c.l.b16 %v4766
    %v4915 = vunpack.c.h.b16 %v4766
    %v4916 = vunpack.c.l.b16 %v4767
    %v4917 = vunpack.c.h.b16 %v4767
    %v4918 = vunpack.c.l.b16 %v4768
    %v4919 = vunpack.c.h.b16 %v4768
    %v4920 = vunpack.c.l.b16 %v4769
    %v4921 = vunpack.c.h.b16 %v4769
    %v4922 = vunpack.c.l.b16 %v4770
    %v4923 = vunpack.c.h.b16 %v4770
    %v4924 = vunpack.c.l.b16 %v4771
    %v4925 = vunpack.c.h.b16 %v4771
    %v4926 = vunpack.c.l.b16 %v4772
    %v4927 = vunpack.c.h.b16 %v4772
    %v4928 = vunpack.c.l.b16 %v4773
    %v4929 = vunpack.c.h.b16 %v4773
    %v4930 = vunpack.c.l.b16 %v4774
    %v4931 = vunpack.c.h.b16 %v4774
    %v4932 = vunpack.c.l.b16 %v4775
    %v4933 = vunpack.c.h.b16 %v4775
    %v4934 = vunpack.c.l.b16 %v4776
    %v4935 = vunpack.c.h.b16 %v4776
    %v4936 = vunpack.c.l.b16 %v4777
    %v4937 = vunpack.c.h.b16 %v4777
    %v4938 = vunpack.c.l.b16 %v4778
    %v4939 = vunpack.c.h.b16 %v4778
    %v4940 = vunpack.c.l.b16 %v4779
    %v4941 = vunpack.c.h.b16 %v4779
    %v4942 = vunpack.c.l.b16 %v4780
    %v4943 = vunpack.c.h.b16 %v4780
    %v4944 = vunpack.c.l.b16 %v4781
    %v4945 = vunpack.c.h.b16 %v4781
    %v4946 = vunpack.c.l.b16 %v4782
    %v4947 = vunpack.c.h.b16 %v4782
    %v4948 = vunpack.c.l.b16 %v4783
    %v4949 = vunpack.c.h.b16 %v4783
    %v4950 = vunpack.c.l.b16 %v4784
    %v4951 = vunpack.c.h.b16 %v4784
    %v4952 = vunpack.c.l.b16 %v4785
    %v4953 = vunpack.c.h.b16 %v4785
    %v4954 = vunpack.c.l.b16 %v4786
    %v4955 = vunpack.c.h.b16 %v4786
    %v4956 = vunpack.c.l.b16 %v4787
    %v4957 = vunpack.c.h.b16 %v4787
    %v4958 = vunpack.c.l.b16 %v4788
    %v4959 = vunpack.c.h.b16 %v4788
    %v4960 = vunpack.c.l.b16 %v4789
    %v4961 = vunpack.c.h.b16 %v4789
    %v4962 = vunpack.c.l.b16 %v4790
    %v4963 = vunpack.c.h.b16 %v4790
    %v4964 = vunpack.c.l.b16 %v4791
    %v4965 = vunpack.c.h.b16 %v4791
    %v4966 = vunpack.c.l.b16 %v4792
    %v4967 = vunpack.c.h.b16 %v4792
    %v4968 = vunpack.c.l.b16 %v4793
    %v4969 = vunpack.c.h.b16 %v4793
    %v4970 = vunpack.c.l.b16 %v4794
    %v4971 = vunpack.c.h.b16 %v4794
    %v4972 = vunpack.c.l.b16 %v4795
    %v4973 = vunpack.c.h.b16 %v4795
    %v4974 = vunpack.c.l.b16 %v4796
    %v4975 = vunpack.c.h.b16 %v4796
    %v4976 = vunpack.c.l.b16 %v4797
    %v4977 = vunpack.c.h.b16 %v4797
    %v4978 = vunpack.c.l.b16 %v4798
    %v4979 = vunpack.c.h.b16 %v4798
    %v4980 = vunpack.c.l.b16 %v4799
    %v4981 = vunpack.c.h.b16 %v4799
    %v4982 = vunpack.c.l.b16 %v4800
    %v4983 = vunpack.c.h.b16 %v4800
    %v4984 = vunpack.c.l.b16 %v4801
    %v4985 = vunpack.c.h.b16 %v4801
    %v4986 = vunpack.c.l.b16 %v4802
    %v4987 = vunpack.c.h.b16 %v4802
    %v4988 = vunpack.c.l.b16 %v4803
    %v4989 = vunpack.c.h.b16 %v4803
    %v4990 = vunpack.c.l.b16 %v4804
    %v4991 = vunpack.c.h.b16 %v4804
    %v4992 = vunpack.c.l.b16 %v4805
    %v4993 = vunpack.c.h.b16 %v4805
    %v4994 = vunpack.c.l.b16 %v4806
    %v4995 = vunpack.c.h.b16 %v4806
    %v4996 = vunpack.c.l.b16 %v4807
    %v4997 = vunpack.c.h.b16 %v4807
    %v4998 = vunpack.c.l.b16 %v4808
    %v4999 = vunpack.c.h.b16 %v4808
    %v5000 = vunpack.c.l.b16 %v4809
    %v5001 = vunpack.c.h.b16 %v4809
    %v5002 = vunpack.c.l.b16 %v4810
    %v5003 = vunpack.c.h.b16 %v4810
    %v5004 = vunpack.c.l.b16 %v4811
    %v5005 = vunpack.c.h.b16 %v4811
    %v5006 = vunpack.c.l.b16 %v4812
    %v5007 = vunpack.c.h.b16 %v4812
    %v5008 = vunpack.c.l.b16 %v4813
    %v5009 = vunpack.c.h.b16 %v4813
    %v5010 = vunpack.c.l.b16 %v4814
    %v5011 = vunpack.c.h.b16 %v4814
    %v5012 = vunpack.c.l.b16 %v4815
    %v5013 = vunpack.c.h.b16 %v4815
    %v5014 = vpack.c.b16 %v4888, %v4886
    %v5015 = vpack.c.b16 %v4889, %v4887
    %v5016 = vpack.c.b16 %v4892, %v4890
    %v5017 = vpack.c.b16 %v4893, %v4891
    %v5018 = vpack.c.b16 %v4896, %v4894
    %v5019 = vpack.c.b16 %v4897, %v4895
    %v5020 = vpack.c.b16 %v4900, %v4898
    %v5021 = vpack.c.b16 %v4901, %v4899
    %v5022 = vpack.c.b16 %v4904, %v4902
    %v5023 = vpack.c.b16 %v4905, %v4903
    %v5024 = vpack.c.b16 %v4908, %v4906
    %v5025 = vpack.c.b16 %v4909, %v4907
    %v5026 = vpack.c.b16 %v4912, %v4910
    %v5027 = vpack.c.b16 %v4913, %v4911
    %v5028 = vpack.c.b16 %v4916, %v4914
    %v5029 = vpack.c.b16 %v4917, %v4915
    %v5030 = vpack.c.b16 %v4920, %v4918
    %v5031 = vpack.c.b16 %v4921, %v4919
    %v5032 = vpack.c.b16 %v4924, %v4922
    %v5033 = vpack.c.b16 %v4925, %v4923
    %v5034 = vpack.c.b16 %v4928, %v4926
    %v5035 = vpack.c.b16 %v4929, %v4927
    %v5036 = vpack.c.b16 %v4932, %v4930
    %v5037 = vpack.c.b16 %v4933, %v4931
    %v5038 = vpack.c.b16 %v4936, %v4934
    %v5039 = vpack.c.b16 %v4937, %v4935
    %v5040 = vpack.c.b16 %v4940, %v4938
    %v5041 = vpack.c.b16 %v4941, %v4939
    %v5042 = vpack.c.b16 %v4944, %v4942
    %v5043 = vpack.c.b16 %v4945, %v4943
    %v5044 = vpack.c.b16 %v4948, %v4946
    %v5045 = vpack.c.b16 %v4949, %v4947
    %v5046 = vpack.c.b16 %v4952, %v4950
    %v5047 = vpack.c.b16 %v4953, %v4951
    %v5048 = vpack.c.b16 %v4956, %v4954
    %v5049 = vpack.c.b16 %v4957, %v4955
    %v5050 = vpack.c.b16 %v4960, %v4958
    %v5051 = vpack.c.b16 %v4961, %v4959
    %v5052 = vpack.c.b16 %v4964, %v4962
    %v5053 = vpack.c.b16 %v4965, %v4963
    %v5054 = vpack.c.b16 %v4968, %v4966
    %v5055 = vpack.c.b16 %v4969, %v4967
    %v5056 = vpack.c.b16 %v4972, %v4970
    %v5057 = vpack.c.b16 %v4973, %v4971
    %v5058 = vpack.c.b16 %v4976, %v4974
    %v5059 = vpack.c.b16 %v4977, %v4975
    %v5060 = vpack.c.b16 %v4980, %v4978
    %v5061 = vpack.c.b16 %v4981, %v4979
    %v5062 = vpack.c.b16 %v4984, %v4982
    %v5063 = vpack.c.b16 %v4985, %v4983
    %v5064 = vpack.c.b16 %v4988, %v4986
    %v5065 = vpack.c.b16 %v4989, %v4987
    %v5066 = vpack.c.b16 %v4992, %v4990
    %v5067 = vpack.c.b16 %v4993, %v4991
    %v5068 = vpack.c.b16 %v4996, %v4994
    %v5069 = vpack.c.b16 %v4997, %v4995
    %v5070 = vpack.c.b16 %v5000, %v4998
    %v5071 = vpack.c.b16 %v5001, %v4999
    %v5072 = vpack.c.b16 %v5004, %v5002
    %v5073 = vpack.c.b16 %v5005, %v5003
    %v5074 = vpack.c.b16 %v5008, %v5006
    %v5075 = vpack.c.b16 %v5009, %v5007
    %v5076 = vpack.c.b16 %v5012, %v5010
    %v5077 = vpack.c.b16 %v5013, %v5011
    %5142 = vmatpush.bf16.msra.mxu0 %v5028
    %5143 = vmatpush.bf16.msra.mxu0 %v5026
    %5144 = vmatpush.bf16.msra.mxu0 %v5024
    %5145 = vmatpush.bf16.msra.mxu0 %v5022
    %5146 = vmatpush.bf16.msra.mxu0 %v5020
    %5147 = vmatpush.bf16.msra.mxu0 %v5018
    %5148 = vmatpush.bf16.msra.mxu0 %v5016
    %5149 = vmatpush.bf16.msra.mxu0 %v5014
    %5150 = vmatmul.bf16.gmra.mxu0 %v4748
    %v5151 = vpop.f32.mrf.mxu0
    %v5152 = vadd.f32 %v4818, %v5151
    %v5153 = vpop.f32.mrf.mxu0
    %5154 = vdwg.mxu0
    %5155 = vmatpush.bf16.msra.mxu0 %v5044
    %5156 = vmatpush.bf16.msra.mxu0 %v5042
    %5157 = vmatpush.bf16.msra.mxu0 %v5040
    %5158 = vmatpush.bf16.msra.mxu0 %v5038
    %5159 = vmatpush.bf16.msra.mxu0 %v5036
    %5160 = vmatpush.bf16.msra.mxu0 %v5034
    %5161 = vmatpush.bf16.msra.mxu0 %v5032
    %5162 = vmatpush.bf16.msra.mxu0 %v5030
    %5163 = vmatmul.bf16.gmra.mxu0 %v4749
    %v5164 = vpop.f32.mrf.mxu0
    %v5165 = vadd.f32 %v5152, %v5164
    %v5166 = vpop.f32.mrf.mxu0
    %5167 = vdwg.mxu0
    %5168 = vmatpush.bf16.msra.mxu0 %v5060
    %5169 = vmatpush.bf16.msra.mxu0 %v5058
    %5170 = vmatpush.bf16.msra.mxu0 %v5056
    %5171 = vmatpush.bf16.msra.mxu0 %v5054
    %5172 = vmatpush.bf16.msra.mxu0 %v5052
    %5173 = vmatpush.bf16.msra.mxu0 %v5050
    %5174 = vmatpush.bf16.msra.mxu0 %v5048
    %5175 = vmatpush.bf16.msra.mxu0 %v5046
    %5176 = vmatmul.bf16.gmra.mxu0 %v4750
    %v5177 = vpop.f32.mrf.mxu0
    %v5178 = vadd.f32 %v5165, %v5177
    %v5179 = vpop.f32.mrf.mxu0
    %5180 = vdwg.mxu0
    %5181 = vmatpush.bf16.msra.mxu0 %v5076
    %5182 = vmatpush.bf16.msra.mxu0 %v5074
    %5183 = vmatpush.bf16.msra.mxu0 %v5072
    %5184 = vmatpush.bf16.msra.mxu0 %v5070
    %5185 = vmatpush.bf16.msra.mxu0 %v5068
    %5186 = vmatpush.bf16.msra.mxu0 %v5066
    %5187 = vmatpush.bf16.msra.mxu0 %v5064
    %5188 = vmatpush.bf16.msra.mxu0 %v5062
    %5189 = vmatmul.bf16.gmra.mxu0 %v4751
    %v5190 = vpop.f32.mrf.mxu0
    %v5191 = vadd.f32 %v5178, %v5190
    %v5192 = vpop.f32.mrf.mxu0
    %5193 = vdwg.mxu0
    %5194 = vmatpush.bf16.msra.mxu0 %v5029
    %5195 = vmatpush.bf16.msra.mxu0 %v5027
    %5196 = vmatpush.bf16.msra.mxu0 %v5025
    %5197 = vmatpush.bf16.msra.mxu0 %v5023
    %5198 = vmatpush.bf16.msra.mxu0 %v5021
    %5199 = vmatpush.bf16.msra.mxu0 %v5019
    %5200 = vmatpush.bf16.msra.mxu0 %v5017
    %5201 = vmatpush.bf16.msra.mxu0 %v5015
    %5202 = vmatmul.bf16.gmra.mxu0 %v4748
    %v5203 = vpop.f32.mrf.mxu0
    %v5204 = vadd.f32 %v4819, %v5203
    %v5205 = vpop.f32.mrf.mxu0
    %5206 = vdwg.mxu0
    %5207 = vmatpush.bf16.msra.mxu0 %v5045
    %5208 = vmatpush.bf16.msra.mxu0 %v5043
    %5209 = vmatpush.bf16.msra.mxu0 %v5041
    %5210 = vmatpush.bf16.msra.mxu0 %v5039
    %5211 = vmatpush.bf16.msra.mxu0 %v5037
    %5212 = vmatpush.bf16.msra.mxu0 %v5035
    %5213 = vmatpush.bf16.msra.mxu0 %v5033
    %5214 = vmatpush.bf16.msra.mxu0 %v5031
    %5215 = vmatmul.bf16.gmra.mxu0 %v4749
    %v5216 = vpop.f32.mrf.mxu0
    %v5217 = vadd.f32 %v5204, %v5216
    %v5218 = vpop.f32.mrf.mxu0
    %5219 = vdwg.mxu0
    %5220 = vmatpush.bf16.msra.mxu0 %v5061
    %5221 = vmatpush.bf16.msra.mxu0 %v5059
    %5222 = vmatpush.bf16.msra.mxu0 %v5057
    %5223 = vmatpush.bf16.msra.mxu0 %v5055
    %5224 = vmatpush.bf16.msra.mxu0 %v5053
    %5225 = vmatpush.bf16.msra.mxu0 %v5051
    %5226 = vmatpush.bf16.msra.mxu0 %v5049
    %5227 = vmatpush.bf16.msra.mxu0 %v5047
    %5228 = vmatmul.bf16.gmra.mxu0 %v4750
    %v5229 = vpop.f32.mrf.mxu0
    %v5230 = vadd.f32 %v5217, %v5229
    %v5231 = vpop.f32.mrf.mxu0
    %5232 = vdwg.mxu0
    %5233 = vmatpush.bf16.msra.mxu0 %v5077
    %5234 = vmatpush.bf16.msra.mxu0 %v5075
    %5235 = vmatpush.bf16.msra.mxu0 %v5073
    %5236 = vmatpush.bf16.msra.mxu0 %v5071
    %5237 = vmatpush.bf16.msra.mxu0 %v5069
    %5238 = vmatpush.bf16.msra.mxu0 %v5067
    %5239 = vmatpush.bf16.msra.mxu0 %v5065
    %5240 = vmatpush.bf16.msra.mxu0 %v5063
    %5241 = vmatmul.bf16.gmra.mxu0 %v4751
    %v5242 = vpop.f32.mrf.mxu0
    %v5243 = vadd.f32 %v5230, %v5242
    %v5244 = vpop.f32.mrf.mxu0
    %5245 = vdwg.mxu0
    %5246 = vst [vmem:[%s9] sm:$0xff] %v5191
    %5247 = vst [vmem:[%s9 + $0x8] sm:$0xff] %v5243
    // Predicated region
    $region42: #{r2n2_forward.1} parent=1 // pred_check
      _
    $region43: #{r2n2_forward.1} parent=1 // pred_check_branch
      %5249 = sbr.rel (0) target = $region45
    $region44: #{r2n2_forward.1} parent=1 // pred_region
      _
    $region45: #{r2n2_forward.1} parent=1 // pred_fallthru
      _
    // Predicated region
    $region46: #{r2n2_forward.1} parent=1 // pred_check
      _
    $region47: #{r2n2_forward.1} parent=1 // pred_check_branch
      %5251 = sbr.rel (0) target = $region49
    $region48: #{r2n2_forward.1} parent=1 // pred_region
      _
    $region49: #{r2n2_forward.1} parent=1 // pred_fallthru
      _
    %5252 = vsyncpa [#allocation7], 1
  %5253 = vsyncmov [#allocation5]
  %s5254 = vpop.sfrf %5253
  %p5255 = scmp.eq.s32.totalorder %s5254, 0
  %p5256 = pneg %p5255
  %5258 = shalt.err (%p5256)
  %s5259 = scalar_lea.sflag [#allocation5], 1
  %5260 = vsyncmov %s5259
  %s5261 = vpop.sfrf %5260
  %p5262 = scmp.eq.s32.totalorder %s5261, 0
  %p5263 = pneg %p5262
  %5265 = shalt.err (%p5263)
  %s5266 = scalar_lea.sflag [#allocation5], 2
  %5267 = vsyncmov %s5266
  %s5268 = vpop.sfrf %5267
  %p5269 = scmp.eq.s32.totalorder %s5268, 0
  %p5270 = pneg %p5269
  %5272 = shalt.err (%p5270)

</llo_original>
